<compile_context>
chip_gen: v5e
topology: v5e:2x2
jax: 0.10.0
libtpu: 0.0.40
codegen_flags: <defaults>
</compile_context>

<pallas_src>
import jax
import jax.numpy as jnp
from jax.experimental import pallas as pl
from jax.experimental.pallas import tpu as pltpu

EPS = 1e-5  # PyTorch BatchNorm1d default eps


def ember_mlp_kernel(x_ref,
                     w1, b1, w2, b2, w3, b3, w4, b4, w5, b5,
                     out_ref):
    """Fused (Linear + folded-BN + ReLU) x4 then 128->1 head + sigmoid.

    x_ref is a (TB, Din) bf16 tile (cast done in the wrapper). w1..w4 are bf16
    with eval-mode BatchNorm pre-folded; biases are f32 (1, C). w5 is a (1, 128)
    bf16 row; the head contracts both last dims (same MXU path as q @ k^T) so the
    output block is directly lane-dense (1, TB).
    """
    def layer(h, w, b):
        z = jnp.dot(h, w[...], preferred_element_type=jnp.float32) + b[...]
        # ReLU (Dropout(p=0.5) is identity at inference time)
        return jnp.maximum(z, 0.0).astype(jnp.bfloat16)

    h = x_ref[...]          # already bf16
    h = layer(h, w1, b1)    # Din  -> 1024
    h = layer(h, w2, b2)    # 1024 -> 512
    h = layer(h, w3, b3)    # 512  -> 256
    h = layer(h, w4, b4)    # 256  -> 128
    # 128 -> 1 head: (1,128) . (TB,128)^T -> (1, TB), lane-dense output block.
    logits = jax.lax.dot_general(
        w5[...], h, (((1,), (1,)), ((), ())),
        preferred_element_type=jnp.float32) + b5[...]
    out_ref[...] = jax.nn.sigmoid(logits).astype(out_ref.dtype)


def init_raw_params(key, input_features):
    """PyTorch-equivalent raw parameters.

    Linear: U(-1/sqrt(fan_in), 1/sqrt(fan_in)) for weight and bias (PyTorch
    default), weight stored pre-transposed as (in_features, out_features).
    BatchNorm1d: gamma/beta/running stats randomized deterministically so the
    fold is actually exercised.
    """
    dims = [input_features, 1024, 512, 256, 128, 1]
    layers = []
    for i in range(5):
        fan_in, fan_out = dims[i], dims[i + 1]
        key, kw, kb = jax.random.split(key, 3)
        bound = 1.0 / float(fan_in) ** 0.5
        layer = {
            "w": jax.random.uniform(kw, (fan_in, fan_out), jnp.float32, -bound, bound),
            "b": jax.random.uniform(kb, (fan_out,), jnp.float32, -bound, bound),
        }
        if i < 4:  # BN follows the first four Linear layers only
            key, kg, kbe, km, kv = jax.random.split(key, 5)
            layer["gamma"] = jax.random.uniform(kg, (fan_out,), jnp.float32, 0.5, 1.5)
            layer["beta"] = jax.random.uniform(kbe, (fan_out,), jnp.float32, -0.1, 0.1)
            layer["mean"] = jax.random.uniform(km, (fan_out,), jnp.float32, -0.2, 0.2)
            layer["var"] = jax.random.uniform(kv, (fan_out,), jnp.float32, 0.5, 1.5)
        layers.append(layer)
    return layers


def prepare_kernel_params(layers):
    """Fold eval-mode BatchNorm into the preceding Linear, cast weights to bf16.

    W' = W * (gamma * rsqrt(var + eps)) per output column,
    b' = (b - mean) * scale + beta.
    Returns the flat operand list consumed by the kernel:
    [w1, b1, w2, b2, w3, b3, w4, b4, w5_row, b5].
    """
    # TODO(synk): training-mode BN (batch-stat computation + running-stat update)
    # and stochastic Dropout are not implemented; this is the inference path.
    params = []
    for i, layer in enumerate(layers):
        w, b = layer["w"], layer["b"]
        if i < 4:
            scale = layer["gamma"] * jax.lax.rsqrt(layer["var"] + EPS)
            w = w * scale[None, :]
            b = (b - layer["mean"]) * scale + layer["beta"]
            params.append(w.astype(jnp.bfloat16))
            params.append(b.reshape(1, -1).astype(jnp.float32))
        else:
            # 128 -> 1 head: (128, 1) column stored as a (1, 128) bf16 row for
            # the w5 @ h^T lane-dense head.
            params.append(w.reshape(1, -1).astype(jnp.bfloat16))
            params.append(b.reshape(1, 1).astype(jnp.float32))
    return params


def _default_block_batch(B):
    # M=256/512 fills the v6e/v7x MXU (2x256^2); M=128 fills v5e's (4x128^2).
    # Prefer >=2 grid steps so the "parallel" batch axis can be split across
    # both v7x TensorCores.
    for cand in (512, 256, 128):
        if B % cand == 0 and B // cand >= 2:
            return cand
    for cand in (512, 256, 128):
        if B % cand == 0:
            return cand
    return B  # single-step, full-array blocks (legal, but small-M on the MXU)


def ember_mlp_forward(x, kernel_params, *, block_batch=None):
    B, d_in = x.shape
    if block_batch is None:
        block_batch = _default_block_batch(B)
    assert B % block_batch == 0, "batch must be divisible by block_batch"
    # Lane-dense (1, block_batch) output blocks need block_batch % 128 == 0
    # unless a single block covers the whole batch.
    assert block_batch % 128 == 0 or block_batch == B, (
        "block_batch must be a multiple of 128 (or equal the full batch)")
    assert d_in % 128 == 0, "pad input_features to a multiple of 128 with zero columns"

    x = x.astype(jnp.bfloat16)  # kernel consumes bf16; halves input DMA bytes
    grid = (B // block_batch,)

    x_spec = pl.BlockSpec((block_batch, d_in), lambda i: (i, 0))
    # Lane-dense output: one (1, block_batch) row-slice of a (1, B) array per step.
    out_spec = pl.BlockSpec((1, block_batch), lambda i: (0, i))
    # Weights/biases: full array, constant index_map, single-buffered -> DMA'd
    # once and kept resident in VMEM across all batch-grid steps.
    param_specs = [
        pl.BlockSpec(p.shape, lambda i: (0, 0), pipeline_mode=pl.Buffered(1))
        for p in kernel_params
    ]

    # --- VMEM budget (accurate accounting) ---------------------------------
    weight_bytes = sum(int(p.nbytes) for p in kernel_params)  # Buffered(1): once
    x_tile_bytes = 2 * block_batch * d_in * 2                  # bf16, double-buffered
    out_tile_bytes = 2 * block_batch * 4                       # f32, double-buffered
    # bf16 inter-layer activations + largest f32 pre-ReLU temp (TB x 1024).
    act_bytes = block_batch * ((1024 + 512 + 256 + 128) * 2 + 1024 * 4)
    need = weight_bytes + x_tile_bytes + out_tile_bytes + act_bytes
    try:
        phys_vmem = int(pltpu.get_tpu_info().vmem_capacity_bytes)
    except Exception:
        phys_vmem = 64 * 2**20        # conservative: v7x per-TensorCore VMEM
    vmem_cap = phys_vmem - 8 * 2**20  # leave compiler headroom
    vmem_limit = int(min(vmem_cap, max(32 * 2**20, int(need * 1.25) + (2 << 20))))

    flops = 2 * B * (d_in * 1024 + 1024 * 512 + 512 * 256 + 256 * 128 + 128)
    cost = pl.CostEstimate(
        flops=flops,
        transcendentals=B,  # sigmoid exp
        bytes_accessed=weight_bytes + int(x.nbytes) + B * 4,
    )

    out_row = pl.pallas_call(
        ember_mlp_kernel,
        out_shape=jax.ShapeDtypeStruct((1, B), jnp.float32),
        grid=grid,
        in_specs=[x_spec] + param_specs,
        out_specs=out_spec,
        compiler_params=pltpu.CompilerParams(
            dimension_semantics=("parallel",),
            vmem_limit_bytes=vmem_limit,
        ),
        cost_estimate=cost,
    )(x, *kernel_params)
    return out_row.reshape(B, 1)


def reference_forward(x, kernel_params):
    """Pure-JAX replica of the kernel numerics (bf16 matmul operands, f32 accum)."""
    w1, b1, w2, b2, w3, b3, w4, b4, w5, b5 = kernel_params
    h = x.astype(jnp.bfloat16)
    for w, b in ((w1, b1), (w2, b2), (w3, b3), (w4, b4)):
        z = jnp.dot(h, w, preferred_element_type=jnp.float32) + b
        h = jnp.maximum(z, 0.0).astype(jnp.bfloat16)
    logits = jnp.dot(h, w5.T, preferred_element_type=jnp.float32) + b5  # (B, 1)
    return jax.nn.sigmoid(logits)


if __name__ == "__main__":
    key = jax.random.PRNGKey(0)
    k_x, k_p = jax.random.split(key)

    # Small demo shapes; default block_batch chooser picks 128 -> 2 grid steps.
    batch, input_features = 256, 256
    x = jax.random.normal(k_x, (batch, input_features), jnp.float32)

    raw_layers = init_raw_params(k_p, input_features)
    kparams = prepare_kernel_params(raw_layers)

    out = ember_mlp_forward(x, kparams)
    out = jax.block_until_ready(out)

    assert out.shape == (batch, 1)
    assert bool(jnp.all((out >= 0.0) & (out <= 1.0)))

    ref = reference_forward(x, kparams)
    max_err = float(jnp.max(jnp.abs(out - ref)))
    assert max_err < 1e-2, f"kernel/reference mismatch: max_err={max_err}"
    print("KERNEL_OK")
</pallas_src>

<mosaic_0001>
module attributes {stable_mosaic.version = 11 : i64} {
  func.func @ember_mlp_kernel(%arg0: i32, %arg1: memref<128x256xbf16, #tpu.memory_space<vmem>>, %arg2: memref<256x1024xbf16, #tpu.memory_space<vmem>>, %arg3: memref<1x1024xf32, #tpu.memory_space<vmem>>, %arg4: memref<1024x512xbf16, #tpu.memory_space<vmem>>, %arg5: memref<1x512xf32, #tpu.memory_space<vmem>>, %arg6: memref<512x256xbf16, #tpu.memory_space<vmem>>, %arg7: memref<1x256xf32, #tpu.memory_space<vmem>>, %arg8: memref<256x128xbf16, #tpu.memory_space<vmem>>, %arg9: memref<1x128xf32, #tpu.memory_space<vmem>>, %arg10: memref<1x128xbf16, #tpu.memory_space<vmem>>, %arg11: memref<1x1xf32, #tpu.memory_space<vmem>>, %arg12: memref<1x128xf32, #tpu.memory_space<vmem>>) attributes {dimension_semantics = [#tpu.dimension_semantics<parallel>], iteration_bounds = array<i64: 2>, scalar_prefetch = 0 : i64, scratch_operands = 0 : i64, tpu.core_type = #tpu.core_type<tc>, window_params = [{transform_indices = @transform_0, window_bounds = array<i64: 128, 256>}, {pipeline_mode = #tpu.pipeline_mode<synchronous>, transform_indices = @transform_1, window_bounds = array<i64: 256, 1024>}, {pipeline_mode = #tpu.pipeline_mode<synchronous>, transform_indices = @transform_2, window_bounds = array<i64: 1, 1024>}, {pipeline_mode = #tpu.pipeline_mode<synchronous>, transform_indices = @transform_3, window_bounds = array<i64: 1024, 512>}, {pipeline_mode = #tpu.pipeline_mode<synchronous>, transform_indices = @transform_4, window_bounds = array<i64: 1, 512>}, {pipeline_mode = #tpu.pipeline_mode<synchronous>, transform_indices = @transform_5, window_bounds = array<i64: 512, 256>}, {pipeline_mode = #tpu.pipeline_mode<synchronous>, transform_indices = @transform_6, window_bounds = array<i64: 1, 256>}, {pipeline_mode = #tpu.pipeline_mode<synchronous>, transform_indices = @transform_7, window_bounds = array<i64: 256, 128>}, {pipeline_mode = #tpu.pipeline_mode<synchronous>, transform_indices = @transform_8, window_bounds = array<i64: 1, 128>}, {pipeline_mode = #tpu.pipeline_mode<synchronous>, transform_indices = @transform_9, window_bounds = array<i64: 1, 128>}, {pipeline_mode = #tpu.pipeline_mode<synchronous>, transform_indices = @transform_10, window_bounds = array<i64: 1, 1>}, {transform_indices = @transform_11, window_bounds = array<i64: 1, 128>}]} {
    %c0 = arith.constant 0 : index
    %c0_0 = arith.constant 0 : index
    %0 = vector.load %arg1[%c0, %c0_0] : memref<128x256xbf16, #tpu.memory_space<vmem>>, vector<128x256xbf16>
    %c0_1 = arith.constant 0 : index
    %c0_2 = arith.constant 0 : index
    %1 = vector.load %arg2[%c0_1, %c0_2] : memref<256x1024xbf16, #tpu.memory_space<vmem>>, vector<256x1024xbf16>
    %cst = arith.constant dense<0.000000e+00> : vector<128x1024xf32>
    %2 = tpu.matmul %0, %1, %cst {dimension_numbers = #tpu.dot_dimension_numbers<[1], [0], [0], [1], [0, 0, 1, 1], [], []>} : vector<128x256xbf16>, vector<256x1024xbf16>, vector<128x1024xf32> -> vector<128x1024xf32>
    %c0_3 = arith.constant 0 : index
    %c0_4 = arith.constant 0 : index
    %3 = vector.load %arg3[%c0_3, %c0_4] : memref<1x1024xf32, #tpu.memory_space<vmem>>, vector<1x1024xf32>
    %4 = vector.broadcast %3 : vector<1x1024xf32> to vector<128x1024xf32>
    %5 = arith.addf %2, %4 : vector<128x1024xf32>
    %cst_5 = arith.constant 0.000000e+00 : f32
    %6 = vector.broadcast %cst_5 : f32 to vector<128x1024xf32>
    %7 = arith.maximumf %5, %6 : vector<128x1024xf32>
    %8 = arith.truncf %7 : vector<128x1024xf32> to vector<128x1024xbf16>
    %c0_6 = arith.constant 0 : index
    %c0_7 = arith.constant 0 : index
    %9 = vector.load %arg4[%c0_6, %c0_7] : memref<1024x512xbf16, #tpu.memory_space<vmem>>, vector<1024x512xbf16>
    %cst_8 = arith.constant dense<0.000000e+00> : vector<128x512xf32>
    %10 = tpu.matmul %8, %9, %cst_8 {dimension_numbers = #tpu.dot_dimension_numbers<[1], [0], [0], [1], [0, 0, 1, 1], [], []>} : vector<128x1024xbf16>, vector<1024x512xbf16>, vector<128x512xf32> -> vector<128x512xf32>
    %c0_9 = arith.constant 0 : index
    %c0_10 = arith.constant 0 : index
    %11 = vector.load %arg5[%c0_9, %c0_10] : memref<1x512xf32, #tpu.memory_space<vmem>>, vector<1x512xf32>
    %12 = vector.broadcast %11 : vector<1x512xf32> to vector<128x512xf32>
    %13 = arith.addf %10, %12 : vector<128x512xf32>
    %cst_11 = arith.constant 0.000000e+00 : f32
    %14 = vector.broadcast %cst_11 : f32 to vector<128x512xf32>
    %15 = arith.maximumf %13, %14 : vector<128x512xf32>
    %16 = arith.truncf %15 : vector<128x512xf32> to vector<128x512xbf16>
    %c0_12 = arith.constant 0 : index
    %c0_13 = arith.constant 0 : index
    %17 = vector.load %arg6[%c0_12, %c0_13] : memref<512x256xbf16, #tpu.memory_space<vmem>>, vector<512x256xbf16>
    %cst_14 = arith.constant dense<0.000000e+00> : vector<128x256xf32>
    %18 = tpu.matmul %16, %17, %cst_14 {dimension_numbers = #tpu.dot_dimension_numbers<[1], [0], [0], [1], [0, 0, 1, 1], [], []>} : vector<128x512xbf16>, vector<512x256xbf16>, vector<128x256xf32> -> vector<128x256xf32>
    %c0_15 = arith.constant 0 : index
    %c0_16 = arith.constant 0 : index
    %19 = vector.load %arg7[%c0_15, %c0_16] : memref<1x256xf32, #tpu.memory_space<vmem>>, vector<1x256xf32>
    %20 = vector.broadcast %19 : vector<1x256xf32> to vector<128x256xf32>
    %21 = arith.addf %18, %20 : vector<128x256xf32>
    %cst_17 = arith.constant 0.000000e+00 : f32
    %22 = vector.broadcast %cst_17 : f32 to vector<128x256xf32>
    %23 = arith.maximumf %21, %22 : vector<128x256xf32>
    %24 = arith.truncf %23 : vector<128x256xf32> to vector<128x256xbf16>
    %c0_18 = arith.constant 0 : index
    %c0_19 = arith.constant 0 : index
    %25 = vector.load %arg8[%c0_18, %c0_19] : memref<256x128xbf16, #tpu.memory_space<vmem>>, vector<256x128xbf16>
    %cst_20 = arith.constant dense<0.000000e+00> : vector<128x128xf32>
    %26 = tpu.matmul %24, %25, %cst_20 {dimension_numbers = #tpu.dot_dimension_numbers<[1], [0], [0], [1], [0, 0, 1, 1], [], []>} : vector<128x256xbf16>, vector<256x128xbf16>, vector<128x128xf32> -> vector<128x128xf32>
    %c0_21 = arith.constant 0 : index
    %c0_22 = arith.constant 0 : index
    %27 = vector.load %arg9[%c0_21, %c0_22] : memref<1x128xf32, #tpu.memory_space<vmem>>, vector<1x128xf32>
    %28 = vector.broadcast %27 : vector<1x128xf32> to vector<128x128xf32>
    %29 = arith.addf %26, %28 : vector<128x128xf32>
    %cst_23 = arith.constant 0.000000e+00 : f32
    %30 = vector.broadcast %cst_23 : f32 to vector<128x128xf32>
    %31 = arith.maximumf %29, %30 : vector<128x128xf32>
    %32 = arith.truncf %31 : vector<128x128xf32> to vector<128x128xbf16>
    %c0_24 = arith.constant 0 : index
    %c0_25 = arith.constant 0 : index
    %33 = vector.load %arg10[%c0_24, %c0_25] : memref<1x128xbf16, #tpu.memory_space<vmem>>, vector<1x128xbf16>
    %cst_26 = arith.constant dense<0.000000e+00> : vector<1x128xf32>
    %34 = tpu.matmul %33, %32, %cst_26 {dimension_numbers = #tpu.dot_dimension_numbers<[1], [1], [0], [0], [0, 0, 1, 0], [], []>} : vector<1x128xbf16>, vector<128x128xbf16>, vector<1x128xf32> -> vector<1x128xf32>
    %c0_27 = arith.constant 0 : index
    %c0_28 = arith.constant 0 : index
    %35 = vector.load %arg11[%c0_27, %c0_28] : memref<1x1xf32, #tpu.memory_space<vmem>>, vector<1x1xf32>
    %36 = vector.broadcast %35 : vector<1x1xf32> to vector<1x128xf32>
    %37 = arith.addf %34, %36 : vector<1x128xf32>
    %38 = arith.negf %37 : vector<1x128xf32>
    %39 = math.exp %38 : vector<1x128xf32>
    %cst_29 = arith.constant 1.000000e+00 : f32
    %40 = vector.broadcast %cst_29 : f32 to vector<1x128xf32>
    %41 = arith.addf %40, %39 : vector<1x128xf32>
    %42 = arith.divf %40, %41 : vector<1x128xf32>
    %c0_30 = arith.constant 0 : index
    %c0_31 = arith.constant 0 : index
    %43 = vector.load %arg12[%c0_30, %c0_31] : memref<1x128xf32, #tpu.memory_space<vmem>>, vector<1x128xf32>
    tpu.vector_store %arg12[%c0_30, %c0_31], %42 {strides = array<i32>} : memref<1x128xf32, #tpu.memory_space<vmem>>, vector<1x128xf32>,
    return
  }
  func.func @transform_0(%arg0: i32) -> (i32, i32) {
    %c0_i32 = arith.constant 0 : i32
    %c0_i32_0 = arith.constant 0 : i32
    return %arg0, %c0_i32 : i32, i32
  }
  func.func @transform_1(%arg0: i32) -> (i32, i32) {
    %c0_i32 = arith.constant 0 : i32
    %c0_i32_0 = arith.constant 0 : i32
    %c0_i32_1 = arith.constant 0 : i32
    return %c0_i32, %c0_i32_0 : i32, i32
  }
  func.func @transform_2(%arg0: i32) -> (i32, i32) {
    %c0_i32 = arith.constant 0 : i32
    %c0_i32_0 = arith.constant 0 : i32
    %c0_i32_1 = arith.constant 0 : i32
    return %c0_i32, %c0_i32_0 : i32, i32
  }
  func.func @transform_3(%arg0: i32) -> (i32, i32) {
    %c0_i32 = arith.constant 0 : i32
    %c0_i32_0 = arith.constant 0 : i32
    %c0_i32_1 = arith.constant 0 : i32
    return %c0_i32, %c0_i32_0 : i32, i32
  }
  func.func @transform_4(%arg0: i32) -> (i32, i32) {
    %c0_i32 = arith.constant 0 : i32
    %c0_i32_0 = arith.constant 0 : i32
    %c0_i32_1 = arith.constant 0 : i32
    return %c0_i32, %c0_i32_0 : i32, i32
  }
  func.func @transform_5(%arg0: i32) -> (i32, i32) {
    %c0_i32 = arith.constant 0 : i32
    %c0_i32_0 = arith.constant 0 : i32
    %c0_i32_1 = arith.constant 0 : i32
    return %c0_i32, %c0_i32_0 : i32, i32
  }
  func.func @transform_6(%arg0: i32) -> (i32, i32) {
    %c0_i32 = arith.constant 0 : i32
    %c0_i32_0 = arith.constant 0 : i32
    %c0_i32_1 = arith.constant 0 : i32
    return %c0_i32, %c0_i32_0 : i32, i32
  }
  func.func @transform_7(%arg0: i32) -> (i32, i32) {
    %c0_i32 = arith.constant 0 : i32
    %c0_i32_0 = arith.constant 0 : i32
    %c0_i32_1 = arith.constant 0 : i32
    return %c0_i32, %c0_i32_0 : i32, i32
  }
  func.func @transform_8(%arg0: i32) -> (i32, i32) {
    %c0_i32 = arith.constant 0 : i32
    %c0_i32_0 = arith.constant 0 : i32
    %c0_i32_1 = arith.constant 0 : i32
    return %c0_i32, %c0_i32_0 : i32, i32
  }
  func.func @transform_9(%arg0: i32) -> (i32, i32) {
    %c0_i32 = arith.constant 0 : i32
    %c0_i32_0 = arith.constant 0 : i32
    %c0_i32_1 = arith.constant 0 : i32
    return %c0_i32, %c0_i32_0 : i32, i32
  }
  func.func @transform_10(%arg0: i32) -> (i32, i32) {
    %c0_i32 = arith.constant 0 : i32
    %c0_i32_0 = arith.constant 0 : i32
    %c0_i32_1 = arith.constant 0 : i32
    return %c0_i32, %c0_i32_0 : i32, i32
  }
  func.func @transform_11(%arg0: i32) -> (i32, i32) {
    %c0_i32 = arith.constant 0 : i32
    %c0_i32_0 = arith.constant 0 : i32
    return %c0_i32, %arg0 : i32, i32
  }
}

</mosaic_0001>

<llo_original>
// kernel: tpu_custom_call.1
$region0: #{tpu_custom_call.1}
  #allocation0 [shape = 'u32[]', space=smem, size = 0x4, offset = 0x4, fixed_abs, tag = 'smem constant byte address 0x4 - core index']
  #allocation1 [shape = 'u32[72,128]{1,0:T(1,128)}', space=vmem, size = 0x9000, scoped, tag = 'internal scratch']
  #allocation2 [shape = 'f32[1,1]{1,0:T(1,128)S(1)}', space=vmem, size = 0x200, scoped, tag = 'scoped memory for tpu_custom_call.1']
  %s0 = inlined_call_operand.hbm [shape: bf16[256,256], index: 0, kind: input, shape index: {}]
  %s1 = inlined_call_operand.hbm [shape: bf16[256,1024], index: 1, kind: input, shape index: {}]
  %s2 = inlined_call_operand.hbm [shape: f32[1,1024], index: 2, kind: input, shape index: {}]
  %s3 = inlined_call_operand.hbm [shape: bf16[1024,512], index: 3, kind: input, shape index: {}]
  %s4 = inlined_call_operand.vmem [shape: f32[1,512], index: 4, kind: input, shape index: {}]
  %s5 = inlined_call_operand.hbm [shape: bf16[512,256], index: 5, kind: input, shape index: {}]
  %s6 = inlined_call_operand.vmem [shape: f32[1,256], index: 6, kind: input, shape index: {}]
  %s7 = inlined_call_operand.hbm [shape: bf16[256,128], index: 7, kind: input, shape index: {}]
  %s8 = inlined_call_operand.vmem [shape: f32[1,128], index: 8, kind: input, shape index: {}]
  %s9 = inlined_call_operand.vmem [shape: bf16[1,128], index: 9, kind: input, shape index: {}]
  %s10 = inlined_call_operand.<no memory space> [shape: f32[1,1], index: 10, kind: input, shape index: {}]
  %s11 = inlined_call_operand.hbm [shape: f32[1,256], index: 11, kind: output, shape index: {}]
  %s12 = sld [smem:[#allocation0]]
  $region101: #{tpu_custom_call.1} parent=0
    _
  %s14 = ssub.s32 1, %s12
  %s15 = scalar_select 0, %s14, %s12
  %v16 = vstv %s10
  %17 = vst [vmem:[#allocation2] sm:$0x1] %v16
  $region1: #{tpu_custom_call.1} parent=0
    #allocation3 [shape = 'u8[131072]{0}', space=vmem, size = 0x20000, scoped, tag = 'input window, operand 0']
    #allocation4 [shape = 's32[2]{0}', space=sflag, size = 0x8, scoped, tag = 'scoped memory for tpu_custom_call.1']
    #allocation5 [shape = 's32[2]{0}', space=sflag, size = 0x8, scoped, tag = 'scoped memory for tpu_custom_call.1']
    #allocation6 [shape = 'u8[524288]{0}', space=vmem, size = 0x80000, scoped, tag = 'input window, operand 1, single buffered']
    #allocation7 [shape = 's32[1]{0}', space=sflag, size = 0x4, scoped, tag = 'scoped memory for tpu_custom_call.1']
    #allocation8 [shape = 'u8[4096]{0}', space=vmem, size = 0x1000, scoped, tag = 'input window, operand 2, single buffered']
    #allocation9 [shape = 'u8[1048576]{0}', space=vmem, size = 0x100000, scoped, tag = 'input window, operand 3, single buffered']
    #allocation10 [shape = 's32[1]{0}', space=sflag, size = 0x4, scoped, tag = 'scoped memory for tpu_custom_call.1']
    #allocation11 [shape = 'u8[262144]{0}', space=vmem, size = 0x40000, scoped, tag = 'input window, operand 5, single buffered']
    #allocation12 [shape = 'u8[65536]{0}', space=vmem, size = 0x10000, scoped, tag = 'input window, operand 7, single buffered']
    #allocation13 [shape = 's32[1]{0}', space=sflag, size = 0x4, scoped, tag = 'scoped memory for tpu_custom_call.1']
    #allocation14 [shape = 'u8[1024]{0}', space=vmem, size = 0x400, scoped, tag = 'output window, operand 0']
    %18 = vsyncpa [#allocation4], 0
    %s19 = scalar_lea.sflag [#allocation4], 1
    %20 = vsyncpa %s19, 0
    %21 = vsyncpa [#allocation7], 0
    %22 = vsyncpa [#allocation10], 0
    %23 = vsyncpa [#allocation13], 0
    %24 = vsyncpa [#allocation5], 0
    %s25 = scalar_lea.sflag [#allocation5], 1
    %26 = vsyncpa %s25, 0
    loop: start=0, step=1, limit=4
    $region2: #{tpu_custom_call.1} parent=1 // loop_pre_header
      _
    $region3: #{tpu_custom_call.1} parent=1 // loop_header
      %s28 = sphi 0, %s32
      %p29 = scmp.ge.s32.totalorder %s28, 4
      %s38 = sphi 0, %s40
      %s41 = sphi 0, %s38
      %s42 = sphi 0, %s41
      %s58 = sphi 0, %s42
      %s62 = sphi 0, %s62
      %s64 = sphi 0, %s62
      %s65 = sphi 0, %s64
      %s79 = sphi 0, %s65
      %s83 = sphi 0, %s83
      %s85 = sphi 0, %s83
      %s86 = sphi 0, %s85
      %s100 = sphi 0, %s86
      %s104 = sphi 0, %s104
      %s106 = sphi 0, %s104
      %s107 = sphi 0, %s106
      %s121 = sphi 0, %s107
      %s125 = sphi 0, %s125
      %s127 = sphi 0, %s125
      %s128 = sphi 0, %s127
      %s142 = sphi 0, %s128
      %s146 = sphi 0, %s146
      %s148 = sphi 0, %s146
      %s149 = sphi 0, %s148
      %s163 = sphi 0, %s149
      %s167 = sphi 0, %s167
      %s169 = sphi 0, %s167
      %s170 = sphi 0, %s169
      %s184 = sphi 0, %s170
      %s188 = sphi 0, %s188
      %s190 = sphi 0, %s188
      %s191 = sphi 0, %s190
      %s205 = sphi 0, %s191
      %s209 = sphi 0, %s209
      %s211 = sphi 0, %s209
      %s212 = sphi 0, %s211
      %s226 = sphi 0, %s212
      %s230 = sphi 0, %s230
      %s232 = sphi 0, %s230
      %s233 = sphi 0, %s232
      %s247 = sphi 0, %s233
      %s251 = sphi 0, %s251
      %s253 = sphi 0, %s251
      %s254 = sphi 0, %s253
      %s268 = sphi 0, %s254
      %s274 = sphi 0, %s276
      %s277 = sphi 0, %s274
      %s278 = sphi 0, %s277
      %s294 = sphi 0, %s278
    $region4: #{tpu_custom_call.1} parent=1 // loop_header_branch
      %31 = sbr.rel (%p29) target = $region8
    $region5: #{tpu_custom_call.1} parent=1 // loop_body
      %s33 = ssub.s32 %s28, 1
      %s34 = ssub.s32 %s28, 2
      %s35 = sadd.s32 %s28, 1
      %s36 = ssub.s32 %s28, %s35
      %p37 = scmp.eq.s32.totalorder %s36, 0
      %s39 = sadd.s32 %s38, 1
      %s40 = scalar_select %p37, %s38, %s39
      %p43 = pneg %p37
      %p44 = scmp.eq.s32.totalorder %s28, 1
      %p45 = por %p43, %p44
      %p46 = scmp.ne.s32.totalorder %s38, %s41
      %p47 = scmp.eq.s32.totalorder %s28, 0
      %p48 = por %p46, %p47
      %p49 = scmp.ne.s32.totalorder %s38, %s41
      %p50 = scmp.eq.s32.totalorder %s33, 1
      %p51 = por %p49, %p50
      %p52 = scmp.ne.s32.totalorder %s41, %s42
      %p53 = scmp.eq.s32.totalorder %s33, 0
      %p54 = por %p52, %p53
      %p55 = scmp.ne.s32.totalorder %s41, %s42
      %p56 = scmp.eq.s32.totalorder %s34, 1
      %p57 = por %p55, %p56
      %p59 = scmp.ne.s32.totalorder %s42, %s58
      %p60 = scmp.eq.s32.totalorder %s34, 0
      %p61 = por %p59, %p60
      %s63 = sadd.s32 %s62, 1
      %p66 = scmp.eq.s32.totalorder %s28, 1
      %p67 = scmp.ne.s32.totalorder %s62, %s64
      %p68 = scmp.eq.s32.totalorder %s28, 0
      %p69 = por %p67, %p68
      %p70 = scmp.ne.s32.totalorder %s62, %s64
      %p71 = scmp.eq.s32.totalorder %s33, 1
      %p72 = por %p70, %p71
      %p73 = scmp.ne.s32.totalorder %s64, %s65
      %p74 = scmp.eq.s32.totalorder %s33, 0
      %p75 = por %p73, %p74
      %p76 = scmp.ne.s32.totalorder %s64, %s65
      %p77 = scmp.eq.s32.totalorder %s34, 1
      %p78 = por %p76, %p77
      %p80 = scmp.ne.s32.totalorder %s65, %s79
      %p81 = scmp.eq.s32.totalorder %s34, 0
      %p82 = por %p80, %p81
      %s84 = sadd.s32 %s83, 1
      %p87 = scmp.eq.s32.totalorder %s28, 1
      %p88 = scmp.ne.s32.totalorder %s83, %s85
      %p89 = scmp.eq.s32.totalorder %s28, 0
      %p90 = por %p88, %p89
      %p91 = scmp.ne.s32.totalorder %s83, %s85
      %p92 = scmp.eq.s32.totalorder %s33, 1
      %p93 = por %p91, %p92
      %p94 = scmp.ne.s32.totalorder %s85, %s86
      %p95 = scmp.eq.s32.totalorder %s33, 0
      %p96 = por %p94, %p95
      %p97 = scmp.ne.s32.totalorder %s85, %s86
      %p98 = scmp.eq.s32.totalorder %s34, 1
      %p99 = por %p97, %p98
      %p101 = scmp.ne.s32.totalorder %s86, %s100
      %p102 = scmp.eq.s32.totalorder %s34, 0
      %p103 = por %p101, %p102
      %s105 = sadd.s32 %s104, 1
      %p108 = scmp.eq.s32.totalorder %s28, 1
      %p109 = scmp.ne.s32.totalorder %s104, %s106
      %p110 = scmp.eq.s32.totalorder %s28, 0
      %p111 = por %p109, %p110
      %p112 = scmp.ne.s32.totalorder %s104, %s106
      %p113 = scmp.eq.s32.totalorder %s33, 1
      %p114 = por %p112, %p113
      %p115 = scmp.ne.s32.totalorder %s106, %s107
      %p116 = scmp.eq.s32.totalorder %s33, 0
      %p117 = por %p115, %p116
      %p118 = scmp.ne.s32.totalorder %s106, %s107
      %p119 = scmp.eq.s32.totalorder %s34, 1
      %p120 = por %p118, %p119
      %p122 = scmp.ne.s32.totalorder %s107, %s121
      %p123 = scmp.eq.s32.totalorder %s34, 0
      %p124 = por %p122, %p123
      %s126 = sadd.s32 %s125, 1
      %p129 = scmp.eq.s32.totalorder %s28, 1
      %p130 = scmp.ne.s32.totalorder %s125, %s127
      %p131 = scmp.eq.s32.totalorder %s28, 0
      %p132 = por %p130, %p131
      %p133 = scmp.ne.s32.totalorder %s125, %s127
      %p134 = scmp.eq.s32.totalorder %s33, 1
      %p135 = por %p133, %p134
      %p136 = scmp.ne.s32.totalorder %s127, %s128
      %p137 = scmp.eq.s32.totalorder %s33, 0
      %p138 = por %p136, %p137
      %p139 = scmp.ne.s32.totalorder %s127, %s128
      %p140 = scmp.eq.s32.totalorder %s34, 1
      %p141 = por %p139, %p140
      %p143 = scmp.ne.s32.totalorder %s128, %s142
      %p144 = scmp.eq.s32.totalorder %s34, 0
      %p145 = por %p143, %p144
      %s147 = sadd.s32 %s146, 1
      %p150 = scmp.eq.s32.totalorder %s28, 1
      %p151 = scmp.ne.s32.totalorder %s146, %s148
      %p152 = scmp.eq.s32.totalorder %s28, 0
      %p153 = por %p151, %p152
      %p154 = scmp.ne.s32.totalorder %s146, %s148
      %p155 = scmp.eq.s32.totalorder %s33, 1
      %p156 = por %p154, %p155
      %p157 = scmp.ne.s32.totalorder %s148, %s149
      %p158 = scmp.eq.s32.totalorder %s33, 0
      %p159 = por %p157, %p158
      %p160 = scmp.ne.s32.totalorder %s148, %s149
      %p161 = scmp.eq.s32.totalorder %s34, 1
      %p162 = por %p160, %p161
      %p164 = scmp.ne.s32.totalorder %s149, %s163
      %p165 = scmp.eq.s32.totalorder %s34, 0
      %p166 = por %p164, %p165
      %s168 = sadd.s32 %s167, 1
      %p171 = scmp.eq.s32.totalorder %s28, 1
      %p172 = scmp.ne.s32.totalorder %s167, %s169
      %p173 = scmp.eq.s32.totalorder %s28, 0
      %p174 = por %p172, %p173
      %p175 = scmp.ne.s32.totalorder %s167, %s169
      %p176 = scmp.eq.s32.totalorder %s33, 1
      %p177 = por %p175, %p176
      %p178 = scmp.ne.s32.totalorder %s169, %s170
      %p179 = scmp.eq.s32.totalorder %s33, 0
      %p180 = por %p178, %p179
      %p181 = scmp.ne.s32.totalorder %s169, %s170
      %p182 = scmp.eq.s32.totalorder %s34, 1
      %p183 = por %p181, %p182
      %p185 = scmp.ne.s32.totalorder %s170, %s184
      %p186 = scmp.eq.s32.totalorder %s34, 0
      %p187 = por %p185, %p186
      %s189 = sadd.s32 %s188, 1
      %p192 = scmp.eq.s32.totalorder %s28, 1
      %p193 = scmp.ne.s32.totalorder %s188, %s190
      %p194 = scmp.eq.s32.totalorder %s28, 0
      %p195 = por %p193, %p194
      %p196 = scmp.ne.s32.totalorder %s188, %s190
      %p197 = scmp.eq.s32.totalorder %s33, 1
      %p198 = por %p196, %p197
      %p199 = scmp.ne.s32.totalorder %s190, %s191
      %p200 = scmp.eq.s32.totalorder %s33, 0
      %p201 = por %p199, %p200
      %p202 = scmp.ne.s32.totalorder %s190, %s191
      %p203 = scmp.eq.s32.totalorder %s34, 1
      %p204 = por %p202, %p203
      %p206 = scmp.ne.s32.totalorder %s191, %s205
      %p207 = scmp.eq.s32.totalorder %s34, 0
      %p208 = por %p206, %p207
      %s210 = sadd.s32 %s209, 1
      %p213 = scmp.eq.s32.totalorder %s28, 1
      %p214 = scmp.ne.s32.totalorder %s209, %s211
      %p215 = scmp.eq.s32.totalorder %s28, 0
      %p216 = por %p214, %p215
      %p217 = scmp.ne.s32.totalorder %s209, %s211
      %p218 = scmp.eq.s32.totalorder %s33, 1
      %p219 = por %p217, %p218
      %p220 = scmp.ne.s32.totalorder %s211, %s212
      %p221 = scmp.eq.s32.totalorder %s33, 0
      %p222 = por %p220, %p221
      %p223 = scmp.ne.s32.totalorder %s211, %s212
      %p224 = scmp.eq.s32.totalorder %s34, 1
      %p225 = por %p223, %p224
      %p227 = scmp.ne.s32.totalorder %s212, %s226
      %p228 = scmp.eq.s32.totalorder %s34, 0
      %p229 = por %p227, %p228
      %s231 = sadd.s32 %s230, 1
      %p234 = scmp.eq.s32.totalorder %s28, 1
      %p235 = scmp.ne.s32.totalorder %s230, %s232
      %p236 = scmp.eq.s32.totalorder %s28, 0
      %p237 = por %p235, %p236
      %p238 = scmp.ne.s32.totalorder %s230, %s232
      %p239 = scmp.eq.s32.totalorder %s33, 1
      %p240 = por %p238, %p239
      %p241 = scmp.ne.s32.totalorder %s232, %s233
      %p242 = scmp.eq.s32.totalorder %s33, 0
      %p243 = por %p241, %p242
      %p244 = scmp.ne.s32.totalorder %s232, %s233
      %p245 = scmp.eq.s32.totalorder %s34, 1
      %p246 = por %p244, %p245
      %p248 = scmp.ne.s32.totalorder %s233, %s247
      %p249 = scmp.eq.s32.totalorder %s34, 0
      %p250 = por %p248, %p249
      %s252 = sadd.s32 %s251, 1
      %p255 = scmp.eq.s32.totalorder %s28, 1
      %p256 = scmp.ne.s32.totalorder %s251, %s253
      %p257 = scmp.eq.s32.totalorder %s28, 0
      %p258 = por %p256, %p257
      %p259 = scmp.ne.s32.totalorder %s251, %s253
      %p260 = scmp.eq.s32.totalorder %s33, 1
      %p261 = por %p259, %p260
      %p262 = scmp.ne.s32.totalorder %s253, %s254
      %p263 = scmp.eq.s32.totalorder %s33, 0
      %p264 = por %p262, %p263
      %p265 = scmp.ne.s32.totalorder %s253, %s254
      %p266 = scmp.eq.s32.totalorder %s34, 1
      %p267 = por %p265, %p266
      %p269 = scmp.ne.s32.totalorder %s254, %s268
      %p270 = scmp.eq.s32.totalorder %s34, 0
      %p271 = por %p269, %p270
      %s272 = ssub.s32 %s28, %s35
      %p273 = scmp.eq.s32.totalorder %s272, 0
      %s275 = sadd.s32 %s274, 1
      %s276 = scalar_select %p273, %s274, %s275
      %p279 = pneg %p273
      %p280 = scmp.eq.s32.totalorder %s28, 1
      %p281 = por %p279, %p280
      %p282 = scmp.ne.s32.totalorder %s274, %s277
      %p283 = scmp.eq.s32.totalorder %s28, 0
      %p284 = por %p282, %p283
      %p285 = scmp.ne.s32.totalorder %s274, %s277
      %p286 = scmp.eq.s32.totalorder %s33, 1
      %p287 = por %p285, %p286
      %p288 = scmp.ne.s32.totalorder %s277, %s278
      %p289 = scmp.eq.s32.totalorder %s33, 0
      %p290 = por %p288, %p289
      %p291 = scmp.ne.s32.totalorder %s277, %s278
      %p292 = scmp.eq.s32.totalorder %s34, 1
      %p293 = por %p291, %p292
      %p295 = scmp.ne.s32.totalorder %s278, %s294
      %p296 = scmp.eq.s32.totalorder %s34, 0
      %p297 = por %p295, %p296
      %p298 = scmp.le.s32.totalorder 1, %s28
      %p299 = scmp.lt.s32.totalorder %s28, 3
      %p300 = pnand %p298, %p299
      %p301 = pneg %p300
      // Predicated region
      $region9: #{tpu_custom_call.1} parent=5 // pred_check
        _
      $region10: #{tpu_custom_call.1} parent=5 // pred_check_branch
        %303 = sbr.rel (%p300) target = $region12
      $region11: #{tpu_custom_call.1} parent=5 // pred_region
        %s304 = ssub.s32 %s28, 1
        // Predicated region
        $region13: #{tpu_custom_call.1} parent=11 // pred_check
          %p305 = pneg %p75
        $region14: #{tpu_custom_call.1} parent=11 // pred_check_branch
          %307 = sbr.rel (%p305) target = $region16
        $region15: #{tpu_custom_call.1} parent=11 // pred_region
          %309 = vsyncadd [#allocation7], 0
          %s310 = sshll.u32 %s1, 4
          %s311 = int_to_ptr.hbm [resolvable:$true] %s310
          %s312 = sshll.u32 [#allocation6], 4
          %s313 = int_to_ptr.vmem [resolvable:$true] %s312
          %318 = dma.hbm_to_vmem [thread:$0]  %s311, 16384, %s313, [#allocation7], 512, 512, 32
        $region16: #{tpu_custom_call.1} parent=11 // pred_fallthru
          _
        // Predicated region
        $region17: #{tpu_custom_call.1} parent=11 // pred_check
          %p319 = pneg %p96
        $region18: #{tpu_custom_call.1} parent=11 // pred_check_branch
          %321 = sbr.rel (%p319) target = $region20
        $region19: #{tpu_custom_call.1} parent=11 // pred_region
          %323 = vsyncadd [#allocation7], 0
          %s325 = sshll.u32 %s2, 4
          %s326 = int_to_ptr.hbm [resolvable:$true] %s325
          %s327 = sshll.u32 [#allocation8], 4
          %s328 = int_to_ptr.vmem [resolvable:$true] %s327
          %330 = dma.hbm_to_vmem [thread:$0]  %s326, 128, %s328, [#allocation7]
        $region20: #{tpu_custom_call.1} parent=11 // pred_fallthru
          _
        // Predicated region
        $region21: #{tpu_custom_call.1} parent=11 // pred_check
          %p331 = pneg %p117
        $region22: #{tpu_custom_call.1} parent=11 // pred_check_branch
          %333 = sbr.rel (%p331) target = $region24
        $region23: #{tpu_custom_call.1} parent=11 // pred_region
          %335 = vsyncadd [#allocation10], 0
          %s336 = sshll.u32 %s3, 4
          %s337 = int_to_ptr.hbm [resolvable:$true] %s336
          %s338 = sshll.u32 [#allocation9], 4
          %s339 = int_to_ptr.vmem [resolvable:$true] %s338
          %344 = dma.hbm_to_vmem [thread:$0]  %s337, 32768, %s339, [#allocation10], 256, 256, 16
        $region24: #{tpu_custom_call.1} parent=11 // pred_fallthru
          _
        // Predicated region
        $region25: #{tpu_custom_call.1} parent=11 // pred_check
          %p345 = pneg %p138
        $region26: #{tpu_custom_call.1} parent=11 // pred_check_branch
          %347 = sbr.rel (%p345) target = $region28
        $region27: #{tpu_custom_call.1} parent=11 // pred_region
          _
        $region28: #{tpu_custom_call.1} parent=11 // pred_fallthru
          _
        // Predicated region
        $region29: #{tpu_custom_call.1} parent=11 // pred_check
          %p348 = pneg %p159
        $region30: #{tpu_custom_call.1} parent=11 // pred_check_branch
          %350 = sbr.rel (%p348) target = $region32
        $region31: #{tpu_custom_call.1} parent=11 // pred_region
          %352 = vsyncadd [#allocation10], 0
          %s353 = sshll.u32 %s5, 4
          %s354 = int_to_ptr.hbm [resolvable:$true] %s353
          %s355 = sshll.u32 [#allocation11], 4
          %s356 = int_to_ptr.vmem [resolvable:$true] %s355
          %361 = dma.hbm_to_vmem [thread:$0]  %s354, 8192, %s356, [#allocation10], 128, 128, 8
        $region32: #{tpu_custom_call.1} parent=11 // pred_fallthru
          _
        // Predicated region
        $region33: #{tpu_custom_call.1} parent=11 // pred_check
          %p362 = pneg %p180
        $region34: #{tpu_custom_call.1} parent=11 // pred_check_branch
          %364 = sbr.rel (%p362) target = $region36
        $region35: #{tpu_custom_call.1} parent=11 // pred_region
          _
        $region36: #{tpu_custom_call.1} parent=11 // pred_fallthru
          _
        // Predicated region
        $region37: #{tpu_custom_call.1} parent=11 // pred_check
          %p365 = pneg %p201
        $region38: #{tpu_custom_call.1} parent=11 // pred_check_branch
          %367 = sbr.rel (%p365) target = $region40
        $region39: #{tpu_custom_call.1} parent=11 // pred_region
          %369 = vsyncadd [#allocation13], 0
          %s370 = sshll.u32 %s7, 4
          %s371 = int_to_ptr.hbm [resolvable:$true] %s370
          %s372 = sshll.u32 [#allocation12], 4
          %s373 = int_to_ptr.vmem [resolvable:$true] %s372
          %378 = dma.hbm_to_vmem [thread:$0]  %s371, 2048, %s373, [#allocation13], 64, 64, 4
        $region40: #{tpu_custom_call.1} parent=11 // pred_fallthru
          _
        // Predicated region
        $region41: #{tpu_custom_call.1} parent=11 // pred_check
          %p379 = pneg %p222
        $region42: #{tpu_custom_call.1} parent=11 // pred_check_branch
          %381 = sbr.rel (%p379) target = $region44
        $region43: #{tpu_custom_call.1} parent=11 // pred_region
          _
        $region44: #{tpu_custom_call.1} parent=11 // pred_fallthru
          _
        // Predicated region
        $region45: #{tpu_custom_call.1} parent=11 // pred_check
          %p382 = pneg %p243
        $region46: #{tpu_custom_call.1} parent=11 // pred_check_branch
          %384 = sbr.rel (%p382) target = $region48
        $region47: #{tpu_custom_call.1} parent=11 // pred_region
          _
        $region48: #{tpu_custom_call.1} parent=11 // pred_fallthru
          _
        // Predicated region
        $region49: #{tpu_custom_call.1} parent=11 // pred_check
          %p385 = pneg %p264
        $region50: #{tpu_custom_call.1} parent=11 // pred_check_branch
          %387 = sbr.rel (%p385) target = $region52
        $region51: #{tpu_custom_call.1} parent=11 // pred_region
          _
        $region52: #{tpu_custom_call.1} parent=11 // pred_fallthru
          _
      $region12: #{tpu_custom_call.1} parent=5 // pred_fallthru
        _
      %p388 = scmp.lt.s32.totalorder %s28, 2
      // Predicated region
      $region53: #{tpu_custom_call.1} parent=5 // pred_check
        %p389 = pneg %p388
      $region54: #{tpu_custom_call.1} parent=5 // pred_check_branch
        %391 = sbr.rel (%p389) target = $region56
      $region55: #{tpu_custom_call.1} parent=5 // pred_region
        // Predicated region
        $region57: #{tpu_custom_call.1} parent=55 // pred_check
          %p392 = pneg %p48
        $region58: #{tpu_custom_call.1} parent=55 // pred_check_branch
          %394 = sbr.rel (%p392) target = $region60
        $region59: #{tpu_custom_call.1} parent=55 // pred_region
          %s395 = sand.u32 %s38, 1
          %s396 = scalar_lea.sflag [#allocation4], %s395
          %s397 = sand.u32 %s38, 1
          %s398 = smul.addr %s397, 128
          %s399 = scalar_lea.vmem [#allocation3], %s398
          %s400 = smul.u32 16, %s28
          %402 = vsyncadd %s396, 0
          %s403 = smul.addr %s400, 2
          %s404 = smul.addr %s403, 4
          %s405 = scalar_lea.hbm %s0, %s404
          %s406 = sshll.u32 %s405, 4
          %s407 = int_to_ptr.hbm [resolvable:$true] %s406
          %s408 = sshll.u32 %s399, 4
          %s409 = int_to_ptr.vmem [resolvable:$true] %s408
          %414 = dma.hbm_to_vmem [thread:$0]  %s407, 2048, %s409, %s396, 128, 128, 8
        $region60: #{tpu_custom_call.1} parent=55 // pred_fallthru
          _
      $region56: #{tpu_custom_call.1} parent=5 // pred_fallthru
        _
      %p415 = scmp.le.s32.totalorder 1, %s28
      %p416 = scmp.lt.s32.totalorder %s28, 3
      %p417 = pnand %p415, %p416
      %p418 = pneg %p417
      // Predicated region
      $region61: #{tpu_custom_call.1} parent=5 // pred_check
        _
      $region62: #{tpu_custom_call.1} parent=5 // pred_check_branch
        %420 = sbr.rel (%p417) target = $region64
      $region63: #{tpu_custom_call.1} parent=5 // pred_region
        %s421 = ssub.s32 %s28, 1
        %s422 = sand.u32 %s41, 1
        %s423 = scalar_lea.sflag [#allocation4], %s422
        %s424 = sand.u32 %s41, 1
        %s425 = smul.addr %s424, 128
        %s426 = scalar_lea.vmem [#allocation3], %s425
        // Predicated region
        $region65: #{tpu_custom_call.1} parent=63 // pred_check
          %p427 = pneg %p54
        $region66: #{tpu_custom_call.1} parent=63 // pred_check_branch
          %429 = sbr.rel (%p427) target = $region68
        $region67: #{tpu_custom_call.1} parent=63 // pred_region
          %431 = dma.done %s423, 2048
        $region68: #{tpu_custom_call.1} parent=63 // pred_fallthru
          _
        // Predicated region
        $region69: #{tpu_custom_call.1} parent=63 // pred_check
          %p432 = pneg %p75
        $region70: #{tpu_custom_call.1} parent=63 // pred_check_branch
          %434 = sbr.rel (%p432) target = $region72
        $region71: #{tpu_custom_call.1} parent=63 // pred_region
          %436 = dma.done [#allocation7], 16384
        $region72: #{tpu_custom_call.1} parent=63 // pred_fallthru
          _
        // Predicated region
        $region73: #{tpu_custom_call.1} parent=63 // pred_check
          %p437 = pneg %p96
        $region74: #{tpu_custom_call.1} parent=63 // pred_check_branch
          %439 = sbr.rel (%p437) target = $region76
        $region75: #{tpu_custom_call.1} parent=63 // pred_region
          %441 = dma.done [#allocation7], 128
        $region76: #{tpu_custom_call.1} parent=63 // pred_fallthru
          _
        // Predicated region
        $region77: #{tpu_custom_call.1} parent=63 // pred_check
          %p442 = pneg %p117
        $region78: #{tpu_custom_call.1} parent=63 // pred_check_branch
          %444 = sbr.rel (%p442) target = $region80
        $region79: #{tpu_custom_call.1} parent=63 // pred_region
          %446 = dma.done [#allocation10], 32768
        $region80: #{tpu_custom_call.1} parent=63 // pred_fallthru
          _
        // Predicated region
        $region81: #{tpu_custom_call.1} parent=63 // pred_check
          %p447 = pneg %p159
        $region82: #{tpu_custom_call.1} parent=63 // pred_check_branch
          %449 = sbr.rel (%p447) target = $region84
        $region83: #{tpu_custom_call.1} parent=63 // pred_region
          %451 = dma.done [#allocation10], 8192
        $region84: #{tpu_custom_call.1} parent=63 // pred_fallthru
          _
        // Predicated region
        $region85: #{tpu_custom_call.1} parent=63 // pred_check
          %p452 = pneg %p201
        $region86: #{tpu_custom_call.1} parent=63 // pred_check_branch
          %454 = sbr.rel (%p452) target = $region88
        $region87: #{tpu_custom_call.1} parent=63 // pred_region
          %456 = dma.done [#allocation13], 2048
        $region88: #{tpu_custom_call.1} parent=63 // pred_fallthru
          _
        %s457 = sand.u32 %s41, 1
        %s458 = scalar_lea.sflag [#allocation4], %s457
        %s459 = sand.u32 %s41, 1
        %s460 = smul.addr %s459, 128
        %s461 = scalar_lea.vmem [#allocation3], %s460
        %p462 = pneg %p54
        %p463 = pneg %p51
        %p464 = pneg %p75
        %p465 = pneg %p72
        %p466 = pneg %p96
        %p467 = pneg %p93
        %p468 = pneg %p117
        %p469 = pneg %p114
        %p470 = pneg %p138
        %p471 = pneg %p135
        %p472 = pneg %p159
        %p473 = pneg %p156
        %p474 = pneg %p180
        %p475 = pneg %p177
        %p476 = pneg %p201
        %p477 = pneg %p198
        %p478 = pneg %p222
        %p479 = pneg %p219
        %p480 = pneg %p243
        %p481 = pneg %p240
        %p482 = pneg %p264
        %p483 = pneg %p261
        %p484 = pneg %p290
        %p485 = pneg %p287
        %s486 = sand.u32 %s277, 1
        %s487 = scalar_lea.sflag [#allocation5], %s486
        %s488 = sand.u32 %s277, 1
        %s489 = scalar_lea.vmem [#allocation14], %s488
        %s490 = smul.u32 16, %s33
        %v491 = vld [vmem:[%s426] sm:$0xff]
        %v492 = vld [vmem:[%s426 + $0x8] sm:$0xff]
        %v493 = vld [vmem:[%s426 + $0x10] sm:$0xff]
        %v494 = vld [vmem:[%s426 + $0x18] sm:$0xff]
        %v495 = vld [vmem:[%s426 + $0x20] sm:$0xff]
        %v496 = vld [vmem:[%s426 + $0x28] sm:$0xff]
        %v497 = vld [vmem:[%s426 + $0x30] sm:$0xff]
        %v498 = vld [vmem:[%s426 + $0x38] sm:$0xff]
        %v499 = vld [vmem:[%s426 + $0x40] sm:$0xff]
        %v500 = vld [vmem:[%s426 + $0x48] sm:$0xff]
        %v501 = vld [vmem:[%s426 + $0x50] sm:$0xff]
        %v502 = vld [vmem:[%s426 + $0x58] sm:$0xff]
        %v503 = vld [vmem:[%s426 + $0x60] sm:$0xff]
        %v504 = vld [vmem:[%s426 + $0x68] sm:$0xff]
        %v505 = vld [vmem:[%s426 + $0x70] sm:$0xff]
        %v506 = vld [vmem:[%s426 + $0x78] sm:$0xff]
        %v507 = vld [vmem:[#allocation6] sm:$0xff]
        %v508 = vld [vmem:[#allocation6 + $0x8] sm:$0xff]
        %v509 = vld [vmem:[#allocation6 + $0x10] sm:$0xff]
        %v510 = vld [vmem:[#allocation6 + $0x18] sm:$0xff]
        %v511 = vld [vmem:[#allocation6 + $0x20] sm:$0xff]
        %v512 = vld [vmem:[#allocation6 + $0x28] sm:$0xff]
        %v513 = vld [vmem:[#allocation6 + $0x30] sm:$0xff]
        %v514 = vld [vmem:[#allocation6 + $0x38] sm:$0xff]
        %v515 = vld [vmem:[#allocation6 + $0x40] sm:$0xff]
        %v516 = vld [vmem:[#allocation6 + $0x48] sm:$0xff]
        %v517 = vld [vmem:[#allocation6 + $0x50] sm:$0xff]
        %v518 = vld [vmem:[#allocation6 + $0x58] sm:$0xff]
        %v519 = vld [vmem:[#allocation6 + $0x60] sm:$0xff]
        %v520 = vld [vmem:[#allocation6 + $0x68] sm:$0xff]
        %v521 = vld [vmem:[#allocation6 + $0x70] sm:$0xff]
        %v522 = vld [vmem:[#allocation6 + $0x78] sm:$0xff]
        %v523 = vld [vmem:[#allocation6 + $0x80] sm:$0xff]
        %v524 = vld [vmem:[#allocation6 + $0x88] sm:$0xff]
        %v525 = vld [vmem:[#allocation6 + $0x90] sm:$0xff]
        %v526 = vld [vmem:[#allocation6 + $0x98] sm:$0xff]
        %v527 = vld [vmem:[#allocation6 + $0xa0] sm:$0xff]
        %v528 = vld [vmem:[#allocation6 + $0xa8] sm:$0xff]
        %v529 = vld [vmem:[#allocation6 + $0xb0] sm:$0xff]
        %v530 = vld [vmem:[#allocation6 + $0xb8] sm:$0xff]
        %v531 = vld [vmem:[#allocation6 + $0xc0] sm:$0xff]
        %v532 = vld [vmem:[#allocation6 + $0xc8] sm:$0xff]
        %v533 = vld [vmem:[#allocation6 + $0xd0] sm:$0xff]
        %v534 = vld [vmem:[#allocation6 + $0xd8] sm:$0xff]
        %v535 = vld [vmem:[#allocation6 + $0xe0] sm:$0xff]
        %v536 = vld [vmem:[#allocation6 + $0xe8] sm:$0xff]
        %v537 = vld [vmem:[#allocation6 + $0xf0] sm:$0xff]
        %v538 = vld [vmem:[#allocation6 + $0xf8] sm:$0xff]
        %v539 = vld [vmem:[#allocation6 + $0x100] sm:$0xff]
        %v540 = vld [vmem:[#allocation6 + $0x108] sm:$0xff]
        %v541 = vld [vmem:[#allocation6 + $0x110] sm:$0xff]
        %v542 = vld [vmem:[#allocation6 + $0x118] sm:$0xff]
        %v543 = vld [vmem:[#allocation6 + $0x120] sm:$0xff]
        %v544 = vld [vmem:[#allocation6 + $0x128] sm:$0xff]
        %v545 = vld [vmem:[#allocation6 + $0x130] sm:$0xff]
        %v546 = vld [vmem:[#allocation6 + $0x138] sm:$0xff]
        %v547 = vld [vmem:[#allocation6 + $0x140] sm:$0xff]
        %v548 = vld [vmem:[#allocation6 + $0x148] sm:$0xff]
        %v549 = vld [vmem:[#allocation6 + $0x150] sm:$0xff]
        %v550 = vld [vmem:[#allocation6 + $0x158] sm:$0xff]
        %v551 = vld [vmem:[#allocation6 + $0x160] sm:$0xff]
        %v552 = vld [vmem:[#allocation6 + $0x168] sm:$0xff]
        %v553 = vld [vmem:[#allocation6 + $0x170] sm:$0xff]
        %v554 = vld [vmem:[#allocation6 + $0x178] sm:$0xff]
        %v555 = vld [vmem:[#allocation6 + $0x180] sm:$0xff]
        %v556 = vld [vmem:[#allocation6 + $0x188] sm:$0xff]
        %v557 = vld [vmem:[#allocation6 + $0x190] sm:$0xff]
        %v558 = vld [vmem:[#allocation6 + $0x198] sm:$0xff]
        %v559 = vld [vmem:[#allocation6 + $0x1a0] sm:$0xff]
        %v560 = vld [vmem:[#allocation6 + $0x1a8] sm:$0xff]
        %v561 = vld [vmem:[#allocation6 + $0x1b0] sm:$0xff]
        %v562 = vld [vmem:[#allocation6 + $0x1b8] sm:$0xff]
        %v563 = vld [vmem:[#allocation6 + $0x1c0] sm:$0xff]
        %v564 = vld [vmem:[#allocation6 + $0x1c8] sm:$0xff]
        %v565 = vld [vmem:[#allocation6 + $0x1d0] sm:$0xff]
        %v566 = vld [vmem:[#allocation6 + $0x1d8] sm:$0xff]
        %v567 = vld [vmem:[#allocation6 + $0x1e0] sm:$0xff]
        %v568 = vld [vmem:[#allocation6 + $0x1e8] sm:$0xff]
        %v569 = vld [vmem:[#allocation6 + $0x1f0] sm:$0xff]
        %v570 = vld [vmem:[#allocation6 + $0x1f8] sm:$0xff]
        %v571 = vld [vmem:[#allocation6 + $0x200] sm:$0xff]
        %v572 = vld [vmem:[#allocation6 + $0x208] sm:$0xff]
        %v573 = vld [vmem:[#allocation6 + $0x210] sm:$0xff]
        %v574 = vld [vmem:[#allocation6 + $0x218] sm:$0xff]
        %v575 = vld [vmem:[#allocation6 + $0x220] sm:$0xff]
        %v576 = vld [vmem:[#allocation6 + $0x228] sm:$0xff]
        %v577 = vld [vmem:[#allocation6 + $0x230] sm:$0xff]
        %v578 = vld [vmem:[#allocation6 + $0x238] sm:$0xff]
        %v579 = vld [vmem:[#allocation6 + $0x240] sm:$0xff]
        %v580 = vld [vmem:[#allocation6 + $0x248] sm:$0xff]
        %v581 = vld [vmem:[#allocation6 + $0x250] sm:$0xff]
        %v582 = vld [vmem:[#allocation6 + $0x258] sm:$0xff]
        %v583 = vld [vmem:[#allocation6 + $0x260] sm:$0xff]
        %v584 = vld [vmem:[#allocation6 + $0x268] sm:$0xff]
        %v585 = vld [vmem:[#allocation6 + $0x270] sm:$0xff]
        %v586 = vld [vmem:[#allocation6 + $0x278] sm:$0xff]
        %v587 = vld [vmem:[#allocation6 + $0x280] sm:$0xff]
        %v588 = vld [vmem:[#allocation6 + $0x288] sm:$0xff]
        %v589 = vld [vmem:[#allocation6 + $0x290] sm:$0xff]
        %v590 = vld [vmem:[#allocation6 + $0x298] sm:$0xff]
        %v591 = vld [vmem:[#allocation6 + $0x2a0] sm:$0xff]
        %v592 = vld [vmem:[#allocation6 + $0x2a8] sm:$0xff]
        %v593 = vld [vmem:[#allocation6 + $0x2b0] sm:$0xff]
        %v594 = vld [vmem:[#allocation6 + $0x2b8] sm:$0xff]
        %v595 = vld [vmem:[#allocation6 + $0x2c0] sm:$0xff]
        %v596 = vld [vmem:[#allocation6 + $0x2c8] sm:$0xff]
        %v597 = vld [vmem:[#allocation6 + $0x2d0] sm:$0xff]
        %v598 = vld [vmem:[#allocation6 + $0x2d8] sm:$0xff]
        %v599 = vld [vmem:[#allocation6 + $0x2e0] sm:$0xff]
        %v600 = vld [vmem:[#allocation6 + $0x2e8] sm:$0xff]
        %v601 = vld [vmem:[#allocation6 + $0x2f0] sm:$0xff]
        %v602 = vld [vmem:[#allocation6 + $0x2f8] sm:$0xff]
        %v603 = vld [vmem:[#allocation6 + $0x300] sm:$0xff]
        %v604 = vld [vmem:[#allocation6 + $0x308] sm:$0xff]
        %v605 = vld [vmem:[#allocation6 + $0x310] sm:$0xff]
        %v606 = vld [vmem:[#allocation6 + $0x318] sm:$0xff]
        %v607 = vld [vmem:[#allocation6 + $0x320] sm:$0xff]
        %v608 = vld [vmem:[#allocation6 + $0x328] sm:$0xff]
        %v609 = vld [vmem:[#allocation6 + $0x330] sm:$0xff]
        %v610 = vld [vmem:[#allocation6 + $0x338] sm:$0xff]
        %v611 = vld [vmem:[#allocation6 + $0x340] sm:$0xff]
        %v612 = vld [vmem:[#allocation6 + $0x348] sm:$0xff]
        %v613 = vld [vmem:[#allocation6 + $0x350] sm:$0xff]
        %v614 = vld [vmem:[#allocation6 + $0x358] sm:$0xff]
        %v615 = vld [vmem:[#allocation6 + $0x360] sm:$0xff]
        %v616 = vld [vmem:[#allocation6 + $0x368] sm:$0xff]
        %v617 = vld [vmem:[#allocation6 + $0x370] sm:$0xff]
        %v618 = vld [vmem:[#allocation6 + $0x378] sm:$0xff]
        %v619 = vld [vmem:[#allocation6 + $0x380] sm:$0xff]
        %v620 = vld [vmem:[#allocation6 + $0x388] sm:$0xff]
        %v621 = vld [vmem:[#allocation6 + $0x390] sm:$0xff]
        %v622 = vld [vmem:[#allocation6 + $0x398] sm:$0xff]
        %v623 = vld [vmem:[#allocation6 + $0x3a0] sm:$0xff]
        %v624 = vld [vmem:[#allocation6 + $0x3a8] sm:$0xff]
        %v625 = vld [vmem:[#allocation6 + $0x3b0] sm:$0xff]
        %v626 = vld [vmem:[#allocation6 + $0x3b8] sm:$0xff]
        %v627 = vld [vmem:[#allocation6 + $0x3c0] sm:$0xff]
        %v628 = vld [vmem:[#allocation6 + $0x3c8] sm:$0xff]
        %v629 = vld [vmem:[#allocation6 + $0x3d0] sm:$0xff]
        %v630 = vld [vmem:[#allocation6 + $0x3d8] sm:$0xff]
        %v631 = vld [vmem:[#allocation6 + $0x3e0] sm:$0xff]
        %v632 = vld [vmem:[#allocation6 + $0x3e8] sm:$0xff]
        %v633 = vld [vmem:[#allocation6 + $0x3f0] sm:$0xff]
        %v634 = vld [vmem:[#allocation6 + $0x3f8] sm:$0xff]
        %v635 = vld [vmem:[#allocation8] sm:$0xff]
        %v637 = vperm.slane %v635, 0
        %v638 = vperm.slane %v635, 1
        %v639 = vperm.slane %v635, 2
        %v640 = vperm.slane %v635, 3
        %v641 = vperm.slane %v635, 4
        %v642 = vperm.slane %v635, 5
        %v643 = vperm.slane %v635, 6
        %v644 = vperm.slane %v635, 7
        %v669 = vunpack.c.l.b16 %v491
        %v670 = vunpack.c.h.b16 %v491
        %v671 = vunpack.c.l.b16 %v492
        %v672 = vunpack.c.h.b16 %v492
        %v673 = vunpack.c.l.b16 %v493
        %v674 = vunpack.c.h.b16 %v493
        %v675 = vunpack.c.l.b16 %v494
        %v676 = vunpack.c.h.b16 %v494
        %v677 = vunpack.c.l.b16 %v495
        %v678 = vunpack.c.h.b16 %v495
        %v679 = vunpack.c.l.b16 %v496
        %v680 = vunpack.c.h.b16 %v496
        %v681 = vunpack.c.l.b16 %v497
        %v682 = vunpack.c.h.b16 %v497
        %v683 = vunpack.c.l.b16 %v498
        %v684 = vunpack.c.h.b16 %v498
        %v685 = vunpack.c.l.b16 %v499
        %v686 = vunpack.c.h.b16 %v499
        %v687 = vunpack.c.l.b16 %v500
        %v688 = vunpack.c.h.b16 %v500
        %v689 = vunpack.c.l.b16 %v501
        %v690 = vunpack.c.h.b16 %v501
        %v691 = vunpack.c.l.b16 %v502
        %v692 = vunpack.c.h.b16 %v502
        %v693 = vunpack.c.l.b16 %v503
        %v694 = vunpack.c.h.b16 %v503
        %v695 = vunpack.c.l.b16 %v504
        %v696 = vunpack.c.h.b16 %v504
        %v697 = vunpack.c.l.b16 %v505
        %v698 = vunpack.c.h.b16 %v505
        %v699 = vunpack.c.l.b16 %v506
        %v700 = vunpack.c.h.b16 %v506
        %v701 = vpack.c.b16 %v671, %v669
        %v702 = vpack.c.b16 %v672, %v670
        %v703 = vpack.c.b16 %v675, %v673
        %v704 = vpack.c.b16 %v676, %v674
        %v705 = vpack.c.b16 %v679, %v677
        %v706 = vpack.c.b16 %v680, %v678
        %v707 = vpack.c.b16 %v683, %v681
        %v708 = vpack.c.b16 %v684, %v682
        %v709 = vpack.c.b16 %v687, %v685
        %v710 = vpack.c.b16 %v688, %v686
        %v711 = vpack.c.b16 %v691, %v689
        %v712 = vpack.c.b16 %v692, %v690
        %v713 = vpack.c.b16 %v695, %v693
        %v714 = vpack.c.b16 %v696, %v694
        %v715 = vpack.c.b16 %v699, %v697
        %v716 = vpack.c.b16 %v700, %v698
        %v861 = vunpack.c.l.b16 %v507
        %v862 = vunpack.c.h.b16 %v507
        %v863 = vunpack.c.l.b16 %v508
        %v864 = vunpack.c.h.b16 %v508
        %v865 = vunpack.c.l.b16 %v509
        %v866 = vunpack.c.h.b16 %v509
        %v867 = vunpack.c.l.b16 %v510
        %v868 = vunpack.c.h.b16 %v510
        %v869 = vunpack.c.l.b16 %v511
        %v870 = vunpack.c.h.b16 %v511
        %v871 = vunpack.c.l.b16 %v512
        %v872 = vunpack.c.h.b16 %v512
        %v873 = vunpack.c.l.b16 %v513
        %v874 = vunpack.c.h.b16 %v513
        %v875 = vunpack.c.l.b16 %v514
        %v876 = vunpack.c.h.b16 %v514
        %v877 = vunpack.c.l.b16 %v515
        %v878 = vunpack.c.h.b16 %v515
        %v879 = vunpack.c.l.b16 %v516
        %v880 = vunpack.c.h.b16 %v516
        %v881 = vunpack.c.l.b16 %v517
        %v882 = vunpack.c.h.b16 %v517
        %v883 = vunpack.c.l.b16 %v518
        %v884 = vunpack.c.h.b16 %v518
        %v885 = vunpack.c.l.b16 %v519
        %v886 = vunpack.c.h.b16 %v519
        %v887 = vunpack.c.l.b16 %v520
        %v888 = vunpack.c.h.b16 %v520
        %v889 = vunpack.c.l.b16 %v521
        %v890 = vunpack.c.h.b16 %v521
        %v891 = vunpack.c.l.b16 %v522
        %v892 = vunpack.c.h.b16 %v522
        %v893 = vunpack.c.l.b16 %v523
        %v894 = vunpack.c.h.b16 %v523
        %v895 = vunpack.c.l.b16 %v524
        %v896 = vunpack.c.h.b16 %v524
        %v897 = vunpack.c.l.b16 %v525
        %v898 = vunpack.c.h.b16 %v525
        %v899 = vunpack.c.l.b16 %v526
        %v900 = vunpack.c.h.b16 %v526
        %v901 = vunpack.c.l.b16 %v527
        %v902 = vunpack.c.h.b16 %v527
        %v903 = vunpack.c.l.b16 %v528
        %v904 = vunpack.c.h.b16 %v528
        %v905 = vunpack.c.l.b16 %v529
        %v906 = vunpack.c.h.b16 %v529
        %v907 = vunpack.c.l.b16 %v530
        %v908 = vunpack.c.h.b16 %v530
        %v909 = vunpack.c.l.b16 %v531
        %v910 = vunpack.c.h.b16 %v531
        %v911 = vunpack.c.l.b16 %v532
        %v912 = vunpack.c.h.b16 %v532
        %v913 = vunpack.c.l.b16 %v533
        %v914 = vunpack.c.h.b16 %v533
        %v915 = vunpack.c.l.b16 %v534
        %v916 = vunpack.c.h.b16 %v534
        %v917 = vunpack.c.l.b16 %v535
        %v918 = vunpack.c.h.b16 %v535
        %v919 = vunpack.c.l.b16 %v536
        %v920 = vunpack.c.h.b16 %v536
        %v921 = vunpack.c.l.b16 %v537
        %v922 = vunpack.c.h.b16 %v537
        %v923 = vunpack.c.l.b16 %v538
        %v924 = vunpack.c.h.b16 %v538
        %v925 = vunpack.c.l.b16 %v539
        %v926 = vunpack.c.h.b16 %v539
        %v927 = vunpack.c.l.b16 %v540
        %v928 = vunpack.c.h.b16 %v540
        %v929 = vunpack.c.l.b16 %v541
        %v930 = vunpack.c.h.b16 %v541
        %v931 = vunpack.c.l.b16 %v542
        %v932 = vunpack.c.h.b16 %v542
        %v933 = vunpack.c.l.b16 %v543
        %v934 = vunpack.c.h.b16 %v543
        %v935 = vunpack.c.l.b16 %v544
        %v936 = vunpack.c.h.b16 %v544
        %v937 = vunpack.c.l.b16 %v545
        %v938 = vunpack.c.h.b16 %v545
        %v939 = vunpack.c.l.b16 %v546
        %v940 = vunpack.c.h.b16 %v546
        %v941 = vunpack.c.l.b16 %v547
        %v942 = vunpack.c.h.b16 %v547
        %v943 = vunpack.c.l.b16 %v548
        %v944 = vunpack.c.h.b16 %v548
        %v945 = vunpack.c.l.b16 %v549
        %v946 = vunpack.c.h.b16 %v549
        %v947 = vunpack.c.l.b16 %v550
        %v948 = vunpack.c.h.b16 %v550
        %v949 = vunpack.c.l.b16 %v551
        %v950 = vunpack.c.h.b16 %v551
        %v951 = vunpack.c.l.b16 %v552
        %v952 = vunpack.c.h.b16 %v552
        %v953 = vunpack.c.l.b16 %v553
        %v954 = vunpack.c.h.b16 %v553
        %v955 = vunpack.c.l.b16 %v554
        %v956 = vunpack.c.h.b16 %v554
        %v957 = vunpack.c.l.b16 %v555
        %v958 = vunpack.c.h.b16 %v555
        %v959 = vunpack.c.l.b16 %v556
        %v960 = vunpack.c.h.b16 %v556
        %v961 = vunpack.c.l.b16 %v557
        %v962 = vunpack.c.h.b16 %v557
        %v963 = vunpack.c.l.b16 %v558
        %v964 = vunpack.c.h.b16 %v558
        %v965 = vunpack.c.l.b16 %v559
        %v966 = vunpack.c.h.b16 %v559
        %v967 = vunpack.c.l.b16 %v560
        %v968 = vunpack.c.h.b16 %v560
        %v969 = vunpack.c.l.b16 %v561
        %v970 = vunpack.c.h.b16 %v561
        %v971 = vunpack.c.l.b16 %v562
        %v972 = vunpack.c.h.b16 %v562
        %v973 = vunpack.c.l.b16 %v563
        %v974 = vunpack.c.h.b16 %v563
        %v975 = vunpack.c.l.b16 %v564
        %v976 = vunpack.c.h.b16 %v564
        %v977 = vunpack.c.l.b16 %v565
        %v978 = vunpack.c.h.b16 %v565
        %v979 = vunpack.c.l.b16 %v566
        %v980 = vunpack.c.h.b16 %v566
        %v981 = vunpack.c.l.b16 %v567
        %v982 = vunpack.c.h.b16 %v567
        %v983 = vunpack.c.l.b16 %v568
        %v984 = vunpack.c.h.b16 %v568
        %v985 = vunpack.c.l.b16 %v569
        %v986 = vunpack.c.h.b16 %v569
        %v987 = vunpack.c.l.b16 %v570
        %v988 = vunpack.c.h.b16 %v570
        %v989 = vunpack.c.l.b16 %v571
        %v990 = vunpack.c.h.b16 %v571
        %v991 = vunpack.c.l.b16 %v572
        %v992 = vunpack.c.h.b16 %v572
        %v993 = vunpack.c.l.b16 %v573
        %v994 = vunpack.c.h.b16 %v573
        %v995 = vunpack.c.l.b16 %v574
        %v996 = vunpack.c.h.b16 %v574
        %v997 = vunpack.c.l.b16 %v575
        %v998 = vunpack.c.h.b16 %v575
        %v999 = vunpack.c.l.b16 %v576
        %v1000 = vunpack.c.h.b16 %v576
        %v1001 = vunpack.c.l.b16 %v577
        %v1002 = vunpack.c.h.b16 %v577
        %v1003 = vunpack.c.l.b16 %v578
        %v1004 = vunpack.c.h.b16 %v578
        %v1005 = vunpack.c.l.b16 %v579
        %v1006 = vunpack.c.h.b16 %v579
        %v1007 = vunpack.c.l.b16 %v580
        %v1008 = vunpack.c.h.b16 %v580
        %v1009 = vunpack.c.l.b16 %v581
        %v1010 = vunpack.c.h.b16 %v581
        %v1011 = vunpack.c.l.b16 %v582
        %v1012 = vunpack.c.h.b16 %v582
        %v1013 = vunpack.c.l.b16 %v583
        %v1014 = vunpack.c.h.b16 %v583
        %v1015 = vunpack.c.l.b16 %v584
        %v1016 = vunpack.c.h.b16 %v584
        %v1017 = vunpack.c.l.b16 %v585
        %v1018 = vunpack.c.h.b16 %v585
        %v1019 = vunpack.c.l.b16 %v586
        %v1020 = vunpack.c.h.b16 %v586
        %v1021 = vunpack.c.l.b16 %v587
        %v1022 = vunpack.c.h.b16 %v587
        %v1023 = vunpack.c.l.b16 %v588
        %v1024 = vunpack.c.h.b16 %v588
        %v1025 = vunpack.c.l.b16 %v589
        %v1026 = vunpack.c.h.b16 %v589
        %v1027 = vunpack.c.l.b16 %v590
        %v1028 = vunpack.c.h.b16 %v590
        %v1029 = vunpack.c.l.b16 %v591
        %v1030 = vunpack.c.h.b16 %v591
        %v1031 = vunpack.c.l.b16 %v592
        %v1032 = vunpack.c.h.b16 %v592
        %v1033 = vunpack.c.l.b16 %v593
        %v1034 = vunpack.c.h.b16 %v593
        %v1035 = vunpack.c.l.b16 %v594
        %v1036 = vunpack.c.h.b16 %v594
        %v1037 = vunpack.c.l.b16 %v595
        %v1038 = vunpack.c.h.b16 %v595
        %v1039 = vunpack.c.l.b16 %v596
        %v1040 = vunpack.c.h.b16 %v596
        %v1041 = vunpack.c.l.b16 %v597
        %v1042 = vunpack.c.h.b16 %v597
        %v1043 = vunpack.c.l.b16 %v598
        %v1044 = vunpack.c.h.b16 %v598
        %v1045 = vunpack.c.l.b16 %v599
        %v1046 = vunpack.c.h.b16 %v599
        %v1047 = vunpack.c.l.b16 %v600
        %v1048 = vunpack.c.h.b16 %v600
        %v1049 = vunpack.c.l.b16 %v601
        %v1050 = vunpack.c.h.b16 %v601
        %v1051 = vunpack.c.l.b16 %v602
        %v1052 = vunpack.c.h.b16 %v602
        %v1053 = vunpack.c.l.b16 %v603
        %v1054 = vunpack.c.h.b16 %v603
        %v1055 = vunpack.c.l.b16 %v604
        %v1056 = vunpack.c.h.b16 %v604
        %v1057 = vunpack.c.l.b16 %v605
        %v1058 = vunpack.c.h.b16 %v605
        %v1059 = vunpack.c.l.b16 %v606
        %v1060 = vunpack.c.h.b16 %v606
        %v1061 = vunpack.c.l.b16 %v607
        %v1062 = vunpack.c.h.b16 %v607
        %v1063 = vunpack.c.l.b16 %v608
        %v1064 = vunpack.c.h.b16 %v608
        %v1065 = vunpack.c.l.b16 %v609
        %v1066 = vunpack.c.h.b16 %v609
        %v1067 = vunpack.c.l.b16 %v610
        %v1068 = vunpack.c.h.b16 %v610
        %v1069 = vunpack.c.l.b16 %v611
        %v1070 = vunpack.c.h.b16 %v611
        %v1071 = vunpack.c.l.b16 %v612
        %v1072 = vunpack.c.h.b16 %v612
        %v1073 = vunpack.c.l.b16 %v613
        %v1074 = vunpack.c.h.b16 %v613
        %v1075 = vunpack.c.l.b16 %v614
        %v1076 = vunpack.c.h.b16 %v614
        %v1077 = vunpack.c.l.b16 %v615
        %v1078 = vunpack.c.h.b16 %v615
        %v1079 = vunpack.c.l.b16 %v616
        %v1080 = vunpack.c.h.b16 %v616
        %v1081 = vunpack.c.l.b16 %v617
        %v1082 = vunpack.c.h.b16 %v617
        %v1083 = vunpack.c.l.b16 %v618
        %v1084 = vunpack.c.h.b16 %v618
        %v1085 = vunpack.c.l.b16 %v619
        %v1086 = vunpack.c.h.b16 %v619
        %v1087 = vunpack.c.l.b16 %v620
        %v1088 = vunpack.c.h.b16 %v620
        %v1089 = vunpack.c.l.b16 %v621
        %v1090 = vunpack.c.h.b16 %v621
        %v1091 = vunpack.c.l.b16 %v622
        %v1092 = vunpack.c.h.b16 %v622
        %v1093 = vunpack.c.l.b16 %v623
        %v1094 = vunpack.c.h.b16 %v623
        %v1095 = vunpack.c.l.b16 %v624
        %v1096 = vunpack.c.h.b16 %v624
        %v1097 = vunpack.c.l.b16 %v625
        %v1098 = vunpack.c.h.b16 %v625
        %v1099 = vunpack.c.l.b16 %v626
        %v1100 = vunpack.c.h.b16 %v626
        %v1101 = vunpack.c.l.b16 %v627
        %v1102 = vunpack.c.h.b16 %v627
        %v1103 = vunpack.c.l.b16 %v628
        %v1104 = vunpack.c.h.b16 %v628
        %v1105 = vunpack.c.l.b16 %v629
        %v1106 = vunpack.c.h.b16 %v629
        %v1107 = vunpack.c.l.b16 %v630
        %v1108 = vunpack.c.h.b16 %v630
        %v1109 = vunpack.c.l.b16 %v631
        %v1110 = vunpack.c.h.b16 %v631
        %v1111 = vunpack.c.l.b16 %v632
        %v1112 = vunpack.c.h.b16 %v632
        %v1113 = vunpack.c.l.b16 %v633
        %v1114 = vunpack.c.h.b16 %v633
        %v1115 = vunpack.c.l.b16 %v634
        %v1116 = vunpack.c.h.b16 %v634
        %v1117 = vpack.c.b16 %v869, %v861
        %v1118 = vpack.c.b16 %v870, %v862
        %v1119 = vpack.c.b16 %v871, %v863
        %v1120 = vpack.c.b16 %v872, %v864
        %v1121 = vpack.c.b16 %v873, %v865
        %v1122 = vpack.c.b16 %v874, %v866
        %v1123 = vpack.c.b16 %v875, %v867
        %v1124 = vpack.c.b16 %v876, %v868
        %v1125 = vpack.c.b16 %v885, %v877
        %v1126 = vpack.c.b16 %v886, %v878
        %v1127 = vpack.c.b16 %v887, %v879
        %v1128 = vpack.c.b16 %v888, %v880
        %v1129 = vpack.c.b16 %v889, %v881
        %v1130 = vpack.c.b16 %v890, %v882
        %v1131 = vpack.c.b16 %v891, %v883
        %v1132 = vpack.c.b16 %v892, %v884
        %v1133 = vpack.c.b16 %v901, %v893
        %v1134 = vpack.c.b16 %v902, %v894
        %v1135 = vpack.c.b16 %v903, %v895
        %v1136 = vpack.c.b16 %v904, %v896
        %v1137 = vpack.c.b16 %v905, %v897
        %v1138 = vpack.c.b16 %v906, %v898
        %v1139 = vpack.c.b16 %v907, %v899
        %v1140 = vpack.c.b16 %v908, %v900
        %v1141 = vpack.c.b16 %v917, %v909
        %v1142 = vpack.c.b16 %v918, %v910
        %v1143 = vpack.c.b16 %v919, %v911
        %v1144 = vpack.c.b16 %v920, %v912
        %v1145 = vpack.c.b16 %v921, %v913
        %v1146 = vpack.c.b16 %v922, %v914
        %v1147 = vpack.c.b16 %v923, %v915
        %v1148 = vpack.c.b16 %v924, %v916
        %v1149 = vpack.c.b16 %v933, %v925
        %v1150 = vpack.c.b16 %v934, %v926
        %v1151 = vpack.c.b16 %v935, %v927
        %v1152 = vpack.c.b16 %v936, %v928
        %v1153 = vpack.c.b16 %v937, %v929
        %v1154 = vpack.c.b16 %v938, %v930
        %v1155 = vpack.c.b16 %v939, %v931
        %v1156 = vpack.c.b16 %v940, %v932
        %v1157 = vpack.c.b16 %v949, %v941
        %v1158 = vpack.c.b16 %v950, %v942
        %v1159 = vpack.c.b16 %v951, %v943
        %v1160 = vpack.c.b16 %v952, %v944
        %v1161 = vpack.c.b16 %v953, %v945
        %v1162 = vpack.c.b16 %v954, %v946
        %v1163 = vpack.c.b16 %v955, %v947
        %v1164 = vpack.c.b16 %v956, %v948
        %v1165 = vpack.c.b16 %v965, %v957
        %v1166 = vpack.c.b16 %v966, %v958
        %v1167 = vpack.c.b16 %v967, %v959
        %v1168 = vpack.c.b16 %v968, %v960
        %v1169 = vpack.c.b16 %v969, %v961
        %v1170 = vpack.c.b16 %v970, %v962
        %v1171 = vpack.c.b16 %v971, %v963
        %v1172 = vpack.c.b16 %v972, %v964
        %v1173 = vpack.c.b16 %v981, %v973
        %v1174 = vpack.c.b16 %v982, %v974
        %v1175 = vpack.c.b16 %v983, %v975
        %v1176 = vpack.c.b16 %v984, %v976
        %v1177 = vpack.c.b16 %v985, %v977
        %v1178 = vpack.c.b16 %v986, %v978
        %v1179 = vpack.c.b16 %v987, %v979
        %v1180 = vpack.c.b16 %v988, %v980
        %v1181 = vpack.c.b16 %v997, %v989
        %v1182 = vpack.c.b16 %v998, %v990
        %v1183 = vpack.c.b16 %v999, %v991
        %v1184 = vpack.c.b16 %v1000, %v992
        %v1185 = vpack.c.b16 %v1001, %v993
        %v1186 = vpack.c.b16 %v1002, %v994
        %v1187 = vpack.c.b16 %v1003, %v995
        %v1188 = vpack.c.b16 %v1004, %v996
        %v1189 = vpack.c.b16 %v1013, %v1005
        %v1190 = vpack.c.b16 %v1014, %v1006
        %v1191 = vpack.c.b16 %v1015, %v1007
        %v1192 = vpack.c.b16 %v1016, %v1008
        %v1193 = vpack.c.b16 %v1017, %v1009
        %v1194 = vpack.c.b16 %v1018, %v1010
        %v1195 = vpack.c.b16 %v1019, %v1011
        %v1196 = vpack.c.b16 %v1020, %v1012
        %v1197 = vpack.c.b16 %v1029, %v1021
        %v1198 = vpack.c.b16 %v1030, %v1022
        %v1199 = vpack.c.b16 %v1031, %v1023
        %v1200 = vpack.c.b16 %v1032, %v1024
        %v1201 = vpack.c.b16 %v1033, %v1025
        %v1202 = vpack.c.b16 %v1034, %v1026
        %v1203 = vpack.c.b16 %v1035, %v1027
        %v1204 = vpack.c.b16 %v1036, %v1028
        %v1205 = vpack.c.b16 %v1045, %v1037
        %v1206 = vpack.c.b16 %v1046, %v1038
        %v1207 = vpack.c.b16 %v1047, %v1039
        %v1208 = vpack.c.b16 %v1048, %v1040
        %v1209 = vpack.c.b16 %v1049, %v1041
        %v1210 = vpack.c.b16 %v1050, %v1042
        %v1211 = vpack.c.b16 %v1051, %v1043
        %v1212 = vpack.c.b16 %v1052, %v1044
        %v1213 = vpack.c.b16 %v1061, %v1053
        %v1214 = vpack.c.b16 %v1062, %v1054
        %v1215 = vpack.c.b16 %v1063, %v1055
        %v1216 = vpack.c.b16 %v1064, %v1056
        %v1217 = vpack.c.b16 %v1065, %v1057
        %v1218 = vpack.c.b16 %v1066, %v1058
        %v1219 = vpack.c.b16 %v1067, %v1059
        %v1220 = vpack.c.b16 %v1068, %v1060
        %v1221 = vpack.c.b16 %v1077, %v1069
        %v1222 = vpack.c.b16 %v1078, %v1070
        %v1223 = vpack.c.b16 %v1079, %v1071
        %v1224 = vpack.c.b16 %v1080, %v1072
        %v1225 = vpack.c.b16 %v1081, %v1073
        %v1226 = vpack.c.b16 %v1082, %v1074
        %v1227 = vpack.c.b16 %v1083, %v1075
        %v1228 = vpack.c.b16 %v1084, %v1076
        %v1229 = vpack.c.b16 %v1093, %v1085
        %v1230 = vpack.c.b16 %v1094, %v1086
        %v1231 = vpack.c.b16 %v1095, %v1087
        %v1232 = vpack.c.b16 %v1096, %v1088
        %v1233 = vpack.c.b16 %v1097, %v1089
        %v1234 = vpack.c.b16 %v1098, %v1090
        %v1235 = vpack.c.b16 %v1099, %v1091
        %v1236 = vpack.c.b16 %v1100, %v1092
        %v1237 = vpack.c.b16 %v1109, %v1101
        %v1238 = vpack.c.b16 %v1110, %v1102
        %v1239 = vpack.c.b16 %v1111, %v1103
        %v1240 = vpack.c.b16 %v1112, %v1104
        %v1241 = vpack.c.b16 %v1113, %v1105
        %v1242 = vpack.c.b16 %v1114, %v1106
        %v1243 = vpack.c.b16 %v1115, %v1107
        %v1244 = vpack.c.b16 %v1116, %v1108
        %1373 = vmatpush.bf16.msra.mxu0 %v1173
        %1374 = vmatpush.bf16.msra.mxu0 %v1165
        %1375 = vmatpush.bf16.msra.mxu0 %v1157
        %1376 = vmatpush.bf16.msra.mxu0 %v1149
        %1377 = vmatpush.bf16.msra.mxu0 %v1141
        %1378 = vmatpush.bf16.msra.mxu0 %v1133
        %1379 = vmatpush.bf16.msra.mxu0 %v1125
        %1380 = vmatpush.bf16.msra.mxu0 %v1117
        %1381 = vmatmul.bf16.gmra.mxu0 %v701
        %v1382 = vpop.f32.mrf.mxu0
        %v1383 = vadd.f32 %v637, %v1382
        %v1384 = vpop.f32.mrf.mxu0
        %v1385 = vadd.f32 %v637, %v1384
        %1386 = vmatmul.bf16.gmra.mxu0 %v703
        %v1387 = vpop.f32.mrf.mxu0
        %v1388 = vadd.f32 %v637, %v1387
        %v1389 = vpop.f32.mrf.mxu0
        %v1390 = vadd.f32 %v637, %v1389
        %1391 = vmatmul.bf16.gmra.mxu0 %v705
        %v1392 = vpop.f32.mrf.mxu0
        %v1393 = vadd.f32 %v637, %v1392
        %v1394 = vpop.f32.mrf.mxu0
        %v1395 = vadd.f32 %v637, %v1394
        %1396 = vmatmul.bf16.gmra.mxu0 %v707
        %v1397 = vpop.f32.mrf.mxu0
        %v1398 = vadd.f32 %v637, %v1397
        %v1399 = vpop.f32.mrf.mxu0
        %v1400 = vadd.f32 %v637, %v1399
        %1401 = vmatmul.bf16.gmra.mxu0 %v709
        %v1402 = vpop.f32.mrf.mxu0
        %v1403 = vadd.f32 %v637, %v1402
        %v1404 = vpop.f32.mrf.mxu0
        %v1405 = vadd.f32 %v637, %v1404
        %1406 = vmatmul.bf16.gmra.mxu0 %v711
        %v1407 = vpop.f32.mrf.mxu0
        %v1408 = vadd.f32 %v637, %v1407
        %v1409 = vpop.f32.mrf.mxu0
        %v1410 = vadd.f32 %v637, %v1409
        %1411 = vmatmul.bf16.gmra.mxu0 %v713
        %v1412 = vpop.f32.mrf.mxu0
        %v1413 = vadd.f32 %v637, %v1412
        %v1414 = vpop.f32.mrf.mxu0
        %v1415 = vadd.f32 %v637, %v1414
        %1416 = vmatmul.bf16.gmra.mxu0 %v715
        %v1417 = vpop.f32.mrf.mxu0
        %v1418 = vadd.f32 %v637, %v1417
        %v1419 = vpop.f32.mrf.mxu0
        %v1420 = vadd.f32 %v637, %v1419
        %1421 = vdwg.mxu0
        %1422 = vmatpush.bf16.msra.mxu0 %v1237
        %1423 = vmatpush.bf16.msra.mxu0 %v1229
        %1424 = vmatpush.bf16.msra.mxu0 %v1221
        %1425 = vmatpush.bf16.msra.mxu0 %v1213
        %1426 = vmatpush.bf16.msra.mxu0 %v1205
        %1427 = vmatpush.bf16.msra.mxu0 %v1197
        %1428 = vmatpush.bf16.msra.mxu0 %v1189
        %1429 = vmatpush.bf16.msra.mxu0 %v1181
        %1430 = vmatmul.bf16.gmra.mxu0 %v702
        %v1431 = vpop.f32.mrf.mxu0
        %v1432 = vadd.f32 %v1383, %v1431
        %v1433 = vpop.f32.mrf.mxu0
        %v1434 = vadd.f32 %v1385, %v1433
        %1435 = vmatmul.bf16.gmra.mxu0 %v704
        %v1436 = vpop.f32.mrf.mxu0
        %v1437 = vadd.f32 %v1388, %v1436
        %v1438 = vpop.f32.mrf.mxu0
        %v1439 = vadd.f32 %v1390, %v1438
        %1440 = vmatmul.bf16.gmra.mxu0 %v706
        %v1441 = vpop.f32.mrf.mxu0
        %v1442 = vadd.f32 %v1393, %v1441
        %v1443 = vpop.f32.mrf.mxu0
        %v1444 = vadd.f32 %v1395, %v1443
        %1445 = vmatmul.bf16.gmra.mxu0 %v708
        %v1446 = vpop.f32.mrf.mxu0
        %v1447 = vadd.f32 %v1398, %v1446
        %v1448 = vpop.f32.mrf.mxu0
        %v1449 = vadd.f32 %v1400, %v1448
        %1450 = vmatmul.bf16.gmra.mxu0 %v710
        %v1451 = vpop.f32.mrf.mxu0
        %v1452 = vadd.f32 %v1403, %v1451
        %v1453 = vpop.f32.mrf.mxu0
        %v1454 = vadd.f32 %v1405, %v1453
        %1455 = vmatmul.bf16.gmra.mxu0 %v712
        %v1456 = vpop.f32.mrf.mxu0
        %v1457 = vadd.f32 %v1408, %v1456
        %v1458 = vpop.f32.mrf.mxu0
        %v1459 = vadd.f32 %v1410, %v1458
        %1460 = vmatmul.bf16.gmra.mxu0 %v714
        %v1461 = vpop.f32.mrf.mxu0
        %v1462 = vadd.f32 %v1413, %v1461
        %v1463 = vpop.f32.mrf.mxu0
        %v1464 = vadd.f32 %v1415, %v1463
        %1465 = vmatmul.bf16.gmra.mxu0 %v716
        %v1466 = vpop.f32.mrf.mxu0
        %v1467 = vadd.f32 %v1418, %v1466
        %v1468 = vpop.f32.mrf.mxu0
        %v1469 = vadd.f32 %v1420, %v1468
        %1470 = vdwg.mxu0
        %1471 = vmatpush.bf16.msra.mxu0 %v1174
        %1472 = vmatpush.bf16.msra.mxu0 %v1166
        %1473 = vmatpush.bf16.msra.mxu0 %v1158
        %1474 = vmatpush.bf16.msra.mxu0 %v1150
        %1475 = vmatpush.bf16.msra.mxu0 %v1142
        %1476 = vmatpush.bf16.msra.mxu0 %v1134
        %1477 = vmatpush.bf16.msra.mxu0 %v1126
        %1478 = vmatpush.bf16.msra.mxu0 %v1118
        %1479 = vmatmul.bf16.gmra.mxu0 %v701
        %v1480 = vpop.f32.mrf.mxu0
        %v1481 = vadd.f32 %v638, %v1480
        %v1482 = vpop.f32.mrf.mxu0
        %v1483 = vadd.f32 %v638, %v1482
        %1484 = vmatmul.bf16.gmra.mxu0 %v703
        %v1485 = vpop.f32.mrf.mxu0
        %v1486 = vadd.f32 %v638, %v1485
        %v1487 = vpop.f32.mrf.mxu0
        %v1488 = vadd.f32 %v638, %v1487
        %1489 = vmatmul.bf16.gmra.mxu0 %v705
        %v1490 = vpop.f32.mrf.mxu0
        %v1491 = vadd.f32 %v638, %v1490
        %v1492 = vpop.f32.mrf.mxu0
        %v1493 = vadd.f32 %v638, %v1492
        %1494 = vmatmul.bf16.gmra.mxu0 %v707
        %v1495 = vpop.f32.mrf.mxu0
        %v1496 = vadd.f32 %v638, %v1495
        %v1497 = vpop.f32.mrf.mxu0
        %v1498 = vadd.f32 %v638, %v1497
        %1499 = vmatmul.bf16.gmra.mxu0 %v709
        %v1500 = vpop.f32.mrf.mxu0
        %v1501 = vadd.f32 %v638, %v1500
        %v1502 = vpop.f32.mrf.mxu0
        %v1503 = vadd.f32 %v638, %v1502
        %1504 = vmatmul.bf16.gmra.mxu0 %v711
        %v1505 = vpop.f32.mrf.mxu0
        %v1506 = vadd.f32 %v638, %v1505
        %v1507 = vpop.f32.mrf.mxu0
        %v1508 = vadd.f32 %v638, %v1507
        %1509 = vmatmul.bf16.gmra.mxu0 %v713
        %v1510 = vpop.f32.mrf.mxu0
        %v1511 = vadd.f32 %v638, %v1510
        %v1512 = vpop.f32.mrf.mxu0
        %v1513 = vadd.f32 %v638, %v1512
        %1514 = vmatmul.bf16.gmra.mxu0 %v715
        %v1515 = vpop.f32.mrf.mxu0
        %v1516 = vadd.f32 %v638, %v1515
        %v1517 = vpop.f32.mrf.mxu0
        %v1518 = vadd.f32 %v638, %v1517
        %1519 = vdwg.mxu0
        %1520 = vmatpush.bf16.msra.mxu0 %v1238
        %1521 = vmatpush.bf16.msra.mxu0 %v1230
        %1522 = vmatpush.bf16.msra.mxu0 %v1222
        %1523 = vmatpush.bf16.msra.mxu0 %v1214
        %1524 = vmatpush.bf16.msra.mxu0 %v1206
        %1525 = vmatpush.bf16.msra.mxu0 %v1198
        %1526 = vmatpush.bf16.msra.mxu0 %v1190
        %1527 = vmatpush.bf16.msra.mxu0 %v1182
        %1528 = vmatmul.bf16.gmra.mxu0 %v702
        %v1529 = vpop.f32.mrf.mxu0
        %v1530 = vadd.f32 %v1481, %v1529
        %v1531 = vpop.f32.mrf.mxu0
        %v1532 = vadd.f32 %v1483, %v1531
        %1533 = vmatmul.bf16.gmra.mxu0 %v704
        %v1534 = vpop.f32.mrf.mxu0
        %v1535 = vadd.f32 %v1486, %v1534
        %v1536 = vpop.f32.mrf.mxu0
        %v1537 = vadd.f32 %v1488, %v1536
        %1538 = vmatmul.bf16.gmra.mxu0 %v706
        %v1539 = vpop.f32.mrf.mxu0
        %v1540 = vadd.f32 %v1491, %v1539
        %v1541 = vpop.f32.mrf.mxu0
        %v1542 = vadd.f32 %v1493, %v1541
        %1543 = vmatmul.bf16.gmra.mxu0 %v708
        %v1544 = vpop.f32.mrf.mxu0
        %v1545 = vadd.f32 %v1496, %v1544
        %v1546 = vpop.f32.mrf.mxu0
        %v1547 = vadd.f32 %v1498, %v1546
        %1548 = vmatmul.bf16.gmra.mxu0 %v710
        %v1549 = vpop.f32.mrf.mxu0
        %v1550 = vadd.f32 %v1501, %v1549
        %v1551 = vpop.f32.mrf.mxu0
        %v1552 = vadd.f32 %v1503, %v1551
        %1553 = vmatmul.bf16.gmra.mxu0 %v712
        %v1554 = vpop.f32.mrf.mxu0
        %v1555 = vadd.f32 %v1506, %v1554
        %v1556 = vpop.f32.mrf.mxu0
        %v1557 = vadd.f32 %v1508, %v1556
        %1558 = vmatmul.bf16.gmra.mxu0 %v714
        %v1559 = vpop.f32.mrf.mxu0
        %v1560 = vadd.f32 %v1511, %v1559
        %v1561 = vpop.f32.mrf.mxu0
        %v1562 = vadd.f32 %v1513, %v1561
        %1563 = vmatmul.bf16.gmra.mxu0 %v716
        %v1564 = vpop.f32.mrf.mxu0
        %v1565 = vadd.f32 %v1516, %v1564
        %v1566 = vpop.f32.mrf.mxu0
        %v1567 = vadd.f32 %v1518, %v1566
        %1568 = vdwg.mxu0
        %1569 = vmatpush.bf16.msra.mxu0 %v1175
        %1570 = vmatpush.bf16.msra.mxu0 %v1167
        %1571 = vmatpush.bf16.msra.mxu0 %v1159
        %1572 = vmatpush.bf16.msra.mxu0 %v1151
        %1573 = vmatpush.bf16.msra.mxu0 %v1143
        %1574 = vmatpush.bf16.msra.mxu0 %v1135
        %1575 = vmatpush.bf16.msra.mxu0 %v1127
        %1576 = vmatpush.bf16.msra.mxu0 %v1119
        %1577 = vmatmul.bf16.gmra.mxu0 %v701
        %v1578 = vpop.f32.mrf.mxu0
        %v1579 = vadd.f32 %v639, %v1578
        %v1580 = vpop.f32.mrf.mxu0
        %v1581 = vadd.f32 %v639, %v1580
        %1582 = vmatmul.bf16.gmra.mxu0 %v703
        %v1583 = vpop.f32.mrf.mxu0
        %v1584 = vadd.f32 %v639, %v1583
        %v1585 = vpop.f32.mrf.mxu0
        %v1586 = vadd.f32 %v639, %v1585
        %1587 = vmatmul.bf16.gmra.mxu0 %v705
        %v1588 = vpop.f32.mrf.mxu0
        %v1589 = vadd.f32 %v639, %v1588
        %v1590 = vpop.f32.mrf.mxu0
        %v1591 = vadd.f32 %v639, %v1590
        %1592 = vmatmul.bf16.gmra.mxu0 %v707
        %v1593 = vpop.f32.mrf.mxu0
        %v1594 = vadd.f32 %v639, %v1593
        %v1595 = vpop.f32.mrf.mxu0
        %v1596 = vadd.f32 %v639, %v1595
        %1597 = vmatmul.bf16.gmra.mxu0 %v709
        %v1598 = vpop.f32.mrf.mxu0
        %v1599 = vadd.f32 %v639, %v1598
        %v1600 = vpop.f32.mrf.mxu0
        %v1601 = vadd.f32 %v639, %v1600
        %1602 = vmatmul.bf16.gmra.mxu0 %v711
        %v1603 = vpop.f32.mrf.mxu0
        %v1604 = vadd.f32 %v639, %v1603
        %v1605 = vpop.f32.mrf.mxu0
        %v1606 = vadd.f32 %v639, %v1605
        %1607 = vmatmul.bf16.gmra.mxu0 %v713
        %v1608 = vpop.f32.mrf.mxu0
        %v1609 = vadd.f32 %v639, %v1608
        %v1610 = vpop.f32.mrf.mxu0
        %v1611 = vadd.f32 %v639, %v1610
        %1612 = vmatmul.bf16.gmra.mxu0 %v715
        %v1613 = vpop.f32.mrf.mxu0
        %v1614 = vadd.f32 %v639, %v1613
        %v1615 = vpop.f32.mrf.mxu0
        %v1616 = vadd.f32 %v639, %v1615
        %1617 = vdwg.mxu0
        %1618 = vmatpush.bf16.msra.mxu0 %v1239
        %1619 = vmatpush.bf16.msra.mxu0 %v1231
        %1620 = vmatpush.bf16.msra.mxu0 %v1223
        %1621 = vmatpush.bf16.msra.mxu0 %v1215
        %1622 = vmatpush.bf16.msra.mxu0 %v1207
        %1623 = vmatpush.bf16.msra.mxu0 %v1199
        %1624 = vmatpush.bf16.msra.mxu0 %v1191
        %1625 = vmatpush.bf16.msra.mxu0 %v1183
        %1626 = vmatmul.bf16.gmra.mxu0 %v702
        %v1627 = vpop.f32.mrf.mxu0
        %v1628 = vadd.f32 %v1579, %v1627
        %v1629 = vpop.f32.mrf.mxu0
        %v1630 = vadd.f32 %v1581, %v1629
        %1631 = vmatmul.bf16.gmra.mxu0 %v704
        %v1632 = vpop.f32.mrf.mxu0
        %v1633 = vadd.f32 %v1584, %v1632
        %v1634 = vpop.f32.mrf.mxu0
        %v1635 = vadd.f32 %v1586, %v1634
        %1636 = vmatmul.bf16.gmra.mxu0 %v706
        %v1637 = vpop.f32.mrf.mxu0
        %v1638 = vadd.f32 %v1589, %v1637
        %v1639 = vpop.f32.mrf.mxu0
        %v1640 = vadd.f32 %v1591, %v1639
        %1641 = vmatmul.bf16.gmra.mxu0 %v708
        %v1642 = vpop.f32.mrf.mxu0
        %v1643 = vadd.f32 %v1594, %v1642
        %v1644 = vpop.f32.mrf.mxu0
        %v1645 = vadd.f32 %v1596, %v1644
        %1646 = vmatmul.bf16.gmra.mxu0 %v710
        %v1647 = vpop.f32.mrf.mxu0
        %v1648 = vadd.f32 %v1599, %v1647
        %v1649 = vpop.f32.mrf.mxu0
        %v1650 = vadd.f32 %v1601, %v1649
        %1651 = vmatmul.bf16.gmra.mxu0 %v712
        %v1652 = vpop.f32.mrf.mxu0
        %v1653 = vadd.f32 %v1604, %v1652
        %v1654 = vpop.f32.mrf.mxu0
        %v1655 = vadd.f32 %v1606, %v1654
        %1656 = vmatmul.bf16.gmra.mxu0 %v714
        %v1657 = vpop.f32.mrf.mxu0
        %v1658 = vadd.f32 %v1609, %v1657
        %v1659 = vpop.f32.mrf.mxu0
        %v1660 = vadd.f32 %v1611, %v1659
        %1661 = vmatmul.bf16.gmra.mxu0 %v716
        %v1662 = vpop.f32.mrf.mxu0
        %v1663 = vadd.f32 %v1614, %v1662
        %v1664 = vpop.f32.mrf.mxu0
        %v1665 = vadd.f32 %v1616, %v1664
        %1666 = vdwg.mxu0
        %1667 = vmatpush.bf16.msra.mxu0 %v1176
        %1668 = vmatpush.bf16.msra.mxu0 %v1168
        %1669 = vmatpush.bf16.msra.mxu0 %v1160
        %1670 = vmatpush.bf16.msra.mxu0 %v1152
        %1671 = vmatpush.bf16.msra.mxu0 %v1144
        %1672 = vmatpush.bf16.msra.mxu0 %v1136
        %1673 = vmatpush.bf16.msra.mxu0 %v1128
        %1674 = vmatpush.bf16.msra.mxu0 %v1120
        %1675 = vmatmul.bf16.gmra.mxu0 %v701
        %v1676 = vpop.f32.mrf.mxu0
        %v1677 = vadd.f32 %v640, %v1676
        %v1678 = vpop.f32.mrf.mxu0
        %v1679 = vadd.f32 %v640, %v1678
        %1680 = vmatmul.bf16.gmra.mxu0 %v703
        %v1681 = vpop.f32.mrf.mxu0
        %v1682 = vadd.f32 %v640, %v1681
        %v1683 = vpop.f32.mrf.mxu0
        %v1684 = vadd.f32 %v640, %v1683
        %1685 = vmatmul.bf16.gmra.mxu0 %v705
        %v1686 = vpop.f32.mrf.mxu0
        %v1687 = vadd.f32 %v640, %v1686
        %v1688 = vpop.f32.mrf.mxu0
        %v1689 = vadd.f32 %v640, %v1688
        %1690 = vmatmul.bf16.gmra.mxu0 %v707
        %v1691 = vpop.f32.mrf.mxu0
        %v1692 = vadd.f32 %v640, %v1691
        %v1693 = vpop.f32.mrf.mxu0
        %v1694 = vadd.f32 %v640, %v1693
        %1695 = vmatmul.bf16.gmra.mxu0 %v709
        %v1696 = vpop.f32.mrf.mxu0
        %v1697 = vadd.f32 %v640, %v1696
        %v1698 = vpop.f32.mrf.mxu0
        %v1699 = vadd.f32 %v640, %v1698
        %1700 = vmatmul.bf16.gmra.mxu0 %v711
        %v1701 = vpop.f32.mrf.mxu0
        %v1702 = vadd.f32 %v640, %v1701
        %v1703 = vpop.f32.mrf.mxu0
        %v1704 = vadd.f32 %v640, %v1703
        %1705 = vmatmul.bf16.gmra.mxu0 %v713
        %v1706 = vpop.f32.mrf.mxu0
        %v1707 = vadd.f32 %v640, %v1706
        %v1708 = vpop.f32.mrf.mxu0
        %v1709 = vadd.f32 %v640, %v1708
        %1710 = vmatmul.bf16.gmra.mxu0 %v715
        %v1711 = vpop.f32.mrf.mxu0
        %v1712 = vadd.f32 %v640, %v1711
        %v1713 = vpop.f32.mrf.mxu0
        %v1714 = vadd.f32 %v640, %v1713
        %1715 = vdwg.mxu0
        %1716 = vmatpush.bf16.msra.mxu0 %v1240
        %1717 = vmatpush.bf16.msra.mxu0 %v1232
        %1718 = vmatpush.bf16.msra.mxu0 %v1224
        %1719 = vmatpush.bf16.msra.mxu0 %v1216
        %1720 = vmatpush.bf16.msra.mxu0 %v1208
        %1721 = vmatpush.bf16.msra.mxu0 %v1200
        %1722 = vmatpush.bf16.msra.mxu0 %v1192
        %1723 = vmatpush.bf16.msra.mxu0 %v1184
        %1724 = vmatmul.bf16.gmra.mxu0 %v702
        %v1725 = vpop.f32.mrf.mxu0
        %v1726 = vadd.f32 %v1677, %v1725
        %v1727 = vpop.f32.mrf.mxu0
        %v1728 = vadd.f32 %v1679, %v1727
        %1729 = vmatmul.bf16.gmra.mxu0 %v704
        %v1730 = vpop.f32.mrf.mxu0
        %v1731 = vadd.f32 %v1682, %v1730
        %v1732 = vpop.f32.mrf.mxu0
        %v1733 = vadd.f32 %v1684, %v1732
        %1734 = vmatmul.bf16.gmra.mxu0 %v706
        %v1735 = vpop.f32.mrf.mxu0
        %v1736 = vadd.f32 %v1687, %v1735
        %v1737 = vpop.f32.mrf.mxu0
        %v1738 = vadd.f32 %v1689, %v1737
        %1739 = vmatmul.bf16.gmra.mxu0 %v708
        %v1740 = vpop.f32.mrf.mxu0
        %v1741 = vadd.f32 %v1692, %v1740
        %v1742 = vpop.f32.mrf.mxu0
        %v1743 = vadd.f32 %v1694, %v1742
        %1744 = vmatmul.bf16.gmra.mxu0 %v710
        %v1745 = vpop.f32.mrf.mxu0
        %v1746 = vadd.f32 %v1697, %v1745
        %v1747 = vpop.f32.mrf.mxu0
        %v1748 = vadd.f32 %v1699, %v1747
        %1749 = vmatmul.bf16.gmra.mxu0 %v712
        %v1750 = vpop.f32.mrf.mxu0
        %v1751 = vadd.f32 %v1702, %v1750
        %v1752 = vpop.f32.mrf.mxu0
        %v1753 = vadd.f32 %v1704, %v1752
        %1754 = vmatmul.bf16.gmra.mxu0 %v714
        %v1755 = vpop.f32.mrf.mxu0
        %v1756 = vadd.f32 %v1707, %v1755
        %v1757 = vpop.f32.mrf.mxu0
        %v1758 = vadd.f32 %v1709, %v1757
        %1759 = vmatmul.bf16.gmra.mxu0 %v716
        %v1760 = vpop.f32.mrf.mxu0
        %v1761 = vadd.f32 %v1712, %v1760
        %v1762 = vpop.f32.mrf.mxu0
        %v1763 = vadd.f32 %v1714, %v1762
        %1764 = vdwg.mxu0
        %1765 = vmatpush.bf16.msra.mxu0 %v1177
        %1766 = vmatpush.bf16.msra.mxu0 %v1169
        %1767 = vmatpush.bf16.msra.mxu0 %v1161
        %1768 = vmatpush.bf16.msra.mxu0 %v1153
        %1769 = vmatpush.bf16.msra.mxu0 %v1145
        %1770 = vmatpush.bf16.msra.mxu0 %v1137
        %1771 = vmatpush.bf16.msra.mxu0 %v1129
        %1772 = vmatpush.bf16.msra.mxu0 %v1121
        %1773 = vmatmul.bf16.gmra.mxu0 %v701
        %v1774 = vpop.f32.mrf.mxu0
        %v1775 = vadd.f32 %v641, %v1774
        %v1776 = vpop.f32.mrf.mxu0
        %v1777 = vadd.f32 %v641, %v1776
        %1778 = vmatmul.bf16.gmra.mxu0 %v703
        %v1779 = vpop.f32.mrf.mxu0
        %v1780 = vadd.f32 %v641, %v1779
        %v1781 = vpop.f32.mrf.mxu0
        %v1782 = vadd.f32 %v641, %v1781
        %1783 = vmatmul.bf16.gmra.mxu0 %v705
        %v1784 = vpop.f32.mrf.mxu0
        %v1785 = vadd.f32 %v641, %v1784
        %v1786 = vpop.f32.mrf.mxu0
        %v1787 = vadd.f32 %v641, %v1786
        %1788 = vmatmul.bf16.gmra.mxu0 %v707
        %v1789 = vpop.f32.mrf.mxu0
        %v1790 = vadd.f32 %v641, %v1789
        %v1791 = vpop.f32.mrf.mxu0
        %v1792 = vadd.f32 %v641, %v1791
        %1793 = vmatmul.bf16.gmra.mxu0 %v709
        %v1794 = vpop.f32.mrf.mxu0
        %v1795 = vadd.f32 %v641, %v1794
        %v1796 = vpop.f32.mrf.mxu0
        %v1797 = vadd.f32 %v641, %v1796
        %1798 = vmatmul.bf16.gmra.mxu0 %v711
        %v1799 = vpop.f32.mrf.mxu0
        %v1800 = vadd.f32 %v641, %v1799
        %v1801 = vpop.f32.mrf.mxu0
        %v1802 = vadd.f32 %v641, %v1801
        %1803 = vmatmul.bf16.gmra.mxu0 %v713
        %v1804 = vpop.f32.mrf.mxu0
        %v1805 = vadd.f32 %v641, %v1804
        %v1806 = vpop.f32.mrf.mxu0
        %v1807 = vadd.f32 %v641, %v1806
        %1808 = vmatmul.bf16.gmra.mxu0 %v715
        %v1809 = vpop.f32.mrf.mxu0
        %v1810 = vadd.f32 %v641, %v1809
        %v1811 = vpop.f32.mrf.mxu0
        %v1812 = vadd.f32 %v641, %v1811
        %1813 = vdwg.mxu0
        %1814 = vmatpush.bf16.msra.mxu0 %v1241
        %1815 = vmatpush.bf16.msra.mxu0 %v1233
        %1816 = vmatpush.bf16.msra.mxu0 %v1225
        %1817 = vmatpush.bf16.msra.mxu0 %v1217
        %1818 = vmatpush.bf16.msra.mxu0 %v1209
        %1819 = vmatpush.bf16.msra.mxu0 %v1201
        %1820 = vmatpush.bf16.msra.mxu0 %v1193
        %1821 = vmatpush.bf16.msra.mxu0 %v1185
        %1822 = vmatmul.bf16.gmra.mxu0 %v702
        %v1823 = vpop.f32.mrf.mxu0
        %v1824 = vadd.f32 %v1775, %v1823
        %v1825 = vpop.f32.mrf.mxu0
        %v1826 = vadd.f32 %v1777, %v1825
        %1827 = vmatmul.bf16.gmra.mxu0 %v704
        %v1828 = vpop.f32.mrf.mxu0
        %v1829 = vadd.f32 %v1780, %v1828
        %v1830 = vpop.f32.mrf.mxu0
        %v1831 = vadd.f32 %v1782, %v1830
        %1832 = vmatmul.bf16.gmra.mxu0 %v706
        %v1833 = vpop.f32.mrf.mxu0
        %v1834 = vadd.f32 %v1785, %v1833
        %v1835 = vpop.f32.mrf.mxu0
        %v1836 = vadd.f32 %v1787, %v1835
        %1837 = vmatmul.bf16.gmra.mxu0 %v708
        %v1838 = vpop.f32.mrf.mxu0
        %v1839 = vadd.f32 %v1790, %v1838
        %v1840 = vpop.f32.mrf.mxu0
        %v1841 = vadd.f32 %v1792, %v1840
        %1842 = vmatmul.bf16.gmra.mxu0 %v710
        %v1843 = vpop.f32.mrf.mxu0
        %v1844 = vadd.f32 %v1795, %v1843
        %v1845 = vpop.f32.mrf.mxu0
        %v1846 = vadd.f32 %v1797, %v1845
        %1847 = vmatmul.bf16.gmra.mxu0 %v712
        %v1848 = vpop.f32.mrf.mxu0
        %v1849 = vadd.f32 %v1800, %v1848
        %v1850 = vpop.f32.mrf.mxu0
        %v1851 = vadd.f32 %v1802, %v1850
        %1852 = vmatmul.bf16.gmra.mxu0 %v714
        %v1853 = vpop.f32.mrf.mxu0
        %v1854 = vadd.f32 %v1805, %v1853
        %v1855 = vpop.f32.mrf.mxu0
        %v1856 = vadd.f32 %v1807, %v1855
        %1857 = vmatmul.bf16.gmra.mxu0 %v716
        %v1858 = vpop.f32.mrf.mxu0
        %v1859 = vadd.f32 %v1810, %v1858
        %v1860 = vpop.f32.mrf.mxu0
        %v1861 = vadd.f32 %v1812, %v1860
        %1862 = vdwg.mxu0
        %1863 = vmatpush.bf16.msra.mxu0 %v1178
        %1864 = vmatpush.bf16.msra.mxu0 %v1170
        %1865 = vmatpush.bf16.msra.mxu0 %v1162
        %1866 = vmatpush.bf16.msra.mxu0 %v1154
        %1867 = vmatpush.bf16.msra.mxu0 %v1146
        %1868 = vmatpush.bf16.msra.mxu0 %v1138
        %1869 = vmatpush.bf16.msra.mxu0 %v1130
        %1870 = vmatpush.bf16.msra.mxu0 %v1122
        %1871 = vmatmul.bf16.gmra.mxu0 %v701
        %v1872 = vpop.f32.mrf.mxu0
        %v1873 = vadd.f32 %v642, %v1872
        %v1874 = vpop.f32.mrf.mxu0
        %v1875 = vadd.f32 %v642, %v1874
        %1876 = vmatmul.bf16.gmra.mxu0 %v703
        %v1877 = vpop.f32.mrf.mxu0
        %v1878 = vadd.f32 %v642, %v1877
        %v1879 = vpop.f32.mrf.mxu0
        %v1880 = vadd.f32 %v642, %v1879
        %1881 = vmatmul.bf16.gmra.mxu0 %v705
        %v1882 = vpop.f32.mrf.mxu0
        %v1883 = vadd.f32 %v642, %v1882
        %v1884 = vpop.f32.mrf.mxu0
        %v1885 = vadd.f32 %v642, %v1884
        %1886 = vmatmul.bf16.gmra.mxu0 %v707
        %v1887 = vpop.f32.mrf.mxu0
        %v1888 = vadd.f32 %v642, %v1887
        %v1889 = vpop.f32.mrf.mxu0
        %v1890 = vadd.f32 %v642, %v1889
        %1891 = vmatmul.bf16.gmra.mxu0 %v709
        %v1892 = vpop.f32.mrf.mxu0
        %v1893 = vadd.f32 %v642, %v1892
        %v1894 = vpop.f32.mrf.mxu0
        %v1895 = vadd.f32 %v642, %v1894
        %1896 = vmatmul.bf16.gmra.mxu0 %v711
        %v1897 = vpop.f32.mrf.mxu0
        %v1898 = vadd.f32 %v642, %v1897
        %v1899 = vpop.f32.mrf.mxu0
        %v1900 = vadd.f32 %v642, %v1899
        %1901 = vmatmul.bf16.gmra.mxu0 %v713
        %v1902 = vpop.f32.mrf.mxu0
        %v1903 = vadd.f32 %v642, %v1902
        %v1904 = vpop.f32.mrf.mxu0
        %v1905 = vadd.f32 %v642, %v1904
        %1906 = vmatmul.bf16.gmra.mxu0 %v715
        %v1907 = vpop.f32.mrf.mxu0
        %v1908 = vadd.f32 %v642, %v1907
        %v1909 = vpop.f32.mrf.mxu0
        %v1910 = vadd.f32 %v642, %v1909
        %1911 = vdwg.mxu0
        %1912 = vmatpush.bf16.msra.mxu0 %v1242
        %1913 = vmatpush.bf16.msra.mxu0 %v1234
        %1914 = vmatpush.bf16.msra.mxu0 %v1226
        %1915 = vmatpush.bf16.msra.mxu0 %v1218
        %1916 = vmatpush.bf16.msra.mxu0 %v1210
        %1917 = vmatpush.bf16.msra.mxu0 %v1202
        %1918 = vmatpush.bf16.msra.mxu0 %v1194
        %1919 = vmatpush.bf16.msra.mxu0 %v1186
        %1920 = vmatmul.bf16.gmra.mxu0 %v702
        %v1921 = vpop.f32.mrf.mxu0
        %v1922 = vadd.f32 %v1873, %v1921
        %v1923 = vpop.f32.mrf.mxu0
        %v1924 = vadd.f32 %v1875, %v1923
        %1925 = vmatmul.bf16.gmra.mxu0 %v704
        %v1926 = vpop.f32.mrf.mxu0
        %v1927 = vadd.f32 %v1878, %v1926
        %v1928 = vpop.f32.mrf.mxu0
        %v1929 = vadd.f32 %v1880, %v1928
        %1930 = vmatmul.bf16.gmra.mxu0 %v706
        %v1931 = vpop.f32.mrf.mxu0
        %v1932 = vadd.f32 %v1883, %v1931
        %v1933 = vpop.f32.mrf.mxu0
        %v1934 = vadd.f32 %v1885, %v1933
        %1935 = vmatmul.bf16.gmra.mxu0 %v708
        %v1936 = vpop.f32.mrf.mxu0
        %v1937 = vadd.f32 %v1888, %v1936
        %v1938 = vpop.f32.mrf.mxu0
        %v1939 = vadd.f32 %v1890, %v1938
        %1940 = vmatmul.bf16.gmra.mxu0 %v710
        %v1941 = vpop.f32.mrf.mxu0
        %v1942 = vadd.f32 %v1893, %v1941
        %v1943 = vpop.f32.mrf.mxu0
        %v1944 = vadd.f32 %v1895, %v1943
        %1945 = vmatmul.bf16.gmra.mxu0 %v712
        %v1946 = vpop.f32.mrf.mxu0
        %v1947 = vadd.f32 %v1898, %v1946
        %v1948 = vpop.f32.mrf.mxu0
        %v1949 = vadd.f32 %v1900, %v1948
        %1950 = vmatmul.bf16.gmra.mxu0 %v714
        %v1951 = vpop.f32.mrf.mxu0
        %v1952 = vadd.f32 %v1903, %v1951
        %v1953 = vpop.f32.mrf.mxu0
        %v1954 = vadd.f32 %v1905, %v1953
        %1955 = vmatmul.bf16.gmra.mxu0 %v716
        %v1956 = vpop.f32.mrf.mxu0
        %v1957 = vadd.f32 %v1908, %v1956
        %v1958 = vpop.f32.mrf.mxu0
        %v1959 = vadd.f32 %v1910, %v1958
        %1960 = vdwg.mxu0
        %1961 = vmatpush.bf16.msra.mxu0 %v1179
        %1962 = vmatpush.bf16.msra.mxu0 %v1171
        %1963 = vmatpush.bf16.msra.mxu0 %v1163
        %1964 = vmatpush.bf16.msra.mxu0 %v1155
        %1965 = vmatpush.bf16.msra.mxu0 %v1147
        %1966 = vmatpush.bf16.msra.mxu0 %v1139
        %1967 = vmatpush.bf16.msra.mxu0 %v1131
        %1968 = vmatpush.bf16.msra.mxu0 %v1123
        %1969 = vmatmul.bf16.gmra.mxu0 %v701
        %v1970 = vpop.f32.mrf.mxu0
        %v1971 = vadd.f32 %v643, %v1970
        %v1972 = vpop.f32.mrf.mxu0
        %v1973 = vadd.f32 %v643, %v1972
        %1974 = vmatmul.bf16.gmra.mxu0 %v703
        %v1975 = vpop.f32.mrf.mxu0
        %v1976 = vadd.f32 %v643, %v1975
        %v1977 = vpop.f32.mrf.mxu0
        %v1978 = vadd.f32 %v643, %v1977
        %1979 = vmatmul.bf16.gmra.mxu0 %v705
        %v1980 = vpop.f32.mrf.mxu0
        %v1981 = vadd.f32 %v643, %v1980
        %v1982 = vpop.f32.mrf.mxu0
        %v1983 = vadd.f32 %v643, %v1982
        %1984 = vmatmul.bf16.gmra.mxu0 %v707
        %v1985 = vpop.f32.mrf.mxu0
        %v1986 = vadd.f32 %v643, %v1985
        %v1987 = vpop.f32.mrf.mxu0
        %v1988 = vadd.f32 %v643, %v1987
        %1989 = vmatmul.bf16.gmra.mxu0 %v709
        %v1990 = vpop.f32.mrf.mxu0
        %v1991 = vadd.f32 %v643, %v1990
        %v1992 = vpop.f32.mrf.mxu0
        %v1993 = vadd.f32 %v643, %v1992
        %1994 = vmatmul.bf16.gmra.mxu0 %v711
        %v1995 = vpop.f32.mrf.mxu0
        %v1996 = vadd.f32 %v643, %v1995
        %v1997 = vpop.f32.mrf.mxu0
        %v1998 = vadd.f32 %v643, %v1997
        %1999 = vmatmul.bf16.gmra.mxu0 %v713
        %v2000 = vpop.f32.mrf.mxu0
        %v2001 = vadd.f32 %v643, %v2000
        %v2002 = vpop.f32.mrf.mxu0
        %v2003 = vadd.f32 %v643, %v2002
        %2004 = vmatmul.bf16.gmra.mxu0 %v715
        %v2005 = vpop.f32.mrf.mxu0
        %v2006 = vadd.f32 %v643, %v2005
        %v2007 = vpop.f32.mrf.mxu0
        %v2008 = vadd.f32 %v643, %v2007
        %2009 = vdwg.mxu0
        %2010 = vmatpush.bf16.msra.mxu0 %v1243
        %2011 = vmatpush.bf16.msra.mxu0 %v1235
        %2012 = vmatpush.bf16.msra.mxu0 %v1227
        %2013 = vmatpush.bf16.msra.mxu0 %v1219
        %2014 = vmatpush.bf16.msra.mxu0 %v1211
        %2015 = vmatpush.bf16.msra.mxu0 %v1203
        %2016 = vmatpush.bf16.msra.mxu0 %v1195
        %2017 = vmatpush.bf16.msra.mxu0 %v1187
        %2018 = vmatmul.bf16.gmra.mxu0 %v702
        %v2019 = vpop.f32.mrf.mxu0
        %v2020 = vadd.f32 %v1971, %v2019
        %v2021 = vpop.f32.mrf.mxu0
        %v2022 = vadd.f32 %v1973, %v2021
        %2023 = vmatmul.bf16.gmra.mxu0 %v704
        %v2024 = vpop.f32.mrf.mxu0
        %v2025 = vadd.f32 %v1976, %v2024
        %v2026 = vpop.f32.mrf.mxu0
        %v2027 = vadd.f32 %v1978, %v2026
        %2028 = vmatmul.bf16.gmra.mxu0 %v706
        %v2029 = vpop.f32.mrf.mxu0
        %v2030 = vadd.f32 %v1981, %v2029
        %v2031 = vpop.f32.mrf.mxu0
        %v2032 = vadd.f32 %v1983, %v2031
        %2033 = vmatmul.bf16.gmra.mxu0 %v708
        %v2034 = vpop.f32.mrf.mxu0
        %v2035 = vadd.f32 %v1986, %v2034
        %v2036 = vpop.f32.mrf.mxu0
        %v2037 = vadd.f32 %v1988, %v2036
        %2038 = vmatmul.bf16.gmra.mxu0 %v710
        %v2039 = vpop.f32.mrf.mxu0
        %v2040 = vadd.f32 %v1991, %v2039
        %v2041 = vpop.f32.mrf.mxu0
        %v2042 = vadd.f32 %v1993, %v2041
        %2043 = vmatmul.bf16.gmra.mxu0 %v712
        %v2044 = vpop.f32.mrf.mxu0
        %v2045 = vadd.f32 %v1996, %v2044
        %v2046 = vpop.f32.mrf.mxu0
        %v2047 = vadd.f32 %v1998, %v2046
        %2048 = vmatmul.bf16.gmra.mxu0 %v714
        %v2049 = vpop.f32.mrf.mxu0
        %v2050 = vadd.f32 %v2001, %v2049
        %v2051 = vpop.f32.mrf.mxu0
        %v2052 = vadd.f32 %v2003, %v2051
        %2053 = vmatmul.bf16.gmra.mxu0 %v716
        %v2054 = vpop.f32.mrf.mxu0
        %v2055 = vadd.f32 %v2006, %v2054
        %v2056 = vpop.f32.mrf.mxu0
        %v2057 = vadd.f32 %v2008, %v2056
        %2058 = vdwg.mxu0
        %2059 = vmatpush.bf16.msra.mxu0 %v1180
        %2060 = vmatpush.bf16.msra.mxu0 %v1172
        %2061 = vmatpush.bf16.msra.mxu0 %v1164
        %2062 = vmatpush.bf16.msra.mxu0 %v1156
        %2063 = vmatpush.bf16.msra.mxu0 %v1148
        %2064 = vmatpush.bf16.msra.mxu0 %v1140
        %2065 = vmatpush.bf16.msra.mxu0 %v1132
        %2066 = vmatpush.bf16.msra.mxu0 %v1124
        %2067 = vmatmul.bf16.gmra.mxu0 %v701
        %v2068 = vpop.f32.mrf.mxu0
        %v2069 = vadd.f32 %v644, %v2068
        %v2070 = vpop.f32.mrf.mxu0
        %v2071 = vadd.f32 %v644, %v2070
        %2072 = vmatmul.bf16.gmra.mxu0 %v703
        %v2073 = vpop.f32.mrf.mxu0
        %v2074 = vadd.f32 %v644, %v2073
        %v2075 = vpop.f32.mrf.mxu0
        %v2076 = vadd.f32 %v644, %v2075
        %2077 = vmatmul.bf16.gmra.mxu0 %v705
        %v2078 = vpop.f32.mrf.mxu0
        %v2079 = vadd.f32 %v644, %v2078
        %v2080 = vpop.f32.mrf.mxu0
        %v2081 = vadd.f32 %v644, %v2080
        %2082 = vmatmul.bf16.gmra.mxu0 %v707
        %v2083 = vpop.f32.mrf.mxu0
        %v2084 = vadd.f32 %v644, %v2083
        %v2085 = vpop.f32.mrf.mxu0
        %v2086 = vadd.f32 %v644, %v2085
        %2087 = vmatmul.bf16.gmra.mxu0 %v709
        %v2088 = vpop.f32.mrf.mxu0
        %v2089 = vadd.f32 %v644, %v2088
        %v2090 = vpop.f32.mrf.mxu0
        %v2091 = vadd.f32 %v644, %v2090
        %2092 = vmatmul.bf16.gmra.mxu0 %v711
        %v2093 = vpop.f32.mrf.mxu0
        %v2094 = vadd.f32 %v644, %v2093
        %v2095 = vpop.f32.mrf.mxu0
        %v2096 = vadd.f32 %v644, %v2095
        %2097 = vmatmul.bf16.gmra.mxu0 %v713
        %v2098 = vpop.f32.mrf.mxu0
        %v2099 = vadd.f32 %v644, %v2098
        %v2100 = vpop.f32.mrf.mxu0
        %v2101 = vadd.f32 %v644, %v2100
        %2102 = vmatmul.bf16.gmra.mxu0 %v715
        %v2103 = vpop.f32.mrf.mxu0
        %v2104 = vadd.f32 %v644, %v2103
        %v2105 = vpop.f32.mrf.mxu0
        %v2106 = vadd.f32 %v644, %v2105
        %2107 = vdwg.mxu0
        %2108 = vmatpush.bf16.msra.mxu0 %v1244
        %2109 = vmatpush.bf16.msra.mxu0 %v1236
        %2110 = vmatpush.bf16.msra.mxu0 %v1228
        %2111 = vmatpush.bf16.msra.mxu0 %v1220
        %2112 = vmatpush.bf16.msra.mxu0 %v1212
        %2113 = vmatpush.bf16.msra.mxu0 %v1204
        %2114 = vmatpush.bf16.msra.mxu0 %v1196
        %2115 = vmatpush.bf16.msra.mxu0 %v1188
        %2116 = vmatmul.bf16.gmra.mxu0 %v702
        %v2117 = vpop.f32.mrf.mxu0
        %v2118 = vadd.f32 %v2069, %v2117
        %v2119 = vpop.f32.mrf.mxu0
        %v2120 = vadd.f32 %v2071, %v2119
        %2121 = vmatmul.bf16.gmra.mxu0 %v704
        %v2122 = vpop.f32.mrf.mxu0
        %v2123 = vadd.f32 %v2074, %v2122
        %v2124 = vpop.f32.mrf.mxu0
        %v2125 = vadd.f32 %v2076, %v2124
        %2126 = vmatmul.bf16.gmra.mxu0 %v706
        %v2127 = vpop.f32.mrf.mxu0
        %v2128 = vadd.f32 %v2079, %v2127
        %v2129 = vpop.f32.mrf.mxu0
        %v2130 = vadd.f32 %v2081, %v2129
        %2131 = vmatmul.bf16.gmra.mxu0 %v708
        %v2132 = vpop.f32.mrf.mxu0
        %v2133 = vadd.f32 %v2084, %v2132
        %v2134 = vpop.f32.mrf.mxu0
        %v2135 = vadd.f32 %v2086, %v2134
        %2136 = vmatmul.bf16.gmra.mxu0 %v710
        %v2137 = vpop.f32.mrf.mxu0
        %v2138 = vadd.f32 %v2089, %v2137
        %v2139 = vpop.f32.mrf.mxu0
        %v2140 = vadd.f32 %v2091, %v2139
        %2141 = vmatmul.bf16.gmra.mxu0 %v712
        %v2142 = vpop.f32.mrf.mxu0
        %v2143 = vadd.f32 %v2094, %v2142
        %v2144 = vpop.f32.mrf.mxu0
        %v2145 = vadd.f32 %v2096, %v2144
        %2146 = vmatmul.bf16.gmra.mxu0 %v714
        %v2147 = vpop.f32.mrf.mxu0
        %v2148 = vadd.f32 %v2099, %v2147
        %v2149 = vpop.f32.mrf.mxu0
        %v2150 = vadd.f32 %v2101, %v2149
        %2151 = vmatmul.bf16.gmra.mxu0 %v716
        %v2152 = vpop.f32.mrf.mxu0
        %v2153 = vadd.f32 %v2104, %v2152
        %v2154 = vpop.f32.mrf.mxu0
        %v2155 = vadd.f32 %v2106, %v2154
        %2156 = vdwg.mxu0
        %v2157 = vmax.f32 %v1432, 0.0
        %v2158 = vmax.f32 %v1530, 0.0
        %v2159 = vmax.f32 %v1628, 0.0
        %v2160 = vmax.f32 %v1726, 0.0
        %v2161 = vmax.f32 %v1824, 0.0
        %v2162 = vmax.f32 %v1922, 0.0
        %v2163 = vmax.f32 %v2020, 0.0
        %v2164 = vmax.f32 %v2118, 0.0
        %v2165 = vmax.f32 %v1434, 0.0
        %v2166 = vmax.f32 %v1532, 0.0
        %v2167 = vmax.f32 %v1630, 0.0
        %v2168 = vmax.f32 %v1728, 0.0
        %v2169 = vmax.f32 %v1826, 0.0
        %v2170 = vmax.f32 %v1924, 0.0
        %v2171 = vmax.f32 %v2022, 0.0
        %v2172 = vmax.f32 %v2120, 0.0
        %v2173 = vmax.f32 %v1437, 0.0
        %v2174 = vmax.f32 %v1535, 0.0
        %v2175 = vmax.f32 %v1633, 0.0
        %v2176 = vmax.f32 %v1731, 0.0
        %v2177 = vmax.f32 %v1829, 0.0
        %v2178 = vmax.f32 %v1927, 0.0
        %v2179 = vmax.f32 %v2025, 0.0
        %v2180 = vmax.f32 %v2123, 0.0
        %v2181 = vmax.f32 %v1439, 0.0
        %v2182 = vmax.f32 %v1537, 0.0
        %v2183 = vmax.f32 %v1635, 0.0
        %v2184 = vmax.f32 %v1733, 0.0
        %v2185 = vmax.f32 %v1831, 0.0
        %v2186 = vmax.f32 %v1929, 0.0
        %v2187 = vmax.f32 %v2027, 0.0
        %v2188 = vmax.f32 %v2125, 0.0
        %v2189 = vmax.f32 %v1442, 0.0
        %v2190 = vmax.f32 %v1540, 0.0
        %v2191 = vmax.f32 %v1638, 0.0
        %v2192 = vmax.f32 %v1736, 0.0
        %v2193 = vmax.f32 %v1834, 0.0
        %v2194 = vmax.f32 %v1932, 0.0
        %v2195 = vmax.f32 %v2030, 0.0
        %v2196 = vmax.f32 %v2128, 0.0
        %v2197 = vmax.f32 %v1444, 0.0
        %v2198 = vmax.f32 %v1542, 0.0
        %v2199 = vmax.f32 %v1640, 0.0
        %v2200 = vmax.f32 %v1738, 0.0
        %v2201 = vmax.f32 %v1836, 0.0
        %v2202 = vmax.f32 %v1934, 0.0
        %v2203 = vmax.f32 %v2032, 0.0
        %v2204 = vmax.f32 %v2130, 0.0
        %v2205 = vmax.f32 %v1447, 0.0
        %v2206 = vmax.f32 %v1545, 0.0
        %v2207 = vmax.f32 %v1643, 0.0
        %v2208 = vmax.f32 %v1741, 0.0
        %v2209 = vmax.f32 %v1839, 0.0
        %v2210 = vmax.f32 %v1937, 0.0
        %v2211 = vmax.f32 %v2035, 0.0
        %v2212 = vmax.f32 %v2133, 0.0
        %v2213 = vmax.f32 %v1449, 0.0
        %v2214 = vmax.f32 %v1547, 0.0
        %v2215 = vmax.f32 %v1645, 0.0
        %v2216 = vmax.f32 %v1743, 0.0
        %v2217 = vmax.f32 %v1841, 0.0
        %v2218 = vmax.f32 %v1939, 0.0
        %v2219 = vmax.f32 %v2037, 0.0
        %v2220 = vmax.f32 %v2135, 0.0
        %v2221 = vmax.f32 %v1452, 0.0
        %v2222 = vmax.f32 %v1550, 0.0
        %v2223 = vmax.f32 %v1648, 0.0
        %v2224 = vmax.f32 %v1746, 0.0
        %v2225 = vmax.f32 %v1844, 0.0
        %v2226 = vmax.f32 %v1942, 0.0
        %v2227 = vmax.f32 %v2040, 0.0
        %v2228 = vmax.f32 %v2138, 0.0
        %v2229 = vmax.f32 %v1454, 0.0
        %v2230 = vmax.f32 %v1552, 0.0
        %v2231 = vmax.f32 %v1650, 0.0
        %v2232 = vmax.f32 %v1748, 0.0
        %v2233 = vmax.f32 %v1846, 0.0
        %v2234 = vmax.f32 %v1944, 0.0
        %v2235 = vmax.f32 %v2042, 0.0
        %v2236 = vmax.f32 %v2140, 0.0
        %v2237 = vmax.f32 %v1457, 0.0
        %v2238 = vmax.f32 %v1555, 0.0
        %v2239 = vmax.f32 %v1653, 0.0
        %v2240 = vmax.f32 %v1751, 0.0
        %v2241 = vmax.f32 %v1849, 0.0
        %v2242 = vmax.f32 %v1947, 0.0
        %v2243 = vmax.f32 %v2045, 0.0
        %v2244 = vmax.f32 %v2143, 0.0
        %v2245 = vmax.f32 %v1459, 0.0
        %v2246 = vmax.f32 %v1557, 0.0
        %v2247 = vmax.f32 %v1655, 0.0
        %v2248 = vmax.f32 %v1753, 0.0
        %v2249 = vmax.f32 %v1851, 0.0
        %v2250 = vmax.f32 %v1949, 0.0
        %v2251 = vmax.f32 %v2047, 0.0
        %v2252 = vmax.f32 %v2145, 0.0
        %v2253 = vmax.f32 %v1462, 0.0
        %v2254 = vmax.f32 %v1560, 0.0
        %v2255 = vmax.f32 %v1658, 0.0
        %v2256 = vmax.f32 %v1756, 0.0
        %v2257 = vmax.f32 %v1854, 0.0
        %v2258 = vmax.f32 %v1952, 0.0
        %v2259 = vmax.f32 %v2050, 0.0
        %v2260 = vmax.f32 %v2148, 0.0
        %v2261 = vmax.f32 %v1464, 0.0
        %v2262 = vmax.f32 %v1562, 0.0
        %v2263 = vmax.f32 %v1660, 0.0
        %v2264 = vmax.f32 %v1758, 0.0
        %v2265 = vmax.f32 %v1856, 0.0
        %v2266 = vmax.f32 %v1954, 0.0
        %v2267 = vmax.f32 %v2052, 0.0
        %v2268 = vmax.f32 %v2150, 0.0
        %v2269 = vmax.f32 %v1467, 0.0
        %v2270 = vmax.f32 %v1565, 0.0
        %v2271 = vmax.f32 %v1663, 0.0
        %v2272 = vmax.f32 %v1761, 0.0
        %v2273 = vmax.f32 %v1859, 0.0
        %v2274 = vmax.f32 %v1957, 0.0
        %v2275 = vmax.f32 %v2055, 0.0
        %v2276 = vmax.f32 %v2153, 0.0
        %v2277 = vmax.f32 %v1469, 0.0
        %v2278 = vmax.f32 %v1567, 0.0
        %v2279 = vmax.f32 %v1665, 0.0
        %v2280 = vmax.f32 %v1763, 0.0
        %v2281 = vmax.f32 %v1861, 0.0
        %v2282 = vmax.f32 %v1959, 0.0
        %v2283 = vmax.f32 %v2057, 0.0
        %v2284 = vmax.f32 %v2155, 0.0
        %v2285 = vpack.c.bf16 %v2165, %v2157
        %v2286 = vpack.c.bf16 %v2166, %v2158
        %v2287 = vpack.c.bf16 %v2167, %v2159
        %v2288 = vpack.c.bf16 %v2168, %v2160
        %v2289 = vpack.c.bf16 %v2169, %v2161
        %v2290 = vpack.c.bf16 %v2170, %v2162
        %v2291 = vpack.c.bf16 %v2171, %v2163
        %v2292 = vpack.c.bf16 %v2172, %v2164
        %v2293 = vpack.c.bf16 %v2181, %v2173
        %v2294 = vpack.c.bf16 %v2182, %v2174
        %v2295 = vpack.c.bf16 %v2183, %v2175
        %v2296 = vpack.c.bf16 %v2184, %v2176
        %v2297 = vpack.c.bf16 %v2185, %v2177
        %v2298 = vpack.c.bf16 %v2186, %v2178
        %v2299 = vpack.c.bf16 %v2187, %v2179
        %v2300 = vpack.c.bf16 %v2188, %v2180
        %v2301 = vpack.c.bf16 %v2197, %v2189
        %v2302 = vpack.c.bf16 %v2198, %v2190
        %v2303 = vpack.c.bf16 %v2199, %v2191
        %v2304 = vpack.c.bf16 %v2200, %v2192
        %v2305 = vpack.c.bf16 %v2201, %v2193
        %v2306 = vpack.c.bf16 %v2202, %v2194
        %v2307 = vpack.c.bf16 %v2203, %v2195
        %v2308 = vpack.c.bf16 %v2204, %v2196
        %v2309 = vpack.c.bf16 %v2213, %v2205
        %v2310 = vpack.c.bf16 %v2214, %v2206
        %v2311 = vpack.c.bf16 %v2215, %v2207
        %v2312 = vpack.c.bf16 %v2216, %v2208
        %v2313 = vpack.c.bf16 %v2217, %v2209
        %v2314 = vpack.c.bf16 %v2218, %v2210
        %v2315 = vpack.c.bf16 %v2219, %v2211
        %v2316 = vpack.c.bf16 %v2220, %v2212
        %v2317 = vpack.c.bf16 %v2229, %v2221
        %v2318 = vpack.c.bf16 %v2230, %v2222
        %v2319 = vpack.c.bf16 %v2231, %v2223
        %v2320 = vpack.c.bf16 %v2232, %v2224
        %v2321 = vpack.c.bf16 %v2233, %v2225
        %v2322 = vpack.c.bf16 %v2234, %v2226
        %v2323 = vpack.c.bf16 %v2235, %v2227
        %v2324 = vpack.c.bf16 %v2236, %v2228
        %v2325 = vpack.c.bf16 %v2245, %v2237
        %v2326 = vpack.c.bf16 %v2246, %v2238
        %v2327 = vpack.c.bf16 %v2247, %v2239
        %v2328 = vpack.c.bf16 %v2248, %v2240
        %v2329 = vpack.c.bf16 %v2249, %v2241
        %v2330 = vpack.c.bf16 %v2250, %v2242
        %v2331 = vpack.c.bf16 %v2251, %v2243
        %v2332 = vpack.c.bf16 %v2252, %v2244
        %v2333 = vpack.c.bf16 %v2261, %v2253
        %v2334 = vpack.c.bf16 %v2262, %v2254
        %v2335 = vpack.c.bf16 %v2263, %v2255
        %v2336 = vpack.c.bf16 %v2264, %v2256
        %v2337 = vpack.c.bf16 %v2265, %v2257
        %v2338 = vpack.c.bf16 %v2266, %v2258
        %v2339 = vpack.c.bf16 %v2267, %v2259
        %v2340 = vpack.c.bf16 %v2268, %v2260
        %v2341 = vpack.c.bf16 %v2277, %v2269
        %v2342 = vpack.c.bf16 %v2278, %v2270
        %v2343 = vpack.c.bf16 %v2279, %v2271
        %v2344 = vpack.c.bf16 %v2280, %v2272
        %v2345 = vpack.c.bf16 %v2281, %v2273
        %v2346 = vpack.c.bf16 %v2282, %v2274
        %v2347 = vpack.c.bf16 %v2283, %v2275
        %v2348 = vpack.c.bf16 %v2284, %v2276
        %v2349 = vld [vmem:[#allocation9] sm:$0xff]
        %v2350 = vld [vmem:[#allocation9 + $0x8] sm:$0xff]
        %v2351 = vld [vmem:[#allocation9 + $0x10] sm:$0xff]
        %v2352 = vld [vmem:[#allocation9 + $0x18] sm:$0xff]
        %v2353 = vld [vmem:[#allocation9 + $0x20] sm:$0xff]
        %v2354 = vld [vmem:[#allocation9 + $0x28] sm:$0xff]
        %v2355 = vld [vmem:[#allocation9 + $0x30] sm:$0xff]
        %v2356 = vld [vmem:[#allocation9 + $0x38] sm:$0xff]
        %v2357 = vld [vmem:[#allocation9 + $0x40] sm:$0xff]
        %v2358 = vld [vmem:[#allocation9 + $0x48] sm:$0xff]
        %v2359 = vld [vmem:[#allocation9 + $0x50] sm:$0xff]
        %v2360 = vld [vmem:[#allocation9 + $0x58] sm:$0xff]
        %v2361 = vld [vmem:[#allocation9 + $0x60] sm:$0xff]
        %v2362 = vld [vmem:[#allocation9 + $0x68] sm:$0xff]
        %v2363 = vld [vmem:[#allocation9 + $0x70] sm:$0xff]
        %v2364 = vld [vmem:[#allocation9 + $0x78] sm:$0xff]
        %v2365 = vld [vmem:[#allocation9 + $0x80] sm:$0xff]
        %v2366 = vld [vmem:[#allocation9 + $0x88] sm:$0xff]
        %v2367 = vld [vmem:[#allocation9 + $0x90] sm:$0xff]
        %v2368 = vld [vmem:[#allocation9 + $0x98] sm:$0xff]
        %v2369 = vld [vmem:[#allocation9 + $0xa0] sm:$0xff]
        %v2370 = vld [vmem:[#allocation9 + $0xa8] sm:$0xff]
        %v2371 = vld [vmem:[#allocation9 + $0xb0] sm:$0xff]
        %v2372 = vld [vmem:[#allocation9 + $0xb8] sm:$0xff]
        %v2373 = vld [vmem:[#allocation9 + $0xc0] sm:$0xff]
        %v2374 = vld [vmem:[#allocation9 + $0xc8] sm:$0xff]
        %v2375 = vld [vmem:[#allocation9 + $0xd0] sm:$0xff]
        %v2376 = vld [vmem:[#allocation9 + $0xd8] sm:$0xff]
        %v2377 = vld [vmem:[#allocation9 + $0xe0] sm:$0xff]
        %v2378 = vld [vmem:[#allocation9 + $0xe8] sm:$0xff]
        %v2379 = vld [vmem:[#allocation9 + $0xf0] sm:$0xff]
        %v2380 = vld [vmem:[#allocation9 + $0xf8] sm:$0xff]
        %v2381 = vld [vmem:[#allocation9 + $0x100] sm:$0xff]
        %v2382 = vld [vmem:[#allocation9 + $0x108] sm:$0xff]
        %v2383 = vld [vmem:[#allocation9 + $0x110] sm:$0xff]
        %v2384 = vld [vmem:[#allocation9 + $0x118] sm:$0xff]
        %v2385 = vld [vmem:[#allocation9 + $0x120] sm:$0xff]
        %v2386 = vld [vmem:[#allocation9 + $0x128] sm:$0xff]
        %v2387 = vld [vmem:[#allocation9 + $0x130] sm:$0xff]
        %v2388 = vld [vmem:[#allocation9 + $0x138] sm:$0xff]
        %v2389 = vld [vmem:[#allocation9 + $0x140] sm:$0xff]
        %v2390 = vld [vmem:[#allocation9 + $0x148] sm:$0xff]
        %v2391 = vld [vmem:[#allocation9 + $0x150] sm:$0xff]
        %v2392 = vld [vmem:[#allocation9 + $0x158] sm:$0xff]
        %v2393 = vld [vmem:[#allocation9 + $0x160] sm:$0xff]
        %v2394 = vld [vmem:[#allocation9 + $0x168] sm:$0xff]
        %v2395 = vld [vmem:[#allocation9 + $0x170] sm:$0xff]
        %v2396 = vld [vmem:[#allocation9 + $0x178] sm:$0xff]
        %v2397 = vld [vmem:[#allocation9 + $0x180] sm:$0xff]
        %v2398 = vld [vmem:[#allocation9 + $0x188] sm:$0xff]
        %v2399 = vld [vmem:[#allocation9 + $0x190] sm:$0xff]
        %v2400 = vld [vmem:[#allocation9 + $0x198] sm:$0xff]
        %v2401 = vld [vmem:[#allocation9 + $0x1a0] sm:$0xff]
        %v2402 = vld [vmem:[#allocation9 + $0x1a8] sm:$0xff]
        %v2403 = vld [vmem:[#allocation9 + $0x1b0] sm:$0xff]
        %v2404 = vld [vmem:[#allocation9 + $0x1b8] sm:$0xff]
        %v2405 = vld [vmem:[#allocation9 + $0x1c0] sm:$0xff]
        %v2406 = vld [vmem:[#allocation9 + $0x1c8] sm:$0xff]
        %v2407 = vld [vmem:[#allocation9 + $0x1d0] sm:$0xff]
        %v2408 = vld [vmem:[#allocation9 + $0x1d8] sm:$0xff]
        %v2409 = vld [vmem:[#allocation9 + $0x1e0] sm:$0xff]
        %v2410 = vld [vmem:[#allocation9 + $0x1e8] sm:$0xff]
        %v2411 = vld [vmem:[#allocation9 + $0x1f0] sm:$0xff]
        %v2412 = vld [vmem:[#allocation9 + $0x1f8] sm:$0xff]
        %v2413 = vld [vmem:[#allocation9 + $0x200] sm:$0xff]
        %v2414 = vld [vmem:[#allocation9 + $0x208] sm:$0xff]
        %v2415 = vld [vmem:[#allocation9 + $0x210] sm:$0xff]
        %v2416 = vld [vmem:[#allocation9 + $0x218] sm:$0xff]
        %v2417 = vld [vmem:[#allocation9 + $0x220] sm:$0xff]
        %v2418 = vld [vmem:[#allocation9 + $0x228] sm:$0xff]
        %v2419 = vld [vmem:[#allocation9 + $0x230] sm:$0xff]
        %v2420 = vld [vmem:[#allocation9 + $0x238] sm:$0xff]
        %v2421 = vld [vmem:[#allocation9 + $0x240] sm:$0xff]
        %v2422 = vld [vmem:[#allocation9 + $0x248] sm:$0xff]
        %v2423 = vld [vmem:[#allocation9 + $0x250] sm:$0xff]
        %v2424 = vld [vmem:[#allocation9 + $0x258] sm:$0xff]
        %v2425 = vld [vmem:[#allocation9 + $0x260] sm:$0xff]
        %v2426 = vld [vmem:[#allocation9 + $0x268] sm:$0xff]
        %v2427 = vld [vmem:[#allocation9 + $0x270] sm:$0xff]
        %v2428 = vld [vmem:[#allocation9 + $0x278] sm:$0xff]
        %v2429 = vld [vmem:[#allocation9 + $0x280] sm:$0xff]
        %v2430 = vld [vmem:[#allocation9 + $0x288] sm:$0xff]
        %v2431 = vld [vmem:[#allocation9 + $0x290] sm:$0xff]
        %v2432 = vld [vmem:[#allocation9 + $0x298] sm:$0xff]
        %v2433 = vld [vmem:[#allocation9 + $0x2a0] sm:$0xff]
        %v2434 = vld [vmem:[#allocation9 + $0x2a8] sm:$0xff]
        %v2435 = vld [vmem:[#allocation9 + $0x2b0] sm:$0xff]
        %v2436 = vld [vmem:[#allocation9 + $0x2b8] sm:$0xff]
        %v2437 = vld [vmem:[#allocation9 + $0x2c0] sm:$0xff]
        %v2438 = vld [vmem:[#allocation9 + $0x2c8] sm:$0xff]
        %v2439 = vld [vmem:[#allocation9 + $0x2d0] sm:$0xff]
        %v2440 = vld [vmem:[#allocation9 + $0x2d8] sm:$0xff]
        %v2441 = vld [vmem:[#allocation9 + $0x2e0] sm:$0xff]
        %v2442 = vld [vmem:[#allocation9 + $0x2e8] sm:$0xff]
        %v2443 = vld [vmem:[#allocation9 + $0x2f0] sm:$0xff]
        %v2444 = vld [vmem:[#allocation9 + $0x2f8] sm:$0xff]
        %v2445 = vld [vmem:[#allocation9 + $0x300] sm:$0xff]
        %v2446 = vld [vmem:[#allocation9 + $0x308] sm:$0xff]
        %v2447 = vld [vmem:[#allocation9 + $0x310] sm:$0xff]
        %v2448 = vld [vmem:[#allocation9 + $0x318] sm:$0xff]
        %v2449 = vld [vmem:[#allocation9 + $0x320] sm:$0xff]
        %v2450 = vld [vmem:[#allocation9 + $0x328] sm:$0xff]
        %v2451 = vld [vmem:[#allocation9 + $0x330] sm:$0xff]
        %v2452 = vld [vmem:[#allocation9 + $0x338] sm:$0xff]
        %v2453 = vld [vmem:[#allocation9 + $0x340] sm:$0xff]
        %v2454 = vld [vmem:[#allocation9 + $0x348] sm:$0xff]
        %v2455 = vld [vmem:[#allocation9 + $0x350] sm:$0xff]
        %v2456 = vld [vmem:[#allocation9 + $0x358] sm:$0xff]
        %v2457 = vld [vmem:[#allocation9 + $0x360] sm:$0xff]
        %v2458 = vld [vmem:[#allocation9 + $0x368] sm:$0xff]
        %v2459 = vld [vmem:[#allocation9 + $0x370] sm:$0xff]
        %v2460 = vld [vmem:[#allocation9 + $0x378] sm:$0xff]
        %v2461 = vld [vmem:[#allocation9 + $0x380] sm:$0xff]
        %v2462 = vld [vmem:[#allocation9 + $0x388] sm:$0xff]
        %v2463 = vld [vmem:[#allocation9 + $0x390] sm:$0xff]
        %v2464 = vld [vmem:[#allocation9 + $0x398] sm:$0xff]
        %v2465 = vld [vmem:[#allocation9 + $0x3a0] sm:$0xff]
        %v2466 = vld [vmem:[#allocation9 + $0x3a8] sm:$0xff]
        %v2467 = vld [vmem:[#allocation9 + $0x3b0] sm:$0xff]
        %v2468 = vld [vmem:[#allocation9 + $0x3b8] sm:$0xff]
        %v2469 = vld [vmem:[#allocation9 + $0x3c0] sm:$0xff]
        %v2470 = vld [vmem:[#allocation9 + $0x3c8] sm:$0xff]
        %v2471 = vld [vmem:[#allocation9 + $0x3d0] sm:$0xff]
        %v2472 = vld [vmem:[#allocation9 + $0x3d8] sm:$0xff]
        %v2473 = vld [vmem:[#allocation9 + $0x3e0] sm:$0xff]
        %v2474 = vld [vmem:[#allocation9 + $0x3e8] sm:$0xff]
        %v2475 = vld [vmem:[#allocation9 + $0x3f0] sm:$0xff]
        %v2476 = vld [vmem:[#allocation9 + $0x3f8] sm:$0xff]
        %v2477 = vld [vmem:[#allocation9 + $0x400] sm:$0xff]
        %v2478 = vld [vmem:[#allocation9 + $0x408] sm:$0xff]
        %v2479 = vld [vmem:[#allocation9 + $0x410] sm:$0xff]
        %v2480 = vld [vmem:[#allocation9 + $0x418] sm:$0xff]
        %v2481 = vld [vmem:[#allocation9 + $0x420] sm:$0xff]
        %v2482 = vld [vmem:[#allocation9 + $0x428] sm:$0xff]
        %v2483 = vld [vmem:[#allocation9 + $0x430] sm:$0xff]
        %v2484 = vld [vmem:[#allocation9 + $0x438] sm:$0xff]
        %v2485 = vld [vmem:[#allocation9 + $0x440] sm:$0xff]
        %v2486 = vld [vmem:[#allocation9 + $0x448] sm:$0xff]
        %v2487 = vld [vmem:[#allocation9 + $0x450] sm:$0xff]
        %v2488 = vld [vmem:[#allocation9 + $0x458] sm:$0xff]
        %v2489 = vld [vmem:[#allocation9 + $0x460] sm:$0xff]
        %v2490 = vld [vmem:[#allocation9 + $0x468] sm:$0xff]
        %v2491 = vld [vmem:[#allocation9 + $0x470] sm:$0xff]
        %v2492 = vld [vmem:[#allocation9 + $0x478] sm:$0xff]
        %v2493 = vld [vmem:[#allocation9 + $0x480] sm:$0xff]
        %v2494 = vld [vmem:[#allocation9 + $0x488] sm:$0xff]
        %v2495 = vld [vmem:[#allocation9 + $0x490] sm:$0xff]
        %v2496 = vld [vmem:[#allocation9 + $0x498] sm:$0xff]
        %v2497 = vld [vmem:[#allocation9 + $0x4a0] sm:$0xff]
        %v2498 = vld [vmem:[#allocation9 + $0x4a8] sm:$0xff]
        %v2499 = vld [vmem:[#allocation9 + $0x4b0] sm:$0xff]
        %v2500 = vld [vmem:[#allocation9 + $0x4b8] sm:$0xff]
        %v2501 = vld [vmem:[#allocation9 + $0x4c0] sm:$0xff]
        %v2502 = vld [vmem:[#allocation9 + $0x4c8] sm:$0xff]
        %v2503 = vld [vmem:[#allocation9 + $0x4d0] sm:$0xff]
        %v2504 = vld [vmem:[#allocation9 + $0x4d8] sm:$0xff]
        %v2505 = vld [vmem:[#allocation9 + $0x4e0] sm:$0xff]
        %v2506 = vld [vmem:[#allocation9 + $0x4e8] sm:$0xff]
        %v2507 = vld [vmem:[#allocation9 + $0x4f0] sm:$0xff]
        %v2508 = vld [vmem:[#allocation9 + $0x4f8] sm:$0xff]
        %v2509 = vld [vmem:[#allocation9 + $0x500] sm:$0xff]
        %v2510 = vld [vmem:[#allocation9 + $0x508] sm:$0xff]
        %v2511 = vld [vmem:[#allocation9 + $0x510] sm:$0xff]
        %v2512 = vld [vmem:[#allocation9 + $0x518] sm:$0xff]
        %v2513 = vld [vmem:[#allocation9 + $0x520] sm:$0xff]
        %v2514 = vld [vmem:[#allocation9 + $0x528] sm:$0xff]
        %v2515 = vld [vmem:[#allocation9 + $0x530] sm:$0xff]
        %v2516 = vld [vmem:[#allocation9 + $0x538] sm:$0xff]
        %v2517 = vld [vmem:[#allocation9 + $0x540] sm:$0xff]
        %v2518 = vld [vmem:[#allocation9 + $0x548] sm:$0xff]
        %v2519 = vld [vmem:[#allocation9 + $0x550] sm:$0xff]
        %v2520 = vld [vmem:[#allocation9 + $0x558] sm:$0xff]
        %v2521 = vld [vmem:[#allocation9 + $0x560] sm:$0xff]
        %v2522 = vld [vmem:[#allocation9 + $0x568] sm:$0xff]
        %v2523 = vld [vmem:[#allocation9 + $0x570] sm:$0xff]
        %v2524 = vld [vmem:[#allocation9 + $0x578] sm:$0xff]
        %v2525 = vld [vmem:[#allocation9 + $0x580] sm:$0xff]
        %v2526 = vld [vmem:[#allocation9 + $0x588] sm:$0xff]
        %v2527 = vld [vmem:[#allocation9 + $0x590] sm:$0xff]
        %v2528 = vld [vmem:[#allocation9 + $0x598] sm:$0xff]
        %v2529 = vld [vmem:[#allocation9 + $0x5a0] sm:$0xff]
        %v2530 = vld [vmem:[#allocation9 + $0x5a8] sm:$0xff]
        %v2531 = vld [vmem:[#allocation9 + $0x5b0] sm:$0xff]
        %v2532 = vld [vmem:[#allocation9 + $0x5b8] sm:$0xff]
        %v2533 = vld [vmem:[#allocation9 + $0x5c0] sm:$0xff]
        %v2534 = vld [vmem:[#allocation9 + $0x5c8] sm:$0xff]
        %v2535 = vld [vmem:[#allocation9 + $0x5d0] sm:$0xff]
        %v2536 = vld [vmem:[#allocation9 + $0x5d8] sm:$0xff]
        %v2537 = vld [vmem:[#allocation9 + $0x5e0] sm:$0xff]
        %v2538 = vld [vmem:[#allocation9 + $0x5e8] sm:$0xff]
        %v2539 = vld [vmem:[#allocation9 + $0x5f0] sm:$0xff]
        %v2540 = vld [vmem:[#allocation9 + $0x5f8] sm:$0xff]
        %v2541 = vld [vmem:[#allocation9 + $0x600] sm:$0xff]
        %v2542 = vld [vmem:[#allocation9 + $0x608] sm:$0xff]
        %v2543 = vld [vmem:[#allocation9 + $0x610] sm:$0xff]
        %v2544 = vld [vmem:[#allocation9 + $0x618] sm:$0xff]
        %v2545 = vld [vmem:[#allocation9 + $0x620] sm:$0xff]
        %v2546 = vld [vmem:[#allocation9 + $0x628] sm:$0xff]
        %v2547 = vld [vmem:[#allocation9 + $0x630] sm:$0xff]
        %v2548 = vld [vmem:[#allocation9 + $0x638] sm:$0xff]
        %v2549 = vld [vmem:[#allocation9 + $0x640] sm:$0xff]
        %v2550 = vld [vmem:[#allocation9 + $0x648] sm:$0xff]
        %v2551 = vld [vmem:[#allocation9 + $0x650] sm:$0xff]
        %v2552 = vld [vmem:[#allocation9 + $0x658] sm:$0xff]
        %v2553 = vld [vmem:[#allocation9 + $0x660] sm:$0xff]
        %v2554 = vld [vmem:[#allocation9 + $0x668] sm:$0xff]
        %v2555 = vld [vmem:[#allocation9 + $0x670] sm:$0xff]
        %v2556 = vld [vmem:[#allocation9 + $0x678] sm:$0xff]
        %v2557 = vld [vmem:[#allocation9 + $0x680] sm:$0xff]
        %v2558 = vld [vmem:[#allocation9 + $0x688] sm:$0xff]
        %v2559 = vld [vmem:[#allocation9 + $0x690] sm:$0xff]
        %v2560 = vld [vmem:[#allocation9 + $0x698] sm:$0xff]
        %v2561 = vld [vmem:[#allocation9 + $0x6a0] sm:$0xff]
        %v2562 = vld [vmem:[#allocation9 + $0x6a8] sm:$0xff]
        %v2563 = vld [vmem:[#allocation9 + $0x6b0] sm:$0xff]
        %v2564 = vld [vmem:[#allocation9 + $0x6b8] sm:$0xff]
        %v2565 = vld [vmem:[#allocation9 + $0x6c0] sm:$0xff]
        %v2566 = vld [vmem:[#allocation9 + $0x6c8] sm:$0xff]
        %v2567 = vld [vmem:[#allocation9 + $0x6d0] sm:$0xff]
        %v2568 = vld [vmem:[#allocation9 + $0x6d8] sm:$0xff]
        %v2569 = vld [vmem:[#allocation9 + $0x6e0] sm:$0xff]
        %v2570 = vld [vmem:[#allocation9 + $0x6e8] sm:$0xff]
        %v2571 = vld [vmem:[#allocation9 + $0x6f0] sm:$0xff]
        %v2572 = vld [vmem:[#allocation9 + $0x6f8] sm:$0xff]
        %v2573 = vld [vmem:[#allocation9 + $0x700] sm:$0xff]
        %v2574 = vld [vmem:[#allocation9 + $0x708] sm:$0xff]
        %v2575 = vld [vmem:[#allocation9 + $0x710] sm:$0xff]
        %v2576 = vld [vmem:[#allocation9 + $0x718] sm:$0xff]
        %v2577 = vld [vmem:[#allocation9 + $0x720] sm:$0xff]
        %v2578 = vld [vmem:[#allocation9 + $0x728] sm:$0xff]
        %v2579 = vld [vmem:[#allocation9 + $0x730] sm:$0xff]
        %v2580 = vld [vmem:[#allocation9 + $0x738] sm:$0xff]
        %v2581 = vld [vmem:[#allocation9 + $0x740] sm:$0xff]
        %v2582 = vld [vmem:[#allocation9 + $0x748] sm:$0xff]
        %v2583 = vld [vmem:[#allocation9 + $0x750] sm:$0xff]
        %v2584 = vld [vmem:[#allocation9 + $0x758] sm:$0xff]
        %v2585 = vld [vmem:[#allocation9 + $0x760] sm:$0xff]
        %v2586 = vld [vmem:[#allocation9 + $0x768] sm:$0xff]
        %v2587 = vld [vmem:[#allocation9 + $0x770] sm:$0xff]
        %v2588 = vld [vmem:[#allocation9 + $0x778] sm:$0xff]
        %v2589 = vld [vmem:[#allocation9 + $0x780] sm:$0xff]
        %v2590 = vld [vmem:[#allocation9 + $0x788] sm:$0xff]
        %v2591 = vld [vmem:[#allocation9 + $0x790] sm:$0xff]
        %v2592 = vld [vmem:[#allocation9 + $0x798] sm:$0xff]
        %v2593 = vld [vmem:[#allocation9 + $0x7a0] sm:$0xff]
        %v2594 = vld [vmem:[#allocation9 + $0x7a8] sm:$0xff]
        %v2595 = vld [vmem:[#allocation9 + $0x7b0] sm:$0xff]
        %v2596 = vld [vmem:[#allocation9 + $0x7b8] sm:$0xff]
        %v2597 = vld [vmem:[#allocation9 + $0x7c0] sm:$0xff]
        %v2598 = vld [vmem:[#allocation9 + $0x7c8] sm:$0xff]
        %v2599 = vld [vmem:[#allocation9 + $0x7d0] sm:$0xff]
        %v2600 = vld [vmem:[#allocation9 + $0x7d8] sm:$0xff]
        %v2601 = vld [vmem:[#allocation9 + $0x7e0] sm:$0xff]
        %v2602 = vld [vmem:[#allocation9 + $0x7e8] sm:$0xff]
        %v2603 = vld [vmem:[#allocation9 + $0x7f0] sm:$0xff]
        %v2604 = vld [vmem:[#allocation9 + $0x7f8] sm:$0xff]
        %v2605 = vld [vmem:[%s4] sm:$0xf]
        %v2607 = vperm.slane %v2605, 0
        %v2608 = vperm.slane %v2605, 1
        %v2609 = vperm.slane %v2605, 2
        %v2610 = vperm.slane %v2605, 3
        %v2871 = vunpack.c.l.b16 %v2349
        %v2872 = vunpack.c.h.b16 %v2349
        %v2873 = vunpack.c.l.b16 %v2350
        %v2874 = vunpack.c.h.b16 %v2350
        %v2875 = vunpack.c.l.b16 %v2351
        %v2876 = vunpack.c.h.b16 %v2351
        %v2877 = vunpack.c.l.b16 %v2352
        %v2878 = vunpack.c.h.b16 %v2352
        %v2879 = vunpack.c.l.b16 %v2353
        %v2880 = vunpack.c.h.b16 %v2353
        %v2881 = vunpack.c.l.b16 %v2354
        %v2882 = vunpack.c.h.b16 %v2354
        %v2883 = vunpack.c.l.b16 %v2355
        %v2884 = vunpack.c.h.b16 %v2355
        %v2885 = vunpack.c.l.b16 %v2356
        %v2886 = vunpack.c.h.b16 %v2356
        %v2887 = vunpack.c.l.b16 %v2357
        %v2888 = vunpack.c.h.b16 %v2357
        %v2889 = vunpack.c.l.b16 %v2358
        %v2890 = vunpack.c.h.b16 %v2358
        %v2891 = vunpack.c.l.b16 %v2359
        %v2892 = vunpack.c.h.b16 %v2359
        %v2893 = vunpack.c.l.b16 %v2360
        %v2894 = vunpack.c.h.b16 %v2360
        %v2895 = vunpack.c.l.b16 %v2361
        %v2896 = vunpack.c.h.b16 %v2361
        %v2897 = vunpack.c.l.b16 %v2362
        %v2898 = vunpack.c.h.b16 %v2362
        %v2899 = vunpack.c.l.b16 %v2363
        %v2900 = vunpack.c.h.b16 %v2363
        %v2901 = vunpack.c.l.b16 %v2364
        %v2902 = vunpack.c.h.b16 %v2364
        %v2903 = vunpack.c.l.b16 %v2365
        %v2904 = vunpack.c.h.b16 %v2365
        %v2905 = vunpack.c.l.b16 %v2366
        %v2906 = vunpack.c.h.b16 %v2366
        %v2907 = vunpack.c.l.b16 %v2367
        %v2908 = vunpack.c.h.b16 %v2367
        %v2909 = vunpack.c.l.b16 %v2368
        %v2910 = vunpack.c.h.b16 %v2368
        %v2911 = vunpack.c.l.b16 %v2369
        %v2912 = vunpack.c.h.b16 %v2369
        %v2913 = vunpack.c.l.b16 %v2370
        %v2914 = vunpack.c.h.b16 %v2370
        %v2915 = vunpack.c.l.b16 %v2371
        %v2916 = vunpack.c.h.b16 %v2371
        %v2917 = vunpack.c.l.b16 %v2372
        %v2918 = vunpack.c.h.b16 %v2372
        %v2919 = vunpack.c.l.b16 %v2373
        %v2920 = vunpack.c.h.b16 %v2373
        %v2921 = vunpack.c.l.b16 %v2374
        %v2922 = vunpack.c.h.b16 %v2374
        %v2923 = vunpack.c.l.b16 %v2375
        %v2924 = vunpack.c.h.b16 %v2375
        %v2925 = vunpack.c.l.b16 %v2376
        %v2926 = vunpack.c.h.b16 %v2376
        %v2927 = vunpack.c.l.b16 %v2377
        %v2928 = vunpack.c.h.b16 %v2377
        %v2929 = vunpack.c.l.b16 %v2378
        %v2930 = vunpack.c.h.b16 %v2378
        %v2931 = vunpack.c.l.b16 %v2379
        %v2932 = vunpack.c.h.b16 %v2379
        %v2933 = vunpack.c.l.b16 %v2380
        %v2934 = vunpack.c.h.b16 %v2380
        %v2935 = vunpack.c.l.b16 %v2381
        %v2936 = vunpack.c.h.b16 %v2381
        %v2937 = vunpack.c.l.b16 %v2382
        %v2938 = vunpack.c.h.b16 %v2382
        %v2939 = vunpack.c.l.b16 %v2383
        %v2940 = vunpack.c.h.b16 %v2383
        %v2941 = vunpack.c.l.b16 %v2384
        %v2942 = vunpack.c.h.b16 %v2384
        %v2943 = vunpack.c.l.b16 %v2385
        %v2944 = vunpack.c.h.b16 %v2385
        %v2945 = vunpack.c.l.b16 %v2386
        %v2946 = vunpack.c.h.b16 %v2386
        %v2947 = vunpack.c.l.b16 %v2387
        %v2948 = vunpack.c.h.b16 %v2387
        %v2949 = vunpack.c.l.b16 %v2388
        %v2950 = vunpack.c.h.b16 %v2388
        %v2951 = vunpack.c.l.b16 %v2389
        %v2952 = vunpack.c.h.b16 %v2389
        %v2953 = vunpack.c.l.b16 %v2390
        %v2954 = vunpack.c.h.b16 %v2390
        %v2955 = vunpack.c.l.b16 %v2391
        %v2956 = vunpack.c.h.b16 %v2391
        %v2957 = vunpack.c.l.b16 %v2392
        %v2958 = vunpack.c.h.b16 %v2392
        %v2959 = vunpack.c.l.b16 %v2393
        %v2960 = vunpack.c.h.b16 %v2393
        %v2961 = vunpack.c.l.b16 %v2394
        %v2962 = vunpack.c.h.b16 %v2394
        %v2963 = vunpack.c.l.b16 %v2395
        %v2964 = vunpack.c.h.b16 %v2395
        %v2965 = vunpack.c.l.b16 %v2396
        %v2966 = vunpack.c.h.b16 %v2396
        %v2967 = vunpack.c.l.b16 %v2397
        %v2968 = vunpack.c.h.b16 %v2397
        %v2969 = vunpack.c.l.b16 %v2398
        %v2970 = vunpack.c.h.b16 %v2398
        %v2971 = vunpack.c.l.b16 %v2399
        %v2972 = vunpack.c.h.b16 %v2399
        %v2973 = vunpack.c.l.b16 %v2400
        %v2974 = vunpack.c.h.b16 %v2400
        %v2975 = vunpack.c.l.b16 %v2401
        %v2976 = vunpack.c.h.b16 %v2401
        %v2977 = vunpack.c.l.b16 %v2402
        %v2978 = vunpack.c.h.b16 %v2402
        %v2979 = vunpack.c.l.b16 %v2403
        %v2980 = vunpack.c.h.b16 %v2403
        %v2981 = vunpack.c.l.b16 %v2404
        %v2982 = vunpack.c.h.b16 %v2404
        %v2983 = vunpack.c.l.b16 %v2405
        %v2984 = vunpack.c.h.b16 %v2405
        %v2985 = vunpack.c.l.b16 %v2406
        %v2986 = vunpack.c.h.b16 %v2406
        %v2987 = vunpack.c.l.b16 %v2407
        %v2988 = vunpack.c.h.b16 %v2407
        %v2989 = vunpack.c.l.b16 %v2408
        %v2990 = vunpack.c.h.b16 %v2408
        %v2991 = vunpack.c.l.b16 %v2409
        %v2992 = vunpack.c.h.b16 %v2409
        %v2993 = vunpack.c.l.b16 %v2410
        %v2994 = vunpack.c.h.b16 %v2410
        %v2995 = vunpack.c.l.b16 %v2411
        %v2996 = vunpack.c.h.b16 %v2411
        %v2997 = vunpack.c.l.b16 %v2412
        %v2998 = vunpack.c.h.b16 %v2412
        %v2999 = vunpack.c.l.b16 %v2413
        %v3000 = vunpack.c.h.b16 %v2413
        %v3001 = vunpack.c.l.b16 %v2414
        %v3002 = vunpack.c.h.b16 %v2414
        %v3003 = vunpack.c.l.b16 %v2415
        %v3004 = vunpack.c.h.b16 %v2415
        %v3005 = vunpack.c.l.b16 %v2416
        %v3006 = vunpack.c.h.b16 %v2416
        %v3007 = vunpack.c.l.b16 %v2417
        %v3008 = vunpack.c.h.b16 %v2417
        %v3009 = vunpack.c.l.b16 %v2418
        %v3010 = vunpack.c.h.b16 %v2418
        %v3011 = vunpack.c.l.b16 %v2419
        %v3012 = vunpack.c.h.b16 %v2419
        %v3013 = vunpack.c.l.b16 %v2420
        %v3014 = vunpack.c.h.b16 %v2420
        %v3015 = vunpack.c.l.b16 %v2421
        %v3016 = vunpack.c.h.b16 %v2421
        %v3017 = vunpack.c.l.b16 %v2422
        %v3018 = vunpack.c.h.b16 %v2422
        %v3019 = vunpack.c.l.b16 %v2423
        %v3020 = vunpack.c.h.b16 %v2423
        %v3021 = vunpack.c.l.b16 %v2424
        %v3022 = vunpack.c.h.b16 %v2424
        %v3023 = vunpack.c.l.b16 %v2425
        %v3024 = vunpack.c.h.b16 %v2425
        %v3025 = vunpack.c.l.b16 %v2426
        %v3026 = vunpack.c.h.b16 %v2426
        %v3027 = vunpack.c.l.b16 %v2427
        %v3028 = vunpack.c.h.b16 %v2427
        %v3029 = vunpack.c.l.b16 %v2428
        %v3030 = vunpack.c.h.b16 %v2428
        %v3031 = vunpack.c.l.b16 %v2429
        %v3032 = vunpack.c.h.b16 %v2429
        %v3033 = vunpack.c.l.b16 %v2430
        %v3034 = vunpack.c.h.b16 %v2430
        %v3035 = vunpack.c.l.b16 %v2431
        %v3036 = vunpack.c.h.b16 %v2431
        %v3037 = vunpack.c.l.b16 %v2432
        %v3038 = vunpack.c.h.b16 %v2432
        %v3039 = vunpack.c.l.b16 %v2433
        %v3040 = vunpack.c.h.b16 %v2433
        %v3041 = vunpack.c.l.b16 %v2434
        %v3042 = vunpack.c.h.b16 %v2434
        %v3043 = vunpack.c.l.b16 %v2435
        %v3044 = vunpack.c.h.b16 %v2435
        %v3045 = vunpack.c.l.b16 %v2436
        %v3046 = vunpack.c.h.b16 %v2436
        %v3047 = vunpack.c.l.b16 %v2437
        %v3048 = vunpack.c.h.b16 %v2437
        %v3049 = vunpack.c.l.b16 %v2438
        %v3050 = vunpack.c.h.b16 %v2438
        %v3051 = vunpack.c.l.b16 %v2439
        %v3052 = vunpack.c.h.b16 %v2439
        %v3053 = vunpack.c.l.b16 %v2440
        %v3054 = vunpack.c.h.b16 %v2440
        %v3055 = vunpack.c.l.b16 %v2441
        %v3056 = vunpack.c.h.b16 %v2441
        %v3057 = vunpack.c.l.b16 %v2442
        %v3058 = vunpack.c.h.b16 %v2442
        %v3059 = vunpack.c.l.b16 %v2443
        %v3060 = vunpack.c.h.b16 %v2443
        %v3061 = vunpack.c.l.b16 %v2444
        %v3062 = vunpack.c.h.b16 %v2444
        %v3063 = vunpack.c.l.b16 %v2445
        %v3064 = vunpack.c.h.b16 %v2445
        %v3065 = vunpack.c.l.b16 %v2446
        %v3066 = vunpack.c.h.b16 %v2446
        %v3067 = vunpack.c.l.b16 %v2447
        %v3068 = vunpack.c.h.b16 %v2447
        %v3069 = vunpack.c.l.b16 %v2448
        %v3070 = vunpack.c.h.b16 %v2448
        %v3071 = vunpack.c.l.b16 %v2449
        %v3072 = vunpack.c.h.b16 %v2449
        %v3073 = vunpack.c.l.b16 %v2450
        %v3074 = vunpack.c.h.b16 %v2450
        %v3075 = vunpack.c.l.b16 %v2451
        %v3076 = vunpack.c.h.b16 %v2451
        %v3077 = vunpack.c.l.b16 %v2452
        %v3078 = vunpack.c.h.b16 %v2452
        %v3079 = vunpack.c.l.b16 %v2453
        %v3080 = vunpack.c.h.b16 %v2453
        %v3081 = vunpack.c.l.b16 %v2454
        %v3082 = vunpack.c.h.b16 %v2454
        %v3083 = vunpack.c.l.b16 %v2455
        %v3084 = vunpack.c.h.b16 %v2455
        %v3085 = vunpack.c.l.b16 %v2456
        %v3086 = vunpack.c.h.b16 %v2456
        %v3087 = vunpack.c.l.b16 %v2457
        %v3088 = vunpack.c.h.b16 %v2457
        %v3089 = vunpack.c.l.b16 %v2458
        %v3090 = vunpack.c.h.b16 %v2458
        %v3091 = vunpack.c.l.b16 %v2459
        %v3092 = vunpack.c.h.b16 %v2459
        %v3093 = vunpack.c.l.b16 %v2460
        %v3094 = vunpack.c.h.b16 %v2460
        %v3095 = vunpack.c.l.b16 %v2461
        %v3096 = vunpack.c.h.b16 %v2461
        %v3097 = vunpack.c.l.b16 %v2462
        %v3098 = vunpack.c.h.b16 %v2462
        %v3099 = vunpack.c.l.b16 %v2463
        %v3100 = vunpack.c.h.b16 %v2463
        %v3101 = vunpack.c.l.b16 %v2464
        %v3102 = vunpack.c.h.b16 %v2464
        %v3103 = vunpack.c.l.b16 %v2465
        %v3104 = vunpack.c.h.b16 %v2465
        %v3105 = vunpack.c.l.b16 %v2466
        %v3106 = vunpack.c.h.b16 %v2466
        %v3107 = vunpack.c.l.b16 %v2467
        %v3108 = vunpack.c.h.b16 %v2467
        %v3109 = vunpack.c.l.b16 %v2468
        %v3110 = vunpack.c.h.b16 %v2468
        %v3111 = vunpack.c.l.b16 %v2469
        %v3112 = vunpack.c.h.b16 %v2469
        %v3113 = vunpack.c.l.b16 %v2470
        %v3114 = vunpack.c.h.b16 %v2470
        %v3115 = vunpack.c.l.b16 %v2471
        %v3116 = vunpack.c.h.b16 %v2471
        %v3117 = vunpack.c.l.b16 %v2472
        %v3118 = vunpack.c.h.b16 %v2472
        %v3119 = vunpack.c.l.b16 %v2473
        %v3120 = vunpack.c.h.b16 %v2473
        %v3121 = vunpack.c.l.b16 %v2474
        %v3122 = vunpack.c.h.b16 %v2474
        %v3123 = vunpack.c.l.b16 %v2475
        %v3124 = vunpack.c.h.b16 %v2475
        %v3125 = vunpack.c.l.b16 %v2476
        %v3126 = vunpack.c.h.b16 %v2476
        %v3127 = vunpack.c.l.b16 %v2477
        %v3128 = vunpack.c.h.b16 %v2477
        %v3129 = vunpack.c.l.b16 %v2478
        %v3130 = vunpack.c.h.b16 %v2478
        %v3131 = vunpack.c.l.b16 %v2479
        %v3132 = vunpack.c.h.b16 %v2479
        %v3133 = vunpack.c.l.b16 %v2480
        %v3134 = vunpack.c.h.b16 %v2480
        %v3135 = vunpack.c.l.b16 %v2481
        %v3136 = vunpack.c.h.b16 %v2481
        %v3137 = vunpack.c.l.b16 %v2482
        %v3138 = vunpack.c.h.b16 %v2482
        %v3139 = vunpack.c.l.b16 %v2483
        %v3140 = vunpack.c.h.b16 %v2483
        %v3141 = vunpack.c.l.b16 %v2484
        %v3142 = vunpack.c.h.b16 %v2484
        %v3143 = vunpack.c.l.b16 %v2485
        %v3144 = vunpack.c.h.b16 %v2485
        %v3145 = vunpack.c.l.b16 %v2486
        %v3146 = vunpack.c.h.b16 %v2486
        %v3147 = vunpack.c.l.b16 %v2487
        %v3148 = vunpack.c.h.b16 %v2487
        %v3149 = vunpack.c.l.b16 %v2488
        %v3150 = vunpack.c.h.b16 %v2488
        %v3151 = vunpack.c.l.b16 %v2489
        %v3152 = vunpack.c.h.b16 %v2489
        %v3153 = vunpack.c.l.b16 %v2490
        %v3154 = vunpack.c.h.b16 %v2490
        %v3155 = vunpack.c.l.b16 %v2491
        %v3156 = vunpack.c.h.b16 %v2491
        %v3157 = vunpack.c.l.b16 %v2492
        %v3158 = vunpack.c.h.b16 %v2492
        %v3159 = vunpack.c.l.b16 %v2493
        %v3160 = vunpack.c.h.b16 %v2493
        %v3161 = vunpack.c.l.b16 %v2494
        %v3162 = vunpack.c.h.b16 %v2494
        %v3163 = vunpack.c.l.b16 %v2495
        %v3164 = vunpack.c.h.b16 %v2495
        %v3165 = vunpack.c.l.b16 %v2496
        %v3166 = vunpack.c.h.b16 %v2496
        %v3167 = vunpack.c.l.b16 %v2497
        %v3168 = vunpack.c.h.b16 %v2497
        %v3169 = vunpack.c.l.b16 %v2498
        %v3170 = vunpack.c.h.b16 %v2498
        %v3171 = vunpack.c.l.b16 %v2499
        %v3172 = vunpack.c.h.b16 %v2499
        %v3173 = vunpack.c.l.b16 %v2500
        %v3174 = vunpack.c.h.b16 %v2500
        %v3175 = vunpack.c.l.b16 %v2501
        %v3176 = vunpack.c.h.b16 %v2501
        %v3177 = vunpack.c.l.b16 %v2502
        %v3178 = vunpack.c.h.b16 %v2502
        %v3179 = vunpack.c.l.b16 %v2503
        %v3180 = vunpack.c.h.b16 %v2503
        %v3181 = vunpack.c.l.b16 %v2504
        %v3182 = vunpack.c.h.b16 %v2504
        %v3183 = vunpack.c.l.b16 %v2505
        %v3184 = vunpack.c.h.b16 %v2505
        %v3185 = vunpack.c.l.b16 %v2506
        %v3186 = vunpack.c.h.b16 %v2506
        %v3187 = vunpack.c.l.b16 %v2507
        %v3188 = vunpack.c.h.b16 %v2507
        %v3189 = vunpack.c.l.b16 %v2508
        %v3190 = vunpack.c.h.b16 %v2508
        %v3191 = vunpack.c.l.b16 %v2509
        %v3192 = vunpack.c.h.b16 %v2509
        %v3193 = vunpack.c.l.b16 %v2510
        %v3194 = vunpack.c.h.b16 %v2510
        %v3195 = vunpack.c.l.b16 %v2511
        %v3196 = vunpack.c.h.b16 %v2511
        %v3197 = vunpack.c.l.b16 %v2512
        %v3198 = vunpack.c.h.b16 %v2512
        %v3199 = vunpack.c.l.b16 %v2513
        %v3200 = vunpack.c.h.b16 %v2513
        %v3201 = vunpack.c.l.b16 %v2514
        %v3202 = vunpack.c.h.b16 %v2514
        %v3203 = vunpack.c.l.b16 %v2515
        %v3204 = vunpack.c.h.b16 %v2515
        %v3205 = vunpack.c.l.b16 %v2516
        %v3206 = vunpack.c.h.b16 %v2516
        %v3207 = vunpack.c.l.b16 %v2517
        %v3208 = vunpack.c.h.b16 %v2517
        %v3209 = vunpack.c.l.b16 %v2518
        %v3210 = vunpack.c.h.b16 %v2518
        %v3211 = vunpack.c.l.b16 %v2519
        %v3212 = vunpack.c.h.b16 %v2519
        %v3213 = vunpack.c.l.b16 %v2520
        %v3214 = vunpack.c.h.b16 %v2520
        %v3215 = vunpack.c.l.b16 %v2521
        %v3216 = vunpack.c.h.b16 %v2521
        %v3217 = vunpack.c.l.b16 %v2522
        %v3218 = vunpack.c.h.b16 %v2522
        %v3219 = vunpack.c.l.b16 %v2523
        %v3220 = vunpack.c.h.b16 %v2523
        %v3221 = vunpack.c.l.b16 %v2524
        %v3222 = vunpack.c.h.b16 %v2524
        %v3223 = vunpack.c.l.b16 %v2525
        %v3224 = vunpack.c.h.b16 %v2525
        %v3225 = vunpack.c.l.b16 %v2526
        %v3226 = vunpack.c.h.b16 %v2526
        %v3227 = vunpack.c.l.b16 %v2527
        %v3228 = vunpack.c.h.b16 %v2527
        %v3229 = vunpack.c.l.b16 %v2528
        %v3230 = vunpack.c.h.b16 %v2528
        %v3231 = vunpack.c.l.b16 %v2529
        %v3232 = vunpack.c.h.b16 %v2529
        %v3233 = vunpack.c.l.b16 %v2530
        %v3234 = vunpack.c.h.b16 %v2530
        %v3235 = vunpack.c.l.b16 %v2531
        %v3236 = vunpack.c.h.b16 %v2531
        %v3237 = vunpack.c.l.b16 %v2532
        %v3238 = vunpack.c.h.b16 %v2532
        %v3239 = vunpack.c.l.b16 %v2533
        %v3240 = vunpack.c.h.b16 %v2533
        %v3241 = vunpack.c.l.b16 %v2534
        %v3242 = vunpack.c.h.b16 %v2534
        %v3243 = vunpack.c.l.b16 %v2535
        %v3244 = vunpack.c.h.b16 %v2535
        %v3245 = vunpack.c.l.b16 %v2536
        %v3246 = vunpack.c.h.b16 %v2536
        %v3247 = vunpack.c.l.b16 %v2537
        %v3248 = vunpack.c.h.b16 %v2537
        %v3249 = vunpack.c.l.b16 %v2538
        %v3250 = vunpack.c.h.b16 %v2538
        %v3251 = vunpack.c.l.b16 %v2539
        %v3252 = vunpack.c.h.b16 %v2539
        %v3253 = vunpack.c.l.b16 %v2540
        %v3254 = vunpack.c.h.b16 %v2540
        %v3255 = vunpack.c.l.b16 %v2541
        %v3256 = vunpack.c.h.b16 %v2541
        %v3257 = vunpack.c.l.b16 %v2542
        %v3258 = vunpack.c.h.b16 %v2542
        %v3259 = vunpack.c.l.b16 %v2543
        %v3260 = vunpack.c.h.b16 %v2543
        %v3261 = vunpack.c.l.b16 %v2544
        %v3262 = vunpack.c.h.b16 %v2544
        %v3263 = vunpack.c.l.b16 %v2545
        %v3264 = vunpack.c.h.b16 %v2545
        %v3265 = vunpack.c.l.b16 %v2546
        %v3266 = vunpack.c.h.b16 %v2546
        %v3267 = vunpack.c.l.b16 %v2547
        %v3268 = vunpack.c.h.b16 %v2547
        %v3269 = vunpack.c.l.b16 %v2548
        %v3270 = vunpack.c.h.b16 %v2548
        %v3271 = vunpack.c.l.b16 %v2549
        %v3272 = vunpack.c.h.b16 %v2549
        %v3273 = vunpack.c.l.b16 %v2550
        %v3274 = vunpack.c.h.b16 %v2550
        %v3275 = vunpack.c.l.b16 %v2551
        %v3276 = vunpack.c.h.b16 %v2551
        %v3277 = vunpack.c.l.b16 %v2552
        %v3278 = vunpack.c.h.b16 %v2552
        %v3279 = vunpack.c.l.b16 %v2553
        %v3280 = vunpack.c.h.b16 %v2553
        %v3281 = vunpack.c.l.b16 %v2554
        %v3282 = vunpack.c.h.b16 %v2554
        %v3283 = vunpack.c.l.b16 %v2555
        %v3284 = vunpack.c.h.b16 %v2555
        %v3285 = vunpack.c.l.b16 %v2556
        %v3286 = vunpack.c.h.b16 %v2556
        %v3287 = vunpack.c.l.b16 %v2557
        %v3288 = vunpack.c.h.b16 %v2557
        %v3289 = vunpack.c.l.b16 %v2558
        %v3290 = vunpack.c.h.b16 %v2558
        %v3291 = vunpack.c.l.b16 %v2559
        %v3292 = vunpack.c.h.b16 %v2559
        %v3293 = vunpack.c.l.b16 %v2560
        %v3294 = vunpack.c.h.b16 %v2560
        %v3295 = vunpack.c.l.b16 %v2561
        %v3296 = vunpack.c.h.b16 %v2561
        %v3297 = vunpack.c.l.b16 %v2562
        %v3298 = vunpack.c.h.b16 %v2562
        %v3299 = vunpack.c.l.b16 %v2563
        %v3300 = vunpack.c.h.b16 %v2563
        %v3301 = vunpack.c.l.b16 %v2564
        %v3302 = vunpack.c.h.b16 %v2564
        %v3303 = vunpack.c.l.b16 %v2565
        %v3304 = vunpack.c.h.b16 %v2565
        %v3305 = vunpack.c.l.b16 %v2566
        %v3306 = vunpack.c.h.b16 %v2566
        %v3307 = vunpack.c.l.b16 %v2567
        %v3308 = vunpack.c.h.b16 %v2567
        %v3309 = vunpack.c.l.b16 %v2568
        %v3310 = vunpack.c.h.b16 %v2568
        %v3311 = vunpack.c.l.b16 %v2569
        %v3312 = vunpack.c.h.b16 %v2569
        %v3313 = vunpack.c.l.b16 %v2570
        %v3314 = vunpack.c.h.b16 %v2570
        %v3315 = vunpack.c.l.b16 %v2571
        %v3316 = vunpack.c.h.b16 %v2571
        %v3317 = vunpack.c.l.b16 %v2572
        %v3318 = vunpack.c.h.b16 %v2572
        %v3319 = vunpack.c.l.b16 %v2573
        %v3320 = vunpack.c.h.b16 %v2573
        %v3321 = vunpack.c.l.b16 %v2574
        %v3322 = vunpack.c.h.b16 %v2574
        %v3323 = vunpack.c.l.b16 %v2575
        %v3324 = vunpack.c.h.b16 %v2575
        %v3325 = vunpack.c.l.b16 %v2576
        %v3326 = vunpack.c.h.b16 %v2576
        %v3327 = vunpack.c.l.b16 %v2577
        %v3328 = vunpack.c.h.b16 %v2577
        %v3329 = vunpack.c.l.b16 %v2578
        %v3330 = vunpack.c.h.b16 %v2578
        %v3331 = vunpack.c.l.b16 %v2579
        %v3332 = vunpack.c.h.b16 %v2579
        %v3333 = vunpack.c.l.b16 %v2580
        %v3334 = vunpack.c.h.b16 %v2580
        %v3335 = vunpack.c.l.b16 %v2581
        %v3336 = vunpack.c.h.b16 %v2581
        %v3337 = vunpack.c.l.b16 %v2582
        %v3338 = vunpack.c.h.b16 %v2582
        %v3339 = vunpack.c.l.b16 %v2583
        %v3340 = vunpack.c.h.b16 %v2583
        %v3341 = vunpack.c.l.b16 %v2584
        %v3342 = vunpack.c.h.b16 %v2584
        %v3343 = vunpack.c.l.b16 %v2585
        %v3344 = vunpack.c.h.b16 %v2585
        %v3345 = vunpack.c.l.b16 %v2586
        %v3346 = vunpack.c.h.b16 %v2586
        %v3347 = vunpack.c.l.b16 %v2587
        %v3348 = vunpack.c.h.b16 %v2587
        %v3349 = vunpack.c.l.b16 %v2588
        %v3350 = vunpack.c.h.b16 %v2588
        %v3351 = vunpack.c.l.b16 %v2589
        %v3352 = vunpack.c.h.b16 %v2589
        %v3353 = vunpack.c.l.b16 %v2590
        %v3354 = vunpack.c.h.b16 %v2590
        %v3355 = vunpack.c.l.b16 %v2591
        %v3356 = vunpack.c.h.b16 %v2591
        %v3357 = vunpack.c.l.b16 %v2592
        %v3358 = vunpack.c.h.b16 %v2592
        %v3359 = vunpack.c.l.b16 %v2593
        %v3360 = vunpack.c.h.b16 %v2593
        %v3361 = vunpack.c.l.b16 %v2594
        %v3362 = vunpack.c.h.b16 %v2594
        %v3363 = vunpack.c.l.b16 %v2595
        %v3364 = vunpack.c.h.b16 %v2595
        %v3365 = vunpack.c.l.b16 %v2596
        %v3366 = vunpack.c.h.b16 %v2596
        %v3367 = vunpack.c.l.b16 %v2597
        %v3368 = vunpack.c.h.b16 %v2597
        %v3369 = vunpack.c.l.b16 %v2598
        %v3370 = vunpack.c.h.b16 %v2598
        %v3371 = vunpack.c.l.b16 %v2599
        %v3372 = vunpack.c.h.b16 %v2599
        %v3373 = vunpack.c.l.b16 %v2600
        %v3374 = vunpack.c.h.b16 %v2600
        %v3375 = vunpack.c.l.b16 %v2601
        %v3376 = vunpack.c.h.b16 %v2601
        %v3377 = vunpack.c.l.b16 %v2602
        %v3378 = vunpack.c.h.b16 %v2602
        %v3379 = vunpack.c.l.b16 %v2603
        %v3380 = vunpack.c.h.b16 %v2603
        %v3381 = vunpack.c.l.b16 %v2604
        %v3382 = vunpack.c.h.b16 %v2604
        %v3383 = vpack.c.b16 %v2875, %v2871
        %v3384 = vpack.c.b16 %v2876, %v2872
        %v3385 = vpack.c.b16 %v2877, %v2873
        %v3386 = vpack.c.b16 %v2878, %v2874
        %v3387 = vpack.c.b16 %v2883, %v2879
        %v3388 = vpack.c.b16 %v2884, %v2880
        %v3389 = vpack.c.b16 %v2885, %v2881
        %v3390 = vpack.c.b16 %v2886, %v2882
        %v3391 = vpack.c.b16 %v2891, %v2887
        %v3392 = vpack.c.b16 %v2892, %v2888
        %v3393 = vpack.c.b16 %v2893, %v2889
        %v3394 = vpack.c.b16 %v2894, %v2890
        %v3395 = vpack.c.b16 %v2899, %v2895
        %v3396 = vpack.c.b16 %v2900, %v2896
        %v3397 = vpack.c.b16 %v2901, %v2897
        %v3398 = vpack.c.b16 %v2902, %v2898
        %v3399 = vpack.c.b16 %v2907, %v2903
        %v3400 = vpack.c.b16 %v2908, %v2904
        %v3401 = vpack.c.b16 %v2909, %v2905
        %v3402 = vpack.c.b16 %v2910, %v2906
        %v3403 = vpack.c.b16 %v2915, %v2911
        %v3404 = vpack.c.b16 %v2916, %v2912
        %v3405 = vpack.c.b16 %v2917, %v2913
        %v3406 = vpack.c.b16 %v2918, %v2914
        %v3407 = vpack.c.b16 %v2923, %v2919
        %v3408 = vpack.c.b16 %v2924, %v2920
        %v3409 = vpack.c.b16 %v2925, %v2921
        %v3410 = vpack.c.b16 %v2926, %v2922
        %v3411 = vpack.c.b16 %v2931, %v2927
        %v3412 = vpack.c.b16 %v2932, %v2928
        %v3413 = vpack.c.b16 %v2933, %v2929
        %v3414 = vpack.c.b16 %v2934, %v2930
        %v3415 = vpack.c.b16 %v2939, %v2935
        %v3416 = vpack.c.b16 %v2940, %v2936
        %v3417 = vpack.c.b16 %v2941, %v2937
        %v3418 = vpack.c.b16 %v2942, %v2938
        %v3419 = vpack.c.b16 %v2947, %v2943
        %v3420 = vpack.c.b16 %v2948, %v2944
        %v3421 = vpack.c.b16 %v2949, %v2945
        %v3422 = vpack.c.b16 %v2950, %v2946
        %v3423 = vpack.c.b16 %v2955, %v2951
        %v3424 = vpack.c.b16 %v2956, %v2952
        %v3425 = vpack.c.b16 %v2957, %v2953
        %v3426 = vpack.c.b16 %v2958, %v2954
        %v3427 = vpack.c.b16 %v2963, %v2959
        %v3428 = vpack.c.b16 %v2964, %v2960
        %v3429 = vpack.c.b16 %v2965, %v2961
        %v3430 = vpack.c.b16 %v2966, %v2962
        %v3431 = vpack.c.b16 %v2971, %v2967
        %v3432 = vpack.c.b16 %v2972, %v2968
        %v3433 = vpack.c.b16 %v2973, %v2969
        %v3434 = vpack.c.b16 %v2974, %v2970
        %v3435 = vpack.c.b16 %v2979, %v2975
        %v3436 = vpack.c.b16 %v2980, %v2976
        %v3437 = vpack.c.b16 %v2981, %v2977
        %v3438 = vpack.c.b16 %v2982, %v2978
        %v3439 = vpack.c.b16 %v2987, %v2983
        %v3440 = vpack.c.b16 %v2988, %v2984
        %v3441 = vpack.c.b16 %v2989, %v2985
        %v3442 = vpack.c.b16 %v2990, %v2986
        %v3443 = vpack.c.b16 %v2995, %v2991
        %v3444 = vpack.c.b16 %v2996, %v2992
        %v3445 = vpack.c.b16 %v2997, %v2993
        %v3446 = vpack.c.b16 %v2998, %v2994
        %v3447 = vpack.c.b16 %v3003, %v2999
        %v3448 = vpack.c.b16 %v3004, %v3000
        %v3449 = vpack.c.b16 %v3005, %v3001
        %v3450 = vpack.c.b16 %v3006, %v3002
        %v3451 = vpack.c.b16 %v3011, %v3007
        %v3452 = vpack.c.b16 %v3012, %v3008
        %v3453 = vpack.c.b16 %v3013, %v3009
        %v3454 = vpack.c.b16 %v3014, %v3010
        %v3455 = vpack.c.b16 %v3019, %v3015
        %v3456 = vpack.c.b16 %v3020, %v3016
        %v3457 = vpack.c.b16 %v3021, %v3017
        %v3458 = vpack.c.b16 %v3022, %v3018
        %v3459 = vpack.c.b16 %v3027, %v3023
        %v3460 = vpack.c.b16 %v3028, %v3024
        %v3461 = vpack.c.b16 %v3029, %v3025
        %v3462 = vpack.c.b16 %v3030, %v3026
        %v3463 = vpack.c.b16 %v3035, %v3031
        %v3464 = vpack.c.b16 %v3036, %v3032
        %v3465 = vpack.c.b16 %v3037, %v3033
        %v3466 = vpack.c.b16 %v3038, %v3034
        %v3467 = vpack.c.b16 %v3043, %v3039
        %v3468 = vpack.c.b16 %v3044, %v3040
        %v3469 = vpack.c.b16 %v3045, %v3041
        %v3470 = vpack.c.b16 %v3046, %v3042
        %v3471 = vpack.c.b16 %v3051, %v3047
        %v3472 = vpack.c.b16 %v3052, %v3048
        %v3473 = vpack.c.b16 %v3053, %v3049
        %v3474 = vpack.c.b16 %v3054, %v3050
        %v3475 = vpack.c.b16 %v3059, %v3055
        %v3476 = vpack.c.b16 %v3060, %v3056
        %v3477 = vpack.c.b16 %v3061, %v3057
        %v3478 = vpack.c.b16 %v3062, %v3058
        %v3479 = vpack.c.b16 %v3067, %v3063
        %v3480 = vpack.c.b16 %v3068, %v3064
        %v3481 = vpack.c.b16 %v3069, %v3065
        %v3482 = vpack.c.b16 %v3070, %v3066
        %v3483 = vpack.c.b16 %v3075, %v3071
        %v3484 = vpack.c.b16 %v3076, %v3072
        %v3485 = vpack.c.b16 %v3077, %v3073
        %v3486 = vpack.c.b16 %v3078, %v3074
        %v3487 = vpack.c.b16 %v3083, %v3079
        %v3488 = vpack.c.b16 %v3084, %v3080
        %v3489 = vpack.c.b16 %v3085, %v3081
        %v3490 = vpack.c.b16 %v3086, %v3082
        %v3491 = vpack.c.b16 %v3091, %v3087
        %v3492 = vpack.c.b16 %v3092, %v3088
        %v3493 = vpack.c.b16 %v3093, %v3089
        %v3494 = vpack.c.b16 %v3094, %v3090
        %v3495 = vpack.c.b16 %v3099, %v3095
        %v3496 = vpack.c.b16 %v3100, %v3096
        %v3497 = vpack.c.b16 %v3101, %v3097
        %v3498 = vpack.c.b16 %v3102, %v3098
        %v3499 = vpack.c.b16 %v3107, %v3103
        %v3500 = vpack.c.b16 %v3108, %v3104
        %v3501 = vpack.c.b16 %v3109, %v3105
        %v3502 = vpack.c.b16 %v3110, %v3106
        %v3503 = vpack.c.b16 %v3115, %v3111
        %v3504 = vpack.c.b16 %v3116, %v3112
        %v3505 = vpack.c.b16 %v3117, %v3113
        %v3506 = vpack.c.b16 %v3118, %v3114
        %v3507 = vpack.c.b16 %v3123, %v3119
        %v3508 = vpack.c.b16 %v3124, %v3120
        %v3509 = vpack.c.b16 %v3125, %v3121
        %v3510 = vpack.c.b16 %v3126, %v3122
        %v3511 = vpack.c.b16 %v3131, %v3127
        %v3512 = vpack.c.b16 %v3132, %v3128
        %v3513 = vpack.c.b16 %v3133, %v3129
        %v3514 = vpack.c.b16 %v3134, %v3130
        %v3515 = vpack.c.b16 %v3139, %v3135
        %v3516 = vpack.c.b16 %v3140, %v3136
        %v3517 = vpack.c.b16 %v3141, %v3137
        %v3518 = vpack.c.b16 %v3142, %v3138
        %v3519 = vpack.c.b16 %v3147, %v3143
        %v3520 = vpack.c.b16 %v3148, %v3144
        %v3521 = vpack.c.b16 %v3149, %v3145
        %v3522 = vpack.c.b16 %v3150, %v3146
        %v3523 = vpack.c.b16 %v3155, %v3151
        %v3524 = vpack.c.b16 %v3156, %v3152
        %v3525 = vpack.c.b16 %v3157, %v3153
        %v3526 = vpack.c.b16 %v3158, %v3154
        %v3527 = vpack.c.b16 %v3163, %v3159
        %v3528 = vpack.c.b16 %v3164, %v3160
        %v3529 = vpack.c.b16 %v3165, %v3161
        %v3530 = vpack.c.b16 %v3166, %v3162
        %v3531 = vpack.c.b16 %v3171, %v3167
        %v3532 = vpack.c.b16 %v3172, %v3168
        %v3533 = vpack.c.b16 %v3173, %v3169
        %v3534 = vpack.c.b16 %v3174, %v3170
        %v3535 = vpack.c.b16 %v3179, %v3175
        %v3536 = vpack.c.b16 %v3180, %v3176
        %v3537 = vpack.c.b16 %v3181, %v3177
        %v3538 = vpack.c.b16 %v3182, %v3178
        %v3539 = vpack.c.b16 %v3187, %v3183
        %v3540 = vpack.c.b16 %v3188, %v3184
        %v3541 = vpack.c.b16 %v3189, %v3185
        %v3542 = vpack.c.b16 %v3190, %v3186
        %v3543 = vpack.c.b16 %v3195, %v3191
        %v3544 = vpack.c.b16 %v3196, %v3192
        %v3545 = vpack.c.b16 %v3197, %v3193
        %v3546 = vpack.c.b16 %v3198, %v3194
        %v3547 = vpack.c.b16 %v3203, %v3199
        %v3548 = vpack.c.b16 %v3204, %v3200
        %v3549 = vpack.c.b16 %v3205, %v3201
        %v3550 = vpack.c.b16 %v3206, %v3202
        %v3551 = vpack.c.b16 %v3211, %v3207
        %v3552 = vpack.c.b16 %v3212, %v3208
        %v3553 = vpack.c.b16 %v3213, %v3209
        %v3554 = vpack.c.b16 %v3214, %v3210
        %v3555 = vpack.c.b16 %v3219, %v3215
        %v3556 = vpack.c.b16 %v3220, %v3216
        %v3557 = vpack.c.b16 %v3221, %v3217
        %v3558 = vpack.c.b16 %v3222, %v3218
        %v3559 = vpack.c.b16 %v3227, %v3223
        %v3560 = vpack.c.b16 %v3228, %v3224
        %v3561 = vpack.c.b16 %v3229, %v3225
        %v3562 = vpack.c.b16 %v3230, %v3226
        %v3563 = vpack.c.b16 %v3235, %v3231
        %v3564 = vpack.c.b16 %v3236, %v3232
        %v3565 = vpack.c.b16 %v3237, %v3233
        %v3566 = vpack.c.b16 %v3238, %v3234
        %v3567 = vpack.c.b16 %v3243, %v3239
        %v3568 = vpack.c.b16 %v3244, %v3240
        %v3569 = vpack.c.b16 %v3245, %v3241
        %v3570 = vpack.c.b16 %v3246, %v3242
        %v3571 = vpack.c.b16 %v3251, %v3247
        %v3572 = vpack.c.b16 %v3252, %v3248
        %v3573 = vpack.c.b16 %v3253, %v3249
        %v3574 = vpack.c.b16 %v3254, %v3250
        %v3575 = vpack.c.b16 %v3259, %v3255
        %v3576 = vpack.c.b16 %v3260, %v3256
        %v3577 = vpack.c.b16 %v3261, %v3257
        %v3578 = vpack.c.b16 %v3262, %v3258
        %v3579 = vpack.c.b16 %v3267, %v3263
        %v3580 = vpack.c.b16 %v3268, %v3264
        %v3581 = vpack.c.b16 %v3269, %v3265
        %v3582 = vpack.c.b16 %v3270, %v3266
        %v3583 = vpack.c.b16 %v3275, %v3271
        %v3584 = vpack.c.b16 %v3276, %v3272
        %v3585 = vpack.c.b16 %v3277, %v3273
        %v3586 = vpack.c.b16 %v3278, %v3274
        %v3587 = vpack.c.b16 %v3283, %v3279
        %v3588 = vpack.c.b16 %v3284, %v3280
        %v3589 = vpack.c.b16 %v3285, %v3281
        %v3590 = vpack.c.b16 %v3286, %v3282
        %v3591 = vpack.c.b16 %v3291, %v3287
        %v3592 = vpack.c.b16 %v3292, %v3288
        %v3593 = vpack.c.b16 %v3293, %v3289
        %v3594 = vpack.c.b16 %v3294, %v3290
        %v3595 = vpack.c.b16 %v3299, %v3295
        %v3596 = vpack.c.b16 %v3300, %v3296
        %v3597 = vpack.c.b16 %v3301, %v3297
        %v3598 = vpack.c.b16 %v3302, %v3298
        %v3599 = vpack.c.b16 %v3307, %v3303
        %v3600 = vpack.c.b16 %v3308, %v3304
        %v3601 = vpack.c.b16 %v3309, %v3305
        %v3602 = vpack.c.b16 %v3310, %v3306
        %v3603 = vpack.c.b16 %v3315, %v3311
        %v3604 = vpack.c.b16 %v3316, %v3312
        %v3605 = vpack.c.b16 %v3317, %v3313
        %v3606 = vpack.c.b16 %v3318, %v3314
        %v3607 = vpack.c.b16 %v3323, %v3319
        %v3608 = vpack.c.b16 %v3324, %v3320
        %v3609 = vpack.c.b16 %v3325, %v3321
        %v3610 = vpack.c.b16 %v3326, %v3322
        %v3611 = vpack.c.b16 %v3331, %v3327
        %v3612 = vpack.c.b16 %v3332, %v3328
        %v3613 = vpack.c.b16 %v3333, %v3329
        %v3614 = vpack.c.b16 %v3334, %v3330
        %v3615 = vpack.c.b16 %v3339, %v3335
        %v3616 = vpack.c.b16 %v3340, %v3336
        %v3617 = vpack.c.b16 %v3341, %v3337
        %v3618 = vpack.c.b16 %v3342, %v3338
        %v3619 = vpack.c.b16 %v3347, %v3343
        %v3620 = vpack.c.b16 %v3348, %v3344
        %v3621 = vpack.c.b16 %v3349, %v3345
        %v3622 = vpack.c.b16 %v3350, %v3346
        %v3623 = vpack.c.b16 %v3355, %v3351
        %v3624 = vpack.c.b16 %v3356, %v3352
        %v3625 = vpack.c.b16 %v3357, %v3353
        %v3626 = vpack.c.b16 %v3358, %v3354
        %v3627 = vpack.c.b16 %v3363, %v3359
        %v3628 = vpack.c.b16 %v3364, %v3360
        %v3629 = vpack.c.b16 %v3365, %v3361
        %v3630 = vpack.c.b16 %v3366, %v3362
        %v3631 = vpack.c.b16 %v3371, %v3367
        %v3632 = vpack.c.b16 %v3372, %v3368
        %v3633 = vpack.c.b16 %v3373, %v3369
        %v3634 = vpack.c.b16 %v3374, %v3370
        %v3635 = vpack.c.b16 %v3379, %v3375
        %v3636 = vpack.c.b16 %v3380, %v3376
        %v3637 = vpack.c.b16 %v3381, %v3377
        %v3638 = vpack.c.b16 %v3382, %v3378
        %3895 = vmatpush.bf16.msra.mxu0 %v3411
        %3896 = vmatpush.bf16.msra.mxu0 %v3407
        %3897 = vmatpush.bf16.msra.mxu0 %v3403
        %3898 = vmatpush.bf16.msra.mxu0 %v3399
        %3899 = vmatpush.bf16.msra.mxu0 %v3395
        %3900 = vmatpush.bf16.msra.mxu0 %v3391
        %3901 = vmatpush.bf16.msra.mxu0 %v3387
        %3902 = vmatpush.bf16.msra.mxu0 %v3383
        %3903 = vmatmul.bf16.gmra.mxu0 %v2285
        %v3904 = vpop.f32.mrf.mxu0
        %v3905 = vadd.f32 %v2607, %v3904
        %v3906 = vpop.f32.mrf.mxu0
        %v3907 = vadd.f32 %v2607, %v3906
        %3908 = vmatmul.bf16.gmra.mxu0 %v2293
        %v3909 = vpop.f32.mrf.mxu0
        %v3910 = vadd.f32 %v2607, %v3909
        %v3911 = vpop.f32.mrf.mxu0
        %v3912 = vadd.f32 %v2607, %v3911
        %3913 = vmatmul.bf16.gmra.mxu0 %v2301
        %v3914 = vpop.f32.mrf.mxu0
        %v3915 = vadd.f32 %v2607, %v3914
        %v3916 = vpop.f32.mrf.mxu0
        %v3917 = vadd.f32 %v2607, %v3916
        %3918 = vmatmul.bf16.gmra.mxu0 %v2309
        %v3919 = vpop.f32.mrf.mxu0
        %v3920 = vadd.f32 %v2607, %v3919
        %v3921 = vpop.f32.mrf.mxu0
        %v3922 = vadd.f32 %v2607, %v3921
        %3923 = vmatmul.bf16.gmra.mxu0 %v2317
        %v3924 = vpop.f32.mrf.mxu0
        %v3925 = vadd.f32 %v2607, %v3924
        %v3926 = vpop.f32.mrf.mxu0
        %v3927 = vadd.f32 %v2607, %v3926
        %3928 = vmatmul.bf16.gmra.mxu0 %v2325
        %v3929 = vpop.f32.mrf.mxu0
        %v3930 = vadd.f32 %v2607, %v3929
        %v3931 = vpop.f32.mrf.mxu0
        %v3932 = vadd.f32 %v2607, %v3931
        %3933 = vmatmul.bf16.gmra.mxu0 %v2333
        %v3934 = vpop.f32.mrf.mxu0
        %v3935 = vadd.f32 %v2607, %v3934
        %v3936 = vpop.f32.mrf.mxu0
        %v3937 = vadd.f32 %v2607, %v3936
        %3938 = vmatmul.bf16.gmra.mxu0 %v2341
        %v3939 = vpop.f32.mrf.mxu0
        %v3940 = vadd.f32 %v2607, %v3939
        %v3941 = vpop.f32.mrf.mxu0
        %v3942 = vadd.f32 %v2607, %v3941
        %3943 = vdwg.mxu0
        %3944 = vmatpush.bf16.msra.mxu0 %v3443
        %3945 = vmatpush.bf16.msra.mxu0 %v3439
        %3946 = vmatpush.bf16.msra.mxu0 %v3435
        %3947 = vmatpush.bf16.msra.mxu0 %v3431
        %3948 = vmatpush.bf16.msra.mxu0 %v3427
        %3949 = vmatpush.bf16.msra.mxu0 %v3423
        %3950 = vmatpush.bf16.msra.mxu0 %v3419
        %3951 = vmatpush.bf16.msra.mxu0 %v3415
        %3952 = vmatmul.bf16.gmra.mxu0 %v2286
        %v3953 = vpop.f32.mrf.mxu0
        %v3954 = vadd.f32 %v3905, %v3953
        %v3955 = vpop.f32.mrf.mxu0
        %v3956 = vadd.f32 %v3907, %v3955
        %3957 = vmatmul.bf16.gmra.mxu0 %v2294
        %v3958 = vpop.f32.mrf.mxu0
        %v3959 = vadd.f32 %v3910, %v3958
        %v3960 = vpop.f32.mrf.mxu0
        %v3961 = vadd.f32 %v3912, %v3960
        %3962 = vmatmul.bf16.gmra.mxu0 %v2302
        %v3963 = vpop.f32.mrf.mxu0
        %v3964 = vadd.f32 %v3915, %v3963
        %v3965 = vpop.f32.mrf.mxu0
        %v3966 = vadd.f32 %v3917, %v3965
        %3967 = vmatmul.bf16.gmra.mxu0 %v2310
        %v3968 = vpop.f32.mrf.mxu0
        %v3969 = vadd.f32 %v3920, %v3968
        %v3970 = vpop.f32.mrf.mxu0
        %v3971 = vadd.f32 %v3922, %v3970
        %3972 = vmatmul.bf16.gmra.mxu0 %v2318
        %v3973 = vpop.f32.mrf.mxu0
        %v3974 = vadd.f32 %v3925, %v3973
        %v3975 = vpop.f32.mrf.mxu0
        %v3976 = vadd.f32 %v3927, %v3975
        %3977 = vmatmul.bf16.gmra.mxu0 %v2326
        %v3978 = vpop.f32.mrf.mxu0
        %v3979 = vadd.f32 %v3930, %v3978
        %v3980 = vpop.f32.mrf.mxu0
        %v3981 = vadd.f32 %v3932, %v3980
        %3982 = vmatmul.bf16.gmra.mxu0 %v2334
        %v3983 = vpop.f32.mrf.mxu0
        %v3984 = vadd.f32 %v3935, %v3983
        %v3985 = vpop.f32.mrf.mxu0
        %v3986 = vadd.f32 %v3937, %v3985
        %3987 = vmatmul.bf16.gmra.mxu0 %v2342
        %v3988 = vpop.f32.mrf.mxu0
        %v3989 = vadd.f32 %v3940, %v3988
        %v3990 = vpop.f32.mrf.mxu0
        %v3991 = vadd.f32 %v3942, %v3990
        %3992 = vdwg.mxu0
        %3993 = vmatpush.bf16.msra.mxu0 %v3475
        %3994 = vmatpush.bf16.msra.mxu0 %v3471
        %3995 = vmatpush.bf16.msra.mxu0 %v3467
        %3996 = vmatpush.bf16.msra.mxu0 %v3463
        %3997 = vmatpush.bf16.msra.mxu0 %v3459
        %3998 = vmatpush.bf16.msra.mxu0 %v3455
        %3999 = vmatpush.bf16.msra.mxu0 %v3451
        %4000 = vmatpush.bf16.msra.mxu0 %v3447
        %4001 = vmatmul.bf16.gmra.mxu0 %v2287
        %v4002 = vpop.f32.mrf.mxu0
        %v4003 = vadd.f32 %v3954, %v4002
        %v4004 = vpop.f32.mrf.mxu0
        %v4005 = vadd.f32 %v3956, %v4004
        %4006 = vmatmul.bf16.gmra.mxu0 %v2295
        %v4007 = vpop.f32.mrf.mxu0
        %v4008 = vadd.f32 %v3959, %v4007
        %v4009 = vpop.f32.mrf.mxu0
        %v4010 = vadd.f32 %v3961, %v4009
        %4011 = vmatmul.bf16.gmra.mxu0 %v2303
        %v4012 = vpop.f32.mrf.mxu0
        %v4013 = vadd.f32 %v3964, %v4012
        %v4014 = vpop.f32.mrf.mxu0
        %v4015 = vadd.f32 %v3966, %v4014
        %4016 = vmatmul.bf16.gmra.mxu0 %v2311
        %v4017 = vpop.f32.mrf.mxu0
        %v4018 = vadd.f32 %v3969, %v4017
        %v4019 = vpop.f32.mrf.mxu0
        %v4020 = vadd.f32 %v3971, %v4019
        %4021 = vmatmul.bf16.gmra.mxu0 %v2319
        %v4022 = vpop.f32.mrf.mxu0
        %v4023 = vadd.f32 %v3974, %v4022
        %v4024 = vpop.f32.mrf.mxu0
        %v4025 = vadd.f32 %v3976, %v4024
        %4026 = vmatmul.bf16.gmra.mxu0 %v2327
        %v4027 = vpop.f32.mrf.mxu0
        %v4028 = vadd.f32 %v3979, %v4027
        %v4029 = vpop.f32.mrf.mxu0
        %v4030 = vadd.f32 %v3981, %v4029
        %4031 = vmatmul.bf16.gmra.mxu0 %v2335
        %v4032 = vpop.f32.mrf.mxu0
        %v4033 = vadd.f32 %v3984, %v4032
        %v4034 = vpop.f32.mrf.mxu0
        %v4035 = vadd.f32 %v3986, %v4034
        %4036 = vmatmul.bf16.gmra.mxu0 %v2343
        %v4037 = vpop.f32.mrf.mxu0
        %v4038 = vadd.f32 %v3989, %v4037
        %v4039 = vpop.f32.mrf.mxu0
        %v4040 = vadd.f32 %v3991, %v4039
        %4041 = vdwg.mxu0
        %4042 = vmatpush.bf16.msra.mxu0 %v3507
        %4043 = vmatpush.bf16.msra.mxu0 %v3503
        %4044 = vmatpush.bf16.msra.mxu0 %v3499
        %4045 = vmatpush.bf16.msra.mxu0 %v3495
        %4046 = vmatpush.bf16.msra.mxu0 %v3491
        %4047 = vmatpush.bf16.msra.mxu0 %v3487
        %4048 = vmatpush.bf16.msra.mxu0 %v3483
        %4049 = vmatpush.bf16.msra.mxu0 %v3479
        %4050 = vmatmul.bf16.gmra.mxu0 %v2288
        %v4051 = vpop.f32.mrf.mxu0
        %v4052 = vadd.f32 %v4003, %v4051
        %v4053 = vpop.f32.mrf.mxu0
        %v4054 = vadd.f32 %v4005, %v4053
        %4055 = vmatmul.bf16.gmra.mxu0 %v2296
        %v4056 = vpop.f32.mrf.mxu0
        %v4057 = vadd.f32 %v4008, %v4056
        %v4058 = vpop.f32.mrf.mxu0
        %v4059 = vadd.f32 %v4010, %v4058
        %4060 = vmatmul.bf16.gmra.mxu0 %v2304
        %v4061 = vpop.f32.mrf.mxu0
        %v4062 = vadd.f32 %v4013, %v4061
        %v4063 = vpop.f32.mrf.mxu0
        %v4064 = vadd.f32 %v4015, %v4063
        %4065 = vmatmul.bf16.gmra.mxu0 %v2312
        %v4066 = vpop.f32.mrf.mxu0
        %v4067 = vadd.f32 %v4018, %v4066
        %v4068 = vpop.f32.mrf.mxu0
        %v4069 = vadd.f32 %v4020, %v4068
        %4070 = vmatmul.bf16.gmra.mxu0 %v2320
        %v4071 = vpop.f32.mrf.mxu0
        %v4072 = vadd.f32 %v4023, %v4071
        %v4073 = vpop.f32.mrf.mxu0
        %v4074 = vadd.f32 %v4025, %v4073
        %4075 = vmatmul.bf16.gmra.mxu0 %v2328
        %v4076 = vpop.f32.mrf.mxu0
        %v4077 = vadd.f32 %v4028, %v4076
        %v4078 = vpop.f32.mrf.mxu0
        %v4079 = vadd.f32 %v4030, %v4078
        %4080 = vmatmul.bf16.gmra.mxu0 %v2336
        %v4081 = vpop.f32.mrf.mxu0
        %v4082 = vadd.f32 %v4033, %v4081
        %v4083 = vpop.f32.mrf.mxu0
        %v4084 = vadd.f32 %v4035, %v4083
        %4085 = vmatmul.bf16.gmra.mxu0 %v2344
        %v4086 = vpop.f32.mrf.mxu0
        %v4087 = vadd.f32 %v4038, %v4086
        %v4088 = vpop.f32.mrf.mxu0
        %v4089 = vadd.f32 %v4040, %v4088
        %4090 = vdwg.mxu0
        %4091 = vmatpush.bf16.msra.mxu0 %v3539
        %4092 = vmatpush.bf16.msra.mxu0 %v3535
        %4093 = vmatpush.bf16.msra.mxu0 %v3531
        %4094 = vmatpush.bf16.msra.mxu0 %v3527
        %4095 = vmatpush.bf16.msra.mxu0 %v3523
        %4096 = vmatpush.bf16.msra.mxu0 %v3519
        %4097 = vmatpush.bf16.msra.mxu0 %v3515
        %4098 = vmatpush.bf16.msra.mxu0 %v3511
        %4099 = vmatmul.bf16.gmra.mxu0 %v2289
        %v4100 = vpop.f32.mrf.mxu0
        %v4101 = vadd.f32 %v4052, %v4100
        %v4102 = vpop.f32.mrf.mxu0
        %v4103 = vadd.f32 %v4054, %v4102
        %4104 = vmatmul.bf16.gmra.mxu0 %v2297
        %v4105 = vpop.f32.mrf.mxu0
        %v4106 = vadd.f32 %v4057, %v4105
        %v4107 = vpop.f32.mrf.mxu0
        %v4108 = vadd.f32 %v4059, %v4107
        %4109 = vmatmul.bf16.gmra.mxu0 %v2305
        %v4110 = vpop.f32.mrf.mxu0
        %v4111 = vadd.f32 %v4062, %v4110
        %v4112 = vpop.f32.mrf.mxu0
        %v4113 = vadd.f32 %v4064, %v4112
        %4114 = vmatmul.bf16.gmra.mxu0 %v2313
        %v4115 = vpop.f32.mrf.mxu0
        %v4116 = vadd.f32 %v4067, %v4115
        %v4117 = vpop.f32.mrf.mxu0
        %v4118 = vadd.f32 %v4069, %v4117
        %4119 = vmatmul.bf16.gmra.mxu0 %v2321
        %v4120 = vpop.f32.mrf.mxu0
        %v4121 = vadd.f32 %v4072, %v4120
        %v4122 = vpop.f32.mrf.mxu0
        %v4123 = vadd.f32 %v4074, %v4122
        %4124 = vmatmul.bf16.gmra.mxu0 %v2329
        %v4125 = vpop.f32.mrf.mxu0
        %v4126 = vadd.f32 %v4077, %v4125
        %v4127 = vpop.f32.mrf.mxu0
        %v4128 = vadd.f32 %v4079, %v4127
        %4129 = vmatmul.bf16.gmra.mxu0 %v2337
        %v4130 = vpop.f32.mrf.mxu0
        %v4131 = vadd.f32 %v4082, %v4130
        %v4132 = vpop.f32.mrf.mxu0
        %v4133 = vadd.f32 %v4084, %v4132
        %4134 = vmatmul.bf16.gmra.mxu0 %v2345
        %v4135 = vpop.f32.mrf.mxu0
        %v4136 = vadd.f32 %v4087, %v4135
        %v4137 = vpop.f32.mrf.mxu0
        %v4138 = vadd.f32 %v4089, %v4137
        %4139 = vdwg.mxu0
        %4140 = vmatpush.bf16.msra.mxu0 %v3571
        %4141 = vmatpush.bf16.msra.mxu0 %v3567
        %4142 = vmatpush.bf16.msra.mxu0 %v3563
        %4143 = vmatpush.bf16.msra.mxu0 %v3559
        %4144 = vmatpush.bf16.msra.mxu0 %v3555
        %4145 = vmatpush.bf16.msra.mxu0 %v3551
        %4146 = vmatpush.bf16.msra.mxu0 %v3547
        %4147 = vmatpush.bf16.msra.mxu0 %v3543
        %4148 = vmatmul.bf16.gmra.mxu0 %v2290
        %v4149 = vpop.f32.mrf.mxu0
        %v4150 = vadd.f32 %v4101, %v4149
        %v4151 = vpop.f32.mrf.mxu0
        %v4152 = vadd.f32 %v4103, %v4151
        %4153 = vmatmul.bf16.gmra.mxu0 %v2298
        %v4154 = vpop.f32.mrf.mxu0
        %v4155 = vadd.f32 %v4106, %v4154
        %v4156 = vpop.f32.mrf.mxu0
        %v4157 = vadd.f32 %v4108, %v4156
        %4158 = vmatmul.bf16.gmra.mxu0 %v2306
        %v4159 = vpop.f32.mrf.mxu0
        %v4160 = vadd.f32 %v4111, %v4159
        %v4161 = vpop.f32.mrf.mxu0
        %v4162 = vadd.f32 %v4113, %v4161
        %4163 = vmatmul.bf16.gmra.mxu0 %v2314
        %v4164 = vpop.f32.mrf.mxu0
        %v4165 = vadd.f32 %v4116, %v4164
        %v4166 = vpop.f32.mrf.mxu0
        %v4167 = vadd.f32 %v4118, %v4166
        %4168 = vmatmul.bf16.gmra.mxu0 %v2322
        %v4169 = vpop.f32.mrf.mxu0
        %v4170 = vadd.f32 %v4121, %v4169
        %v4171 = vpop.f32.mrf.mxu0
        %v4172 = vadd.f32 %v4123, %v4171
        %4173 = vmatmul.bf16.gmra.mxu0 %v2330
        %v4174 = vpop.f32.mrf.mxu0
        %v4175 = vadd.f32 %v4126, %v4174
        %v4176 = vpop.f32.mrf.mxu0
        %v4177 = vadd.f32 %v4128, %v4176
        %4178 = vmatmul.bf16.gmra.mxu0 %v2338
        %v4179 = vpop.f32.mrf.mxu0
        %v4180 = vadd.f32 %v4131, %v4179
        %v4181 = vpop.f32.mrf.mxu0
        %v4182 = vadd.f32 %v4133, %v4181
        %4183 = vmatmul.bf16.gmra.mxu0 %v2346
        %v4184 = vpop.f32.mrf.mxu0
        %v4185 = vadd.f32 %v4136, %v4184
        %v4186 = vpop.f32.mrf.mxu0
        %v4187 = vadd.f32 %v4138, %v4186
        %4188 = vdwg.mxu0
        %4189 = vmatpush.bf16.msra.mxu0 %v3603
        %4190 = vmatpush.bf16.msra.mxu0 %v3599
        %4191 = vmatpush.bf16.msra.mxu0 %v3595
        %4192 = vmatpush.bf16.msra.mxu0 %v3591
        %4193 = vmatpush.bf16.msra.mxu0 %v3587
        %4194 = vmatpush.bf16.msra.mxu0 %v3583
        %4195 = vmatpush.bf16.msra.mxu0 %v3579
        %4196 = vmatpush.bf16.msra.mxu0 %v3575
        %4197 = vmatmul.bf16.gmra.mxu0 %v2291
        %v4198 = vpop.f32.mrf.mxu0
        %v4199 = vadd.f32 %v4150, %v4198
        %v4200 = vpop.f32.mrf.mxu0
        %v4201 = vadd.f32 %v4152, %v4200
        %4202 = vmatmul.bf16.gmra.mxu0 %v2299
        %v4203 = vpop.f32.mrf.mxu0
        %v4204 = vadd.f32 %v4155, %v4203
        %v4205 = vpop.f32.mrf.mxu0
        %v4206 = vadd.f32 %v4157, %v4205
        %4207 = vmatmul.bf16.gmra.mxu0 %v2307
        %v4208 = vpop.f32.mrf.mxu0
        %v4209 = vadd.f32 %v4160, %v4208
        %v4210 = vpop.f32.mrf.mxu0
        %v4211 = vadd.f32 %v4162, %v4210
        %4212 = vmatmul.bf16.gmra.mxu0 %v2315
        %v4213 = vpop.f32.mrf.mxu0
        %v4214 = vadd.f32 %v4165, %v4213
        %v4215 = vpop.f32.mrf.mxu0
        %v4216 = vadd.f32 %v4167, %v4215
        %4217 = vmatmul.bf16.gmra.mxu0 %v2323
        %v4218 = vpop.f32.mrf.mxu0
        %v4219 = vadd.f32 %v4170, %v4218
        %v4220 = vpop.f32.mrf.mxu0
        %v4221 = vadd.f32 %v4172, %v4220
        %4222 = vmatmul.bf16.gmra.mxu0 %v2331
        %v4223 = vpop.f32.mrf.mxu0
        %v4224 = vadd.f32 %v4175, %v4223
        %v4225 = vpop.f32.mrf.mxu0
        %v4226 = vadd.f32 %v4177, %v4225
        %4227 = vmatmul.bf16.gmra.mxu0 %v2339
        %v4228 = vpop.f32.mrf.mxu0
        %v4229 = vadd.f32 %v4180, %v4228
        %v4230 = vpop.f32.mrf.mxu0
        %v4231 = vadd.f32 %v4182, %v4230
        %4232 = vmatmul.bf16.gmra.mxu0 %v2347
        %v4233 = vpop.f32.mrf.mxu0
        %v4234 = vadd.f32 %v4185, %v4233
        %v4235 = vpop.f32.mrf.mxu0
        %v4236 = vadd.f32 %v4187, %v4235
        %4237 = vdwg.mxu0
        %4238 = vmatpush.bf16.msra.mxu0 %v3635
        %4239 = vmatpush.bf16.msra.mxu0 %v3631
        %4240 = vmatpush.bf16.msra.mxu0 %v3627
        %4241 = vmatpush.bf16.msra.mxu0 %v3623
        %4242 = vmatpush.bf16.msra.mxu0 %v3619
        %4243 = vmatpush.bf16.msra.mxu0 %v3615
        %4244 = vmatpush.bf16.msra.mxu0 %v3611
        %4245 = vmatpush.bf16.msra.mxu0 %v3607
        %4246 = vmatmul.bf16.gmra.mxu0 %v2292
        %v4247 = vpop.f32.mrf.mxu0
        %v4248 = vadd.f32 %v4199, %v4247
        %v4249 = vpop.f32.mrf.mxu0
        %v4250 = vadd.f32 %v4201, %v4249
        %4251 = vmatmul.bf16.gmra.mxu0 %v2300
        %v4252 = vpop.f32.mrf.mxu0
        %v4253 = vadd.f32 %v4204, %v4252
        %v4254 = vpop.f32.mrf.mxu0
        %v4255 = vadd.f32 %v4206, %v4254
        %4256 = vmatmul.bf16.gmra.mxu0 %v2308
        %v4257 = vpop.f32.mrf.mxu0
        %v4258 = vadd.f32 %v4209, %v4257
        %v4259 = vpop.f32.mrf.mxu0
        %v4260 = vadd.f32 %v4211, %v4259
        %4261 = vmatmul.bf16.gmra.mxu0 %v2316
        %v4262 = vpop.f32.mrf.mxu0
        %v4263 = vadd.f32 %v4214, %v4262
        %v4264 = vpop.f32.mrf.mxu0
        %v4265 = vadd.f32 %v4216, %v4264
        %4266 = vmatmul.bf16.gmra.mxu0 %v2324
        %v4267 = vpop.f32.mrf.mxu0
        %v4268 = vadd.f32 %v4219, %v4267
        %v4269 = vpop.f32.mrf.mxu0
        %v4270 = vadd.f32 %v4221, %v4269
        %4271 = vmatmul.bf16.gmra.mxu0 %v2332
        %v4272 = vpop.f32.mrf.mxu0
        %v4273 = vadd.f32 %v4224, %v4272
        %v4274 = vpop.f32.mrf.mxu0
        %v4275 = vadd.f32 %v4226, %v4274
        %4276 = vmatmul.bf16.gmra.mxu0 %v2340
        %v4277 = vpop.f32.mrf.mxu0
        %v4278 = vadd.f32 %v4229, %v4277
        %v4279 = vpop.f32.mrf.mxu0
        %v4280 = vadd.f32 %v4231, %v4279
        %4281 = vmatmul.bf16.gmra.mxu0 %v2348
        %v4282 = vpop.f32.mrf.mxu0
        %v4283 = vadd.f32 %v4234, %v4282
        %v4284 = vpop.f32.mrf.mxu0
        %v4285 = vadd.f32 %v4236, %v4284
        %4286 = vdwg.mxu0
        %4287 = vmatpush.bf16.msra.mxu0 %v3412
        %4288 = vmatpush.bf16.msra.mxu0 %v3408
        %4289 = vmatpush.bf16.msra.mxu0 %v3404
        %4290 = vmatpush.bf16.msra.mxu0 %v3400
        %4291 = vmatpush.bf16.msra.mxu0 %v3396
        %4292 = vmatpush.bf16.msra.mxu0 %v3392
        %4293 = vmatpush.bf16.msra.mxu0 %v3388
        %4294 = vmatpush.bf16.msra.mxu0 %v3384
        %4295 = vmatmul.bf16.gmra.mxu0 %v2285
        %v4296 = vpop.f32.mrf.mxu0
        %v4297 = vadd.f32 %v2608, %v4296
        %v4298 = vpop.f32.mrf.mxu0
        %v4299 = vadd.f32 %v2608, %v4298
        %4300 = vmatmul.bf16.gmra.mxu0 %v2293
        %v4301 = vpop.f32.mrf.mxu0
        %v4302 = vadd.f32 %v2608, %v4301
        %v4303 = vpop.f32.mrf.mxu0
        %v4304 = vadd.f32 %v2608, %v4303
        %4305 = vmatmul.bf16.gmra.mxu0 %v2301
        %v4306 = vpop.f32.mrf.mxu0
        %v4307 = vadd.f32 %v2608, %v4306
        %v4308 = vpop.f32.mrf.mxu0
        %v4309 = vadd.f32 %v2608, %v4308
        %4310 = vmatmul.bf16.gmra.mxu0 %v2309
        %v4311 = vpop.f32.mrf.mxu0
        %v4312 = vadd.f32 %v2608, %v4311
        %v4313 = vpop.f32.mrf.mxu0
        %v4314 = vadd.f32 %v2608, %v4313
        %4315 = vmatmul.bf16.gmra.mxu0 %v2317
        %v4316 = vpop.f32.mrf.mxu0
        %v4317 = vadd.f32 %v2608, %v4316
        %v4318 = vpop.f32.mrf.mxu0
        %v4319 = vadd.f32 %v2608, %v4318
        %4320 = vmatmul.bf16.gmra.mxu0 %v2325
        %v4321 = vpop.f32.mrf.mxu0
        %v4322 = vadd.f32 %v2608, %v4321
        %v4323 = vpop.f32.mrf.mxu0
        %v4324 = vadd.f32 %v2608, %v4323
        %4325 = vmatmul.bf16.gmra.mxu0 %v2333
        %v4326 = vpop.f32.mrf.mxu0
        %v4327 = vadd.f32 %v2608, %v4326
        %v4328 = vpop.f32.mrf.mxu0
        %v4329 = vadd.f32 %v2608, %v4328
        %4330 = vmatmul.bf16.gmra.mxu0 %v2341
        %v4331 = vpop.f32.mrf.mxu0
        %v4332 = vadd.f32 %v2608, %v4331
        %v4333 = vpop.f32.mrf.mxu0
        %v4334 = vadd.f32 %v2608, %v4333
        %4335 = vdwg.mxu0
        %4336 = vmatpush.bf16.msra.mxu0 %v3444
        %4337 = vmatpush.bf16.msra.mxu0 %v3440
        %4338 = vmatpush.bf16.msra.mxu0 %v3436
        %4339 = vmatpush.bf16.msra.mxu0 %v3432
        %4340 = vmatpush.bf16.msra.mxu0 %v3428
        %4341 = vmatpush.bf16.msra.mxu0 %v3424
        %4342 = vmatpush.bf16.msra.mxu0 %v3420
        %4343 = vmatpush.bf16.msra.mxu0 %v3416
        %4344 = vmatmul.bf16.gmra.mxu0 %v2286
        %v4345 = vpop.f32.mrf.mxu0
        %v4346 = vadd.f32 %v4297, %v4345
        %v4347 = vpop.f32.mrf.mxu0
        %v4348 = vadd.f32 %v4299, %v4347
        %4349 = vmatmul.bf16.gmra.mxu0 %v2294
        %v4350 = vpop.f32.mrf.mxu0
        %v4351 = vadd.f32 %v4302, %v4350
        %v4352 = vpop.f32.mrf.mxu0
        %v4353 = vadd.f32 %v4304, %v4352
        %4354 = vmatmul.bf16.gmra.mxu0 %v2302
        %v4355 = vpop.f32.mrf.mxu0
        %v4356 = vadd.f32 %v4307, %v4355
        %v4357 = vpop.f32.mrf.mxu0
        %v4358 = vadd.f32 %v4309, %v4357
        %4359 = vmatmul.bf16.gmra.mxu0 %v2310
        %v4360 = vpop.f32.mrf.mxu0
        %v4361 = vadd.f32 %v4312, %v4360
        %v4362 = vpop.f32.mrf.mxu0
        %v4363 = vadd.f32 %v4314, %v4362
        %4364 = vmatmul.bf16.gmra.mxu0 %v2318
        %v4365 = vpop.f32.mrf.mxu0
        %v4366 = vadd.f32 %v4317, %v4365
        %v4367 = vpop.f32.mrf.mxu0
        %v4368 = vadd.f32 %v4319, %v4367
        %4369 = vmatmul.bf16.gmra.mxu0 %v2326
        %v4370 = vpop.f32.mrf.mxu0
        %v4371 = vadd.f32 %v4322, %v4370
        %v4372 = vpop.f32.mrf.mxu0
        %v4373 = vadd.f32 %v4324, %v4372
        %4374 = vmatmul.bf16.gmra.mxu0 %v2334
        %v4375 = vpop.f32.mrf.mxu0
        %v4376 = vadd.f32 %v4327, %v4375
        %v4377 = vpop.f32.mrf.mxu0
        %v4378 = vadd.f32 %v4329, %v4377
        %4379 = vmatmul.bf16.gmra.mxu0 %v2342
        %v4380 = vpop.f32.mrf.mxu0
        %v4381 = vadd.f32 %v4332, %v4380
        %v4382 = vpop.f32.mrf.mxu0
        %v4383 = vadd.f32 %v4334, %v4382
        %4384 = vdwg.mxu0
        %4385 = vmatpush.bf16.msra.mxu0 %v3476
        %4386 = vmatpush.bf16.msra.mxu0 %v3472
        %4387 = vmatpush.bf16.msra.mxu0 %v3468
        %4388 = vmatpush.bf16.msra.mxu0 %v3464
        %4389 = vmatpush.bf16.msra.mxu0 %v3460
        %4390 = vmatpush.bf16.msra.mxu0 %v3456
        %4391 = vmatpush.bf16.msra.mxu0 %v3452
        %4392 = vmatpush.bf16.msra.mxu0 %v3448
        %4393 = vmatmul.bf16.gmra.mxu0 %v2287
        %v4394 = vpop.f32.mrf.mxu0
        %v4395 = vadd.f32 %v4346, %v4394
        %v4396 = vpop.f32.mrf.mxu0
        %v4397 = vadd.f32 %v4348, %v4396
        %4398 = vmatmul.bf16.gmra.mxu0 %v2295
        %v4399 = vpop.f32.mrf.mxu0
        %v4400 = vadd.f32 %v4351, %v4399
        %v4401 = vpop.f32.mrf.mxu0
        %v4402 = vadd.f32 %v4353, %v4401
        %4403 = vmatmul.bf16.gmra.mxu0 %v2303
        %v4404 = vpop.f32.mrf.mxu0
        %v4405 = vadd.f32 %v4356, %v4404
        %v4406 = vpop.f32.mrf.mxu0
        %v4407 = vadd.f32 %v4358, %v4406
        %4408 = vmatmul.bf16.gmra.mxu0 %v2311
        %v4409 = vpop.f32.mrf.mxu0
        %v4410 = vadd.f32 %v4361, %v4409
        %v4411 = vpop.f32.mrf.mxu0
        %v4412 = vadd.f32 %v4363, %v4411
        %4413 = vmatmul.bf16.gmra.mxu0 %v2319
        %v4414 = vpop.f32.mrf.mxu0
        %v4415 = vadd.f32 %v4366, %v4414
        %v4416 = vpop.f32.mrf.mxu0
        %v4417 = vadd.f32 %v4368, %v4416
        %4418 = vmatmul.bf16.gmra.mxu0 %v2327
        %v4419 = vpop.f32.mrf.mxu0
        %v4420 = vadd.f32 %v4371, %v4419
        %v4421 = vpop.f32.mrf.mxu0
        %v4422 = vadd.f32 %v4373, %v4421
        %4423 = vmatmul.bf16.gmra.mxu0 %v2335
        %v4424 = vpop.f32.mrf.mxu0
        %v4425 = vadd.f32 %v4376, %v4424
        %v4426 = vpop.f32.mrf.mxu0
        %v4427 = vadd.f32 %v4378, %v4426
        %4428 = vmatmul.bf16.gmra.mxu0 %v2343
        %v4429 = vpop.f32.mrf.mxu0
        %v4430 = vadd.f32 %v4381, %v4429
        %v4431 = vpop.f32.mrf.mxu0
        %v4432 = vadd.f32 %v4383, %v4431
        %4433 = vdwg.mxu0
        %4434 = vmatpush.bf16.msra.mxu0 %v3508
        %4435 = vmatpush.bf16.msra.mxu0 %v3504
        %4436 = vmatpush.bf16.msra.mxu0 %v3500
        %4437 = vmatpush.bf16.msra.mxu0 %v3496
        %4438 = vmatpush.bf16.msra.mxu0 %v3492
        %4439 = vmatpush.bf16.msra.mxu0 %v3488
        %4440 = vmatpush.bf16.msra.mxu0 %v3484
        %4441 = vmatpush.bf16.msra.mxu0 %v3480
        %4442 = vmatmul.bf16.gmra.mxu0 %v2288
        %v4443 = vpop.f32.mrf.mxu0
        %v4444 = vadd.f32 %v4395, %v4443
        %v4445 = vpop.f32.mrf.mxu0
        %v4446 = vadd.f32 %v4397, %v4445
        %4447 = vmatmul.bf16.gmra.mxu0 %v2296
        %v4448 = vpop.f32.mrf.mxu0
        %v4449 = vadd.f32 %v4400, %v4448
        %v4450 = vpop.f32.mrf.mxu0
        %v4451 = vadd.f32 %v4402, %v4450
        %4452 = vmatmul.bf16.gmra.mxu0 %v2304
        %v4453 = vpop.f32.mrf.mxu0
        %v4454 = vadd.f32 %v4405, %v4453
        %v4455 = vpop.f32.mrf.mxu0
        %v4456 = vadd.f32 %v4407, %v4455
        %4457 = vmatmul.bf16.gmra.mxu0 %v2312
        %v4458 = vpop.f32.mrf.mxu0
        %v4459 = vadd.f32 %v4410, %v4458
        %v4460 = vpop.f32.mrf.mxu0
        %v4461 = vadd.f32 %v4412, %v4460
        %4462 = vmatmul.bf16.gmra.mxu0 %v2320
        %v4463 = vpop.f32.mrf.mxu0
        %v4464 = vadd.f32 %v4415, %v4463
        %v4465 = vpop.f32.mrf.mxu0
        %v4466 = vadd.f32 %v4417, %v4465
        %4467 = vmatmul.bf16.gmra.mxu0 %v2328
        %v4468 = vpop.f32.mrf.mxu0
        %v4469 = vadd.f32 %v4420, %v4468
        %v4470 = vpop.f32.mrf.mxu0
        %v4471 = vadd.f32 %v4422, %v4470
        %4472 = vmatmul.bf16.gmra.mxu0 %v2336
        %v4473 = vpop.f32.mrf.mxu0
        %v4474 = vadd.f32 %v4425, %v4473
        %v4475 = vpop.f32.mrf.mxu0
        %v4476 = vadd.f32 %v4427, %v4475
        %4477 = vmatmul.bf16.gmra.mxu0 %v2344
        %v4478 = vpop.f32.mrf.mxu0
        %v4479 = vadd.f32 %v4430, %v4478
        %v4480 = vpop.f32.mrf.mxu0
        %v4481 = vadd.f32 %v4432, %v4480
        %4482 = vdwg.mxu0
        %4483 = vmatpush.bf16.msra.mxu0 %v3540
        %4484 = vmatpush.bf16.msra.mxu0 %v3536
        %4485 = vmatpush.bf16.msra.mxu0 %v3532
        %4486 = vmatpush.bf16.msra.mxu0 %v3528
        %4487 = vmatpush.bf16.msra.mxu0 %v3524
        %4488 = vmatpush.bf16.msra.mxu0 %v3520
        %4489 = vmatpush.bf16.msra.mxu0 %v3516
        %4490 = vmatpush.bf16.msra.mxu0 %v3512
        %4491 = vmatmul.bf16.gmra.mxu0 %v2289
        %v4492 = vpop.f32.mrf.mxu0
        %v4493 = vadd.f32 %v4444, %v4492
        %v4494 = vpop.f32.mrf.mxu0
        %v4495 = vadd.f32 %v4446, %v4494
        %4496 = vmatmul.bf16.gmra.mxu0 %v2297
        %v4497 = vpop.f32.mrf.mxu0
        %v4498 = vadd.f32 %v4449, %v4497
        %v4499 = vpop.f32.mrf.mxu0
        %v4500 = vadd.f32 %v4451, %v4499
        %4501 = vmatmul.bf16.gmra.mxu0 %v2305
        %v4502 = vpop.f32.mrf.mxu0
        %v4503 = vadd.f32 %v4454, %v4502
        %v4504 = vpop.f32.mrf.mxu0
        %v4505 = vadd.f32 %v4456, %v4504
        %4506 = vmatmul.bf16.gmra.mxu0 %v2313
        %v4507 = vpop.f32.mrf.mxu0
        %v4508 = vadd.f32 %v4459, %v4507
        %v4509 = vpop.f32.mrf.mxu0
        %v4510 = vadd.f32 %v4461, %v4509
        %4511 = vmatmul.bf16.gmra.mxu0 %v2321
        %v4512 = vpop.f32.mrf.mxu0
        %v4513 = vadd.f32 %v4464, %v4512
        %v4514 = vpop.f32.mrf.mxu0
        %v4515 = vadd.f32 %v4466, %v4514
        %4516 = vmatmul.bf16.gmra.mxu0 %v2329
        %v4517 = vpop.f32.mrf.mxu0
        %v4518 = vadd.f32 %v4469, %v4517
        %v4519 = vpop.f32.mrf.mxu0
        %v4520 = vadd.f32 %v4471, %v4519
        %4521 = vmatmul.bf16.gmra.mxu0 %v2337
        %v4522 = vpop.f32.mrf.mxu0
        %v4523 = vadd.f32 %v4474, %v4522
        %v4524 = vpop.f32.mrf.mxu0
        %v4525 = vadd.f32 %v4476, %v4524
        %4526 = vmatmul.bf16.gmra.mxu0 %v2345
        %v4527 = vpop.f32.mrf.mxu0
        %v4528 = vadd.f32 %v4479, %v4527
        %v4529 = vpop.f32.mrf.mxu0
        %v4530 = vadd.f32 %v4481, %v4529
        %4531 = vdwg.mxu0
        %4532 = vmatpush.bf16.msra.mxu0 %v3572
        %4533 = vmatpush.bf16.msra.mxu0 %v3568
        %4534 = vmatpush.bf16.msra.mxu0 %v3564
        %4535 = vmatpush.bf16.msra.mxu0 %v3560
        %4536 = vmatpush.bf16.msra.mxu0 %v3556
        %4537 = vmatpush.bf16.msra.mxu0 %v3552
        %4538 = vmatpush.bf16.msra.mxu0 %v3548
        %4539 = vmatpush.bf16.msra.mxu0 %v3544
        %4540 = vmatmul.bf16.gmra.mxu0 %v2290
        %v4541 = vpop.f32.mrf.mxu0
        %v4542 = vadd.f32 %v4493, %v4541
        %v4543 = vpop.f32.mrf.mxu0
        %v4544 = vadd.f32 %v4495, %v4543
        %4545 = vmatmul.bf16.gmra.mxu0 %v2298
        %v4546 = vpop.f32.mrf.mxu0
        %v4547 = vadd.f32 %v4498, %v4546
        %v4548 = vpop.f32.mrf.mxu0
        %v4549 = vadd.f32 %v4500, %v4548
        %4550 = vmatmul.bf16.gmra.mxu0 %v2306
        %v4551 = vpop.f32.mrf.mxu0
        %v4552 = vadd.f32 %v4503, %v4551
        %v4553 = vpop.f32.mrf.mxu0
        %v4554 = vadd.f32 %v4505, %v4553
        %4555 = vmatmul.bf16.gmra.mxu0 %v2314
        %v4556 = vpop.f32.mrf.mxu0
        %v4557 = vadd.f32 %v4508, %v4556
        %v4558 = vpop.f32.mrf.mxu0
        %v4559 = vadd.f32 %v4510, %v4558
        %4560 = vmatmul.bf16.gmra.mxu0 %v2322
        %v4561 = vpop.f32.mrf.mxu0
        %v4562 = vadd.f32 %v4513, %v4561
        %v4563 = vpop.f32.mrf.mxu0
        %v4564 = vadd.f32 %v4515, %v4563
        %4565 = vmatmul.bf16.gmra.mxu0 %v2330
        %v4566 = vpop.f32.mrf.mxu0
        %v4567 = vadd.f32 %v4518, %v4566
        %v4568 = vpop.f32.mrf.mxu0
        %v4569 = vadd.f32 %v4520, %v4568
        %4570 = vmatmul.bf16.gmra.mxu0 %v2338
        %v4571 = vpop.f32.mrf.mxu0
        %v4572 = vadd.f32 %v4523, %v4571
        %v4573 = vpop.f32.mrf.mxu0
        %v4574 = vadd.f32 %v4525, %v4573
        %4575 = vmatmul.bf16.gmra.mxu0 %v2346
        %v4576 = vpop.f32.mrf.mxu0
        %v4577 = vadd.f32 %v4528, %v4576
        %v4578 = vpop.f32.mrf.mxu0
        %v4579 = vadd.f32 %v4530, %v4578
        %4580 = vdwg.mxu0
        %4581 = vmatpush.bf16.msra.mxu0 %v3604
        %4582 = vmatpush.bf16.msra.mxu0 %v3600
        %4583 = vmatpush.bf16.msra.mxu0 %v3596
        %4584 = vmatpush.bf16.msra.mxu0 %v3592
        %4585 = vmatpush.bf16.msra.mxu0 %v3588
        %4586 = vmatpush.bf16.msra.mxu0 %v3584
        %4587 = vmatpush.bf16.msra.mxu0 %v3580
        %4588 = vmatpush.bf16.msra.mxu0 %v3576
        %4589 = vmatmul.bf16.gmra.mxu0 %v2291
        %v4590 = vpop.f32.mrf.mxu0
        %v4591 = vadd.f32 %v4542, %v4590
        %v4592 = vpop.f32.mrf.mxu0
        %v4593 = vadd.f32 %v4544, %v4592
        %4594 = vmatmul.bf16.gmra.mxu0 %v2299
        %v4595 = vpop.f32.mrf.mxu0
        %v4596 = vadd.f32 %v4547, %v4595
        %v4597 = vpop.f32.mrf.mxu0
        %v4598 = vadd.f32 %v4549, %v4597
        %4599 = vmatmul.bf16.gmra.mxu0 %v2307
        %v4600 = vpop.f32.mrf.mxu0
        %v4601 = vadd.f32 %v4552, %v4600
        %v4602 = vpop.f32.mrf.mxu0
        %v4603 = vadd.f32 %v4554, %v4602
        %4604 = vmatmul.bf16.gmra.mxu0 %v2315
        %v4605 = vpop.f32.mrf.mxu0
        %v4606 = vadd.f32 %v4557, %v4605
        %v4607 = vpop.f32.mrf.mxu0
        %v4608 = vadd.f32 %v4559, %v4607
        %4609 = vmatmul.bf16.gmra.mxu0 %v2323
        %v4610 = vpop.f32.mrf.mxu0
        %v4611 = vadd.f32 %v4562, %v4610
        %v4612 = vpop.f32.mrf.mxu0
        %v4613 = vadd.f32 %v4564, %v4612
        %4614 = vmatmul.bf16.gmra.mxu0 %v2331
        %v4615 = vpop.f32.mrf.mxu0
        %v4616 = vadd.f32 %v4567, %v4615
        %v4617 = vpop.f32.mrf.mxu0
        %v4618 = vadd.f32 %v4569, %v4617
        %4619 = vmatmul.bf16.gmra.mxu0 %v2339
        %v4620 = vpop.f32.mrf.mxu0
        %v4621 = vadd.f32 %v4572, %v4620
        %v4622 = vpop.f32.mrf.mxu0
        %v4623 = vadd.f32 %v4574, %v4622
        %4624 = vmatmul.bf16.gmra.mxu0 %v2347
        %v4625 = vpop.f32.mrf.mxu0
        %v4626 = vadd.f32 %v4577, %v4625
        %v4627 = vpop.f32.mrf.mxu0
        %v4628 = vadd.f32 %v4579, %v4627
        %4629 = vdwg.mxu0
        %4630 = vmatpush.bf16.msra.mxu0 %v3636
        %4631 = vmatpush.bf16.msra.mxu0 %v3632
        %4632 = vmatpush.bf16.msra.mxu0 %v3628
        %4633 = vmatpush.bf16.msra.mxu0 %v3624
        %4634 = vmatpush.bf16.msra.mxu0 %v3620
        %4635 = vmatpush.bf16.msra.mxu0 %v3616
        %4636 = vmatpush.bf16.msra.mxu0 %v3612
        %4637 = vmatpush.bf16.msra.mxu0 %v3608
        %4638 = vmatmul.bf16.gmra.mxu0 %v2292
        %v4639 = vpop.f32.mrf.mxu0
        %v4640 = vadd.f32 %v4591, %v4639
        %v4641 = vpop.f32.mrf.mxu0
        %v4642 = vadd.f32 %v4593, %v4641
        %4643 = vmatmul.bf16.gmra.mxu0 %v2300
        %v4644 = vpop.f32.mrf.mxu0
        %v4645 = vadd.f32 %v4596, %v4644
        %v4646 = vpop.f32.mrf.mxu0
        %v4647 = vadd.f32 %v4598, %v4646
        %4648 = vmatmul.bf16.gmra.mxu0 %v2308
        %v4649 = vpop.f32.mrf.mxu0
        %v4650 = vadd.f32 %v4601, %v4649
        %v4651 = vpop.f32.mrf.mxu0
        %v4652 = vadd.f32 %v4603, %v4651
        %4653 = vmatmul.bf16.gmra.mxu0 %v2316
        %v4654 = vpop.f32.mrf.mxu0
        %v4655 = vadd.f32 %v4606, %v4654
        %v4656 = vpop.f32.mrf.mxu0
        %v4657 = vadd.f32 %v4608, %v4656
        %4658 = vmatmul.bf16.gmra.mxu0 %v2324
        %v4659 = vpop.f32.mrf.mxu0
        %v4660 = vadd.f32 %v4611, %v4659
        %v4661 = vpop.f32.mrf.mxu0
        %v4662 = vadd.f32 %v4613, %v4661
        %4663 = vmatmul.bf16.gmra.mxu0 %v2332
        %v4664 = vpop.f32.mrf.mxu0
        %v4665 = vadd.f32 %v4616, %v4664
        %v4666 = vpop.f32.mrf.mxu0
        %v4667 = vadd.f32 %v4618, %v4666
        %4668 = vmatmul.bf16.gmra.mxu0 %v2340
        %v4669 = vpop.f32.mrf.mxu0
        %v4670 = vadd.f32 %v4621, %v4669
        %v4671 = vpop.f32.mrf.mxu0
        %v4672 = vadd.f32 %v4623, %v4671
        %4673 = vmatmul.bf16.gmra.mxu0 %v2348
        %v4674 = vpop.f32.mrf.mxu0
        %v4675 = vadd.f32 %v4626, %v4674
        %v4676 = vpop.f32.mrf.mxu0
        %v4677 = vadd.f32 %v4628, %v4676
        %4678 = vdwg.mxu0
        %4679 = vmatpush.bf16.msra.mxu0 %v3413
        %4680 = vmatpush.bf16.msra.mxu0 %v3409
        %4681 = vmatpush.bf16.msra.mxu0 %v3405
        %4682 = vmatpush.bf16.msra.mxu0 %v3401
        %4683 = vmatpush.bf16.msra.mxu0 %v3397
        %4684 = vmatpush.bf16.msra.mxu0 %v3393
        %4685 = vmatpush.bf16.msra.mxu0 %v3389
        %4686 = vmatpush.bf16.msra.mxu0 %v3385
        %4687 = vmatmul.bf16.gmra.mxu0 %v2285
        %v4688 = vpop.f32.mrf.mxu0
        %v4689 = vadd.f32 %v2609, %v4688
        %v4690 = vpop.f32.mrf.mxu0
        %v4691 = vadd.f32 %v2609, %v4690
        %4692 = vmatmul.bf16.gmra.mxu0 %v2293
        %v4693 = vpop.f32.mrf.mxu0
        %v4694 = vadd.f32 %v2609, %v4693
        %v4695 = vpop.f32.mrf.mxu0
        %v4696 = vadd.f32 %v2609, %v4695
        %4697 = vmatmul.bf16.gmra.mxu0 %v2301
        %v4698 = vpop.f32.mrf.mxu0
        %v4699 = vadd.f32 %v2609, %v4698
        %v4700 = vpop.f32.mrf.mxu0
        %v4701 = vadd.f32 %v2609, %v4700
        %4702 = vmatmul.bf16.gmra.mxu0 %v2309
        %v4703 = vpop.f32.mrf.mxu0
        %v4704 = vadd.f32 %v2609, %v4703
        %v4705 = vpop.f32.mrf.mxu0
        %v4706 = vadd.f32 %v2609, %v4705
        %4707 = vmatmul.bf16.gmra.mxu0 %v2317
        %v4708 = vpop.f32.mrf.mxu0
        %v4709 = vadd.f32 %v2609, %v4708
        %v4710 = vpop.f32.mrf.mxu0
        %v4711 = vadd.f32 %v2609, %v4710
        %4712 = vmatmul.bf16.gmra.mxu0 %v2325
        %v4713 = vpop.f32.mrf.mxu0
        %v4714 = vadd.f32 %v2609, %v4713
        %v4715 = vpop.f32.mrf.mxu0
        %v4716 = vadd.f32 %v2609, %v4715
        %4717 = vmatmul.bf16.gmra.mxu0 %v2333
        %v4718 = vpop.f32.mrf.mxu0
        %v4719 = vadd.f32 %v2609, %v4718
        %v4720 = vpop.f32.mrf.mxu0
        %v4721 = vadd.f32 %v2609, %v4720
        %4722 = vmatmul.bf16.gmra.mxu0 %v2341
        %v4723 = vpop.f32.mrf.mxu0
        %v4724 = vadd.f32 %v2609, %v4723
        %v4725 = vpop.f32.mrf.mxu0
        %v4726 = vadd.f32 %v2609, %v4725
        %4727 = vdwg.mxu0
        %4728 = vmatpush.bf16.msra.mxu0 %v3445
        %4729 = vmatpush.bf16.msra.mxu0 %v3441
        %4730 = vmatpush.bf16.msra.mxu0 %v3437
        %4731 = vmatpush.bf16.msra.mxu0 %v3433
        %4732 = vmatpush.bf16.msra.mxu0 %v3429
        %4733 = vmatpush.bf16.msra.mxu0 %v3425
        %4734 = vmatpush.bf16.msra.mxu0 %v3421
        %4735 = vmatpush.bf16.msra.mxu0 %v3417
        %4736 = vmatmul.bf16.gmra.mxu0 %v2286
        %v4737 = vpop.f32.mrf.mxu0
        %v4738 = vadd.f32 %v4689, %v4737
        %v4739 = vpop.f32.mrf.mxu0
        %v4740 = vadd.f32 %v4691, %v4739
        %4741 = vmatmul.bf16.gmra.mxu0 %v2294
        %v4742 = vpop.f32.mrf.mxu0
        %v4743 = vadd.f32 %v4694, %v4742
        %v4744 = vpop.f32.mrf.mxu0
        %v4745 = vadd.f32 %v4696, %v4744
        %4746 = vmatmul.bf16.gmra.mxu0 %v2302
        %v4747 = vpop.f32.mrf.mxu0
        %v4748 = vadd.f32 %v4699, %v4747
        %v4749 = vpop.f32.mrf.mxu0
        %v4750 = vadd.f32 %v4701, %v4749
        %4751 = vmatmul.bf16.gmra.mxu0 %v2310
        %v4752 = vpop.f32.mrf.mxu0
        %v4753 = vadd.f32 %v4704, %v4752
        %v4754 = vpop.f32.mrf.mxu0
        %v4755 = vadd.f32 %v4706, %v4754
        %4756 = vmatmul.bf16.gmra.mxu0 %v2318
        %v4757 = vpop.f32.mrf.mxu0
        %v4758 = vadd.f32 %v4709, %v4757
        %v4759 = vpop.f32.mrf.mxu0
        %v4760 = vadd.f32 %v4711, %v4759
        %4761 = vmatmul.bf16.gmra.mxu0 %v2326
        %v4762 = vpop.f32.mrf.mxu0
        %v4763 = vadd.f32 %v4714, %v4762
        %v4764 = vpop.f32.mrf.mxu0
        %v4765 = vadd.f32 %v4716, %v4764
        %4766 = vmatmul.bf16.gmra.mxu0 %v2334
        %v4767 = vpop.f32.mrf.mxu0
        %v4768 = vadd.f32 %v4719, %v4767
        %v4769 = vpop.f32.mrf.mxu0
        %v4770 = vadd.f32 %v4721, %v4769
        %4771 = vmatmul.bf16.gmra.mxu0 %v2342
        %v4772 = vpop.f32.mrf.mxu0
        %v4773 = vadd.f32 %v4724, %v4772
        %v4774 = vpop.f32.mrf.mxu0
        %v4775 = vadd.f32 %v4726, %v4774
        %4776 = vdwg.mxu0
        %4777 = vmatpush.bf16.msra.mxu0 %v3477
        %4778 = vmatpush.bf16.msra.mxu0 %v3473
        %4779 = vmatpush.bf16.msra.mxu0 %v3469
        %4780 = vmatpush.bf16.msra.mxu0 %v3465
        %4781 = vmatpush.bf16.msra.mxu0 %v3461
        %4782 = vmatpush.bf16.msra.mxu0 %v3457
        %4783 = vmatpush.bf16.msra.mxu0 %v3453
        %4784 = vmatpush.bf16.msra.mxu0 %v3449
        %4785 = vmatmul.bf16.gmra.mxu0 %v2287
        %v4786 = vpop.f32.mrf.mxu0
        %v4787 = vadd.f32 %v4738, %v4786
        %v4788 = vpop.f32.mrf.mxu0
        %v4789 = vadd.f32 %v4740, %v4788
        %4790 = vmatmul.bf16.gmra.mxu0 %v2295
        %v4791 = vpop.f32.mrf.mxu0
        %v4792 = vadd.f32 %v4743, %v4791
        %v4793 = vpop.f32.mrf.mxu0
        %v4794 = vadd.f32 %v4745, %v4793
        %4795 = vmatmul.bf16.gmra.mxu0 %v2303
        %v4796 = vpop.f32.mrf.mxu0
        %v4797 = vadd.f32 %v4748, %v4796
        %v4798 = vpop.f32.mrf.mxu0
        %v4799 = vadd.f32 %v4750, %v4798
        %4800 = vmatmul.bf16.gmra.mxu0 %v2311
        %v4801 = vpop.f32.mrf.mxu0
        %v4802 = vadd.f32 %v4753, %v4801
        %v4803 = vpop.f32.mrf.mxu0
        %v4804 = vadd.f32 %v4755, %v4803
        %4805 = vmatmul.bf16.gmra.mxu0 %v2319
        %v4806 = vpop.f32.mrf.mxu0
        %v4807 = vadd.f32 %v4758, %v4806
        %v4808 = vpop.f32.mrf.mxu0
        %v4809 = vadd.f32 %v4760, %v4808
        %4810 = vmatmul.bf16.gmra.mxu0 %v2327
        %v4811 = vpop.f32.mrf.mxu0
        %v4812 = vadd.f32 %v4763, %v4811
        %v4813 = vpop.f32.mrf.mxu0
        %v4814 = vadd.f32 %v4765, %v4813
        %4815 = vmatmul.bf16.gmra.mxu0 %v2335
        %v4816 = vpop.f32.mrf.mxu0
        %v4817 = vadd.f32 %v4768, %v4816
        %v4818 = vpop.f32.mrf.mxu0
        %v4819 = vadd.f32 %v4770, %v4818
        %4820 = vmatmul.bf16.gmra.mxu0 %v2343
        %v4821 = vpop.f32.mrf.mxu0
        %v4822 = vadd.f32 %v4773, %v4821
        %v4823 = vpop.f32.mrf.mxu0
        %v4824 = vadd.f32 %v4775, %v4823
        %4825 = vdwg.mxu0
        %4826 = vmatpush.bf16.msra.mxu0 %v3509
        %4827 = vmatpush.bf16.msra.mxu0 %v3505
        %4828 = vmatpush.bf16.msra.mxu0 %v3501
        %4829 = vmatpush.bf16.msra.mxu0 %v3497
        %4830 = vmatpush.bf16.msra.mxu0 %v3493
        %4831 = vmatpush.bf16.msra.mxu0 %v3489
        %4832 = vmatpush.bf16.msra.mxu0 %v3485
        %4833 = vmatpush.bf16.msra.mxu0 %v3481
        %4834 = vmatmul.bf16.gmra.mxu0 %v2288
        %v4835 = vpop.f32.mrf.mxu0
        %v4836 = vadd.f32 %v4787, %v4835
        %v4837 = vpop.f32.mrf.mxu0
        %v4838 = vadd.f32 %v4789, %v4837
        %4839 = vmatmul.bf16.gmra.mxu0 %v2296
        %v4840 = vpop.f32.mrf.mxu0
        %v4841 = vadd.f32 %v4792, %v4840
        %v4842 = vpop.f32.mrf.mxu0
        %v4843 = vadd.f32 %v4794, %v4842
        %4844 = vmatmul.bf16.gmra.mxu0 %v2304
        %v4845 = vpop.f32.mrf.mxu0
        %v4846 = vadd.f32 %v4797, %v4845
        %v4847 = vpop.f32.mrf.mxu0
        %v4848 = vadd.f32 %v4799, %v4847
        %4849 = vmatmul.bf16.gmra.mxu0 %v2312
        %v4850 = vpop.f32.mrf.mxu0
        %v4851 = vadd.f32 %v4802, %v4850
        %v4852 = vpop.f32.mrf.mxu0
        %v4853 = vadd.f32 %v4804, %v4852
        %4854 = vmatmul.bf16.gmra.mxu0 %v2320
        %v4855 = vpop.f32.mrf.mxu0
        %v4856 = vadd.f32 %v4807, %v4855
        %v4857 = vpop.f32.mrf.mxu0
        %v4858 = vadd.f32 %v4809, %v4857
        %4859 = vmatmul.bf16.gmra.mxu0 %v2328
        %v4860 = vpop.f32.mrf.mxu0
        %v4861 = vadd.f32 %v4812, %v4860
        %v4862 = vpop.f32.mrf.mxu0
        %v4863 = vadd.f32 %v4814, %v4862
        %4864 = vmatmul.bf16.gmra.mxu0 %v2336
        %v4865 = vpop.f32.mrf.mxu0
        %v4866 = vadd.f32 %v4817, %v4865
        %v4867 = vpop.f32.mrf.mxu0
        %v4868 = vadd.f32 %v4819, %v4867
        %4869 = vmatmul.bf16.gmra.mxu0 %v2344
        %v4870 = vpop.f32.mrf.mxu0
        %v4871 = vadd.f32 %v4822, %v4870
        %v4872 = vpop.f32.mrf.mxu0
        %v4873 = vadd.f32 %v4824, %v4872
        %4874 = vdwg.mxu0
        %4875 = vmatpush.bf16.msra.mxu0 %v3541
        %4876 = vmatpush.bf16.msra.mxu0 %v3537
        %4877 = vmatpush.bf16.msra.mxu0 %v3533
        %4878 = vmatpush.bf16.msra.mxu0 %v3529
        %4879 = vmatpush.bf16.msra.mxu0 %v3525
        %4880 = vmatpush.bf16.msra.mxu0 %v3521
        %4881 = vmatpush.bf16.msra.mxu0 %v3517
        %4882 = vmatpush.bf16.msra.mxu0 %v3513
        %4883 = vmatmul.bf16.gmra.mxu0 %v2289
        %v4884 = vpop.f32.mrf.mxu0
        %v4885 = vadd.f32 %v4836, %v4884
        %v4886 = vpop.f32.mrf.mxu0
        %v4887 = vadd.f32 %v4838, %v4886
        %4888 = vmatmul.bf16.gmra.mxu0 %v2297
        %v4889 = vpop.f32.mrf.mxu0
        %v4890 = vadd.f32 %v4841, %v4889
        %v4891 = vpop.f32.mrf.mxu0
        %v4892 = vadd.f32 %v4843, %v4891
        %4893 = vmatmul.bf16.gmra.mxu0 %v2305
        %v4894 = vpop.f32.mrf.mxu0
        %v4895 = vadd.f32 %v4846, %v4894
        %v4896 = vpop.f32.mrf.mxu0
        %v4897 = vadd.f32 %v4848, %v4896
        %4898 = vmatmul.bf16.gmra.mxu0 %v2313
        %v4899 = vpop.f32.mrf.mxu0
        %v4900 = vadd.f32 %v4851, %v4899
        %v4901 = vpop.f32.mrf.mxu0
        %v4902 = vadd.f32 %v4853, %v4901
        %4903 = vmatmul.bf16.gmra.mxu0 %v2321
        %v4904 = vpop.f32.mrf.mxu0
        %v4905 = vadd.f32 %v4856, %v4904
        %v4906 = vpop.f32.mrf.mxu0
        %v4907 = vadd.f32 %v4858, %v4906
        %4908 = vmatmul.bf16.gmra.mxu0 %v2329
        %v4909 = vpop.f32.mrf.mxu0
        %v4910 = vadd.f32 %v4861, %v4909
        %v4911 = vpop.f32.mrf.mxu0
        %v4912 = vadd.f32 %v4863, %v4911
        %4913 = vmatmul.bf16.gmra.mxu0 %v2337
        %v4914 = vpop.f32.mrf.mxu0
        %v4915 = vadd.f32 %v4866, %v4914
        %v4916 = vpop.f32.mrf.mxu0
        %v4917 = vadd.f32 %v4868, %v4916
        %4918 = vmatmul.bf16.gmra.mxu0 %v2345
        %v4919 = vpop.f32.mrf.mxu0
        %v4920 = vadd.f32 %v4871, %v4919
        %v4921 = vpop.f32.mrf.mxu0
        %v4922 = vadd.f32 %v4873, %v4921
        %4923 = vdwg.mxu0
        %4924 = vmatpush.bf16.msra.mxu0 %v3573
        %4925 = vmatpush.bf16.msra.mxu0 %v3569
        %4926 = vmatpush.bf16.msra.mxu0 %v3565
        %4927 = vmatpush.bf16.msra.mxu0 %v3561
        %4928 = vmatpush.bf16.msra.mxu0 %v3557
        %4929 = vmatpush.bf16.msra.mxu0 %v3553
        %4930 = vmatpush.bf16.msra.mxu0 %v3549
        %4931 = vmatpush.bf16.msra.mxu0 %v3545
        %4932 = vmatmul.bf16.gmra.mxu0 %v2290
        %v4933 = vpop.f32.mrf.mxu0
        %v4934 = vadd.f32 %v4885, %v4933
        %v4935 = vpop.f32.mrf.mxu0
        %v4936 = vadd.f32 %v4887, %v4935
        %4937 = vmatmul.bf16.gmra.mxu0 %v2298
        %v4938 = vpop.f32.mrf.mxu0
        %v4939 = vadd.f32 %v4890, %v4938
        %v4940 = vpop.f32.mrf.mxu0
        %v4941 = vadd.f32 %v4892, %v4940
        %4942 = vmatmul.bf16.gmra.mxu0 %v2306
        %v4943 = vpop.f32.mrf.mxu0
        %v4944 = vadd.f32 %v4895, %v4943
        %v4945 = vpop.f32.mrf.mxu0
        %v4946 = vadd.f32 %v4897, %v4945
        %4947 = vmatmul.bf16.gmra.mxu0 %v2314
        %v4948 = vpop.f32.mrf.mxu0
        %v4949 = vadd.f32 %v4900, %v4948
        %v4950 = vpop.f32.mrf.mxu0
        %v4951 = vadd.f32 %v4902, %v4950
        %4952 = vmatmul.bf16.gmra.mxu0 %v2322
        %v4953 = vpop.f32.mrf.mxu0
        %v4954 = vadd.f32 %v4905, %v4953
        %v4955 = vpop.f32.mrf.mxu0
        %v4956 = vadd.f32 %v4907, %v4955
        %4957 = vmatmul.bf16.gmra.mxu0 %v2330
        %v4958 = vpop.f32.mrf.mxu0
        %v4959 = vadd.f32 %v4910, %v4958
        %v4960 = vpop.f32.mrf.mxu0
        %v4961 = vadd.f32 %v4912, %v4960
        %4962 = vmatmul.bf16.gmra.mxu0 %v2338
        %v4963 = vpop.f32.mrf.mxu0
        %v4964 = vadd.f32 %v4915, %v4963
        %v4965 = vpop.f32.mrf.mxu0
        %v4966 = vadd.f32 %v4917, %v4965
        %4967 = vmatmul.bf16.gmra.mxu0 %v2346
        %v4968 = vpop.f32.mrf.mxu0
        %v4969 = vadd.f32 %v4920, %v4968
        %v4970 = vpop.f32.mrf.mxu0
        %v4971 = vadd.f32 %v4922, %v4970
        %4972 = vdwg.mxu0
        %4973 = vmatpush.bf16.msra.mxu0 %v3605
        %4974 = vmatpush.bf16.msra.mxu0 %v3601
        %4975 = vmatpush.bf16.msra.mxu0 %v3597
        %4976 = vmatpush.bf16.msra.mxu0 %v3593
        %4977 = vmatpush.bf16.msra.mxu0 %v3589
        %4978 = vmatpush.bf16.msra.mxu0 %v3585
        %4979 = vmatpush.bf16.msra.mxu0 %v3581
        %4980 = vmatpush.bf16.msra.mxu0 %v3577
        %4981 = vmatmul.bf16.gmra.mxu0 %v2291
        %v4982 = vpop.f32.mrf.mxu0
        %v4983 = vadd.f32 %v4934, %v4982
        %v4984 = vpop.f32.mrf.mxu0
        %v4985 = vadd.f32 %v4936, %v4984
        %4986 = vmatmul.bf16.gmra.mxu0 %v2299
        %v4987 = vpop.f32.mrf.mxu0
        %v4988 = vadd.f32 %v4939, %v4987
        %v4989 = vpop.f32.mrf.mxu0
        %v4990 = vadd.f32 %v4941, %v4989
        %4991 = vmatmul.bf16.gmra.mxu0 %v2307
        %v4992 = vpop.f32.mrf.mxu0
        %v4993 = vadd.f32 %v4944, %v4992
        %v4994 = vpop.f32.mrf.mxu0
        %v4995 = vadd.f32 %v4946, %v4994
        %4996 = vmatmul.bf16.gmra.mxu0 %v2315
        %v4997 = vpop.f32.mrf.mxu0
        %v4998 = vadd.f32 %v4949, %v4997
        %v4999 = vpop.f32.mrf.mxu0
        %v5000 = vadd.f32 %v4951, %v4999
        %5001 = vmatmul.bf16.gmra.mxu0 %v2323
        %v5002 = vpop.f32.mrf.mxu0
        %v5003 = vadd.f32 %v4954, %v5002
        %v5004 = vpop.f32.mrf.mxu0
        %v5005 = vadd.f32 %v4956, %v5004
        %5006 = vmatmul.bf16.gmra.mxu0 %v2331
        %v5007 = vpop.f32.mrf.mxu0
        %v5008 = vadd.f32 %v4959, %v5007
        %v5009 = vpop.f32.mrf.mxu0
        %v5010 = vadd.f32 %v4961, %v5009
        %5011 = vmatmul.bf16.gmra.mxu0 %v2339
        %v5012 = vpop.f32.mrf.mxu0
        %v5013 = vadd.f32 %v4964, %v5012
        %v5014 = vpop.f32.mrf.mxu0
        %v5015 = vadd.f32 %v4966, %v5014
        %5016 = vmatmul.bf16.gmra.mxu0 %v2347
        %v5017 = vpop.f32.mrf.mxu0
        %v5018 = vadd.f32 %v4969, %v5017
        %v5019 = vpop.f32.mrf.mxu0
        %v5020 = vadd.f32 %v4971, %v5019
        %5021 = vdwg.mxu0
        %5022 = vmatpush.bf16.msra.mxu0 %v3637
        %5023 = vmatpush.bf16.msra.mxu0 %v3633
        %5024 = vmatpush.bf16.msra.mxu0 %v3629
        %5025 = vmatpush.bf16.msra.mxu0 %v3625
        %5026 = vmatpush.bf16.msra.mxu0 %v3621
        %5027 = vmatpush.bf16.msra.mxu0 %v3617
        %5028 = vmatpush.bf16.msra.mxu0 %v3613
        %5029 = vmatpush.bf16.msra.mxu0 %v3609
        %5030 = vmatmul.bf16.gmra.mxu0 %v2292
        %v5031 = vpop.f32.mrf.mxu0
        %v5032 = vadd.f32 %v4983, %v5031
        %v5033 = vpop.f32.mrf.mxu0
        %v5034 = vadd.f32 %v4985, %v5033
        %5035 = vmatmul.bf16.gmra.mxu0 %v2300
        %v5036 = vpop.f32.mrf.mxu0
        %v5037 = vadd.f32 %v4988, %v5036
        %v5038 = vpop.f32.mrf.mxu0
        %v5039 = vadd.f32 %v4990, %v5038
        %5040 = vmatmul.bf16.gmra.mxu0 %v2308
        %v5041 = vpop.f32.mrf.mxu0
        %v5042 = vadd.f32 %v4993, %v5041
        %v5043 = vpop.f32.mrf.mxu0
        %v5044 = vadd.f32 %v4995, %v5043
        %5045 = vmatmul.bf16.gmra.mxu0 %v2316
        %v5046 = vpop.f32.mrf.mxu0
        %v5047 = vadd.f32 %v4998, %v5046
        %v5048 = vpop.f32.mrf.mxu0
        %v5049 = vadd.f32 %v5000, %v5048
        %5050 = vmatmul.bf16.gmra.mxu0 %v2324
        %v5051 = vpop.f32.mrf.mxu0
        %v5052 = vadd.f32 %v5003, %v5051
        %v5053 = vpop.f32.mrf.mxu0
        %v5054 = vadd.f32 %v5005, %v5053
        %5055 = vmatmul.bf16.gmra.mxu0 %v2332
        %v5056 = vpop.f32.mrf.mxu0
        %v5057 = vadd.f32 %v5008, %v5056
        %v5058 = vpop.f32.mrf.mxu0
        %v5059 = vadd.f32 %v5010, %v5058
        %5060 = vmatmul.bf16.gmra.mxu0 %v2340
        %v5061 = vpop.f32.mrf.mxu0
        %v5062 = vadd.f32 %v5013, %v5061
        %v5063 = vpop.f32.mrf.mxu0
        %v5064 = vadd.f32 %v5015, %v5063
        %5065 = vmatmul.bf16.gmra.mxu0 %v2348
        %v5066 = vpop.f32.mrf.mxu0
        %v5067 = vadd.f32 %v5018, %v5066
        %v5068 = vpop.f32.mrf.mxu0
        %v5069 = vadd.f32 %v5020, %v5068
        %5070 = vdwg.mxu0
        %5071 = vmatpush.bf16.msra.mxu0 %v3414
        %5072 = vmatpush.bf16.msra.mxu0 %v3410
        %5073 = vmatpush.bf16.msra.mxu0 %v3406
        %5074 = vmatpush.bf16.msra.mxu0 %v3402
        %5075 = vmatpush.bf16.msra.mxu0 %v3398
        %5076 = vmatpush.bf16.msra.mxu0 %v3394
        %5077 = vmatpush.bf16.msra.mxu0 %v3390
        %5078 = vmatpush.bf16.msra.mxu0 %v3386
        %5079 = vmatmul.bf16.gmra.mxu0 %v2285
        %v5080 = vpop.f32.mrf.mxu0
        %v5081 = vadd.f32 %v2610, %v5080
        %v5082 = vpop.f32.mrf.mxu0
        %v5083 = vadd.f32 %v2610, %v5082
        %5084 = vmatmul.bf16.gmra.mxu0 %v2293
        %v5085 = vpop.f32.mrf.mxu0
        %v5086 = vadd.f32 %v2610, %v5085
        %v5087 = vpop.f32.mrf.mxu0
        %v5088 = vadd.f32 %v2610, %v5087
        %5089 = vmatmul.bf16.gmra.mxu0 %v2301
        %v5090 = vpop.f32.mrf.mxu0
        %v5091 = vadd.f32 %v2610, %v5090
        %v5092 = vpop.f32.mrf.mxu0
        %v5093 = vadd.f32 %v2610, %v5092
        %5094 = vmatmul.bf16.gmra.mxu0 %v2309
        %v5095 = vpop.f32.mrf.mxu0
        %v5096 = vadd.f32 %v2610, %v5095
        %v5097 = vpop.f32.mrf.mxu0
        %v5098 = vadd.f32 %v2610, %v5097
        %5099 = vmatmul.bf16.gmra.mxu0 %v2317
        %v5100 = vpop.f32.mrf.mxu0
        %v5101 = vadd.f32 %v2610, %v5100
        %v5102 = vpop.f32.mrf.mxu0
        %v5103 = vadd.f32 %v2610, %v5102
        %5104 = vmatmul.bf16.gmra.mxu0 %v2325
        %v5105 = vpop.f32.mrf.mxu0
        %v5106 = vadd.f32 %v2610, %v5105
        %v5107 = vpop.f32.mrf.mxu0
        %v5108 = vadd.f32 %v2610, %v5107
        %5109 = vmatmul.bf16.gmra.mxu0 %v2333
        %v5110 = vpop.f32.mrf.mxu0
        %v5111 = vadd.f32 %v2610, %v5110
        %v5112 = vpop.f32.mrf.mxu0
        %v5113 = vadd.f32 %v2610, %v5112
        %5114 = vmatmul.bf16.gmra.mxu0 %v2341
        %v5115 = vpop.f32.mrf.mxu0
        %v5116 = vadd.f32 %v2610, %v5115
        %v5117 = vpop.f32.mrf.mxu0
        %v5118 = vadd.f32 %v2610, %v5117
        %5119 = vdwg.mxu0
        %5120 = vmatpush.bf16.msra.mxu0 %v3446
        %5121 = vmatpush.bf16.msra.mxu0 %v3442
        %5122 = vmatpush.bf16.msra.mxu0 %v3438
        %5123 = vmatpush.bf16.msra.mxu0 %v3434
        %5124 = vmatpush.bf16.msra.mxu0 %v3430
        %5125 = vmatpush.bf16.msra.mxu0 %v3426
        %5126 = vmatpush.bf16.msra.mxu0 %v3422
        %5127 = vmatpush.bf16.msra.mxu0 %v3418
        %5128 = vmatmul.bf16.gmra.mxu0 %v2286
        %v5129 = vpop.f32.mrf.mxu0
        %v5130 = vadd.f32 %v5081, %v5129
        %v5131 = vpop.f32.mrf.mxu0
        %v5132 = vadd.f32 %v5083, %v5131
        %5133 = vmatmul.bf16.gmra.mxu0 %v2294
        %v5134 = vpop.f32.mrf.mxu0
        %v5135 = vadd.f32 %v5086, %v5134
        %v5136 = vpop.f32.mrf.mxu0
        %v5137 = vadd.f32 %v5088, %v5136
        %5138 = vmatmul.bf16.gmra.mxu0 %v2302
        %v5139 = vpop.f32.mrf.mxu0
        %v5140 = vadd.f32 %v5091, %v5139
        %v5141 = vpop.f32.mrf.mxu0
        %v5142 = vadd.f32 %v5093, %v5141
        %5143 = vmatmul.bf16.gmra.mxu0 %v2310
        %v5144 = vpop.f32.mrf.mxu0
        %v5145 = vadd.f32 %v5096, %v5144
        %v5146 = vpop.f32.mrf.mxu0
        %v5147 = vadd.f32 %v5098, %v5146
        %5148 = vmatmul.bf16.gmra.mxu0 %v2318
        %v5149 = vpop.f32.mrf.mxu0
        %v5150 = vadd.f32 %v5101, %v5149
        %v5151 = vpop.f32.mrf.mxu0
        %v5152 = vadd.f32 %v5103, %v5151
        %5153 = vmatmul.bf16.gmra.mxu0 %v2326
        %v5154 = vpop.f32.mrf.mxu0
        %v5155 = vadd.f32 %v5106, %v5154
        %v5156 = vpop.f32.mrf.mxu0
        %v5157 = vadd.f32 %v5108, %v5156
        %5158 = vmatmul.bf16.gmra.mxu0 %v2334
        %v5159 = vpop.f32.mrf.mxu0
        %v5160 = vadd.f32 %v5111, %v5159
        %v5161 = vpop.f32.mrf.mxu0
        %v5162 = vadd.f32 %v5113, %v5161
        %5163 = vmatmul.bf16.gmra.mxu0 %v2342
        %v5164 = vpop.f32.mrf.mxu0
        %v5165 = vadd.f32 %v5116, %v5164
        %v5166 = vpop.f32.mrf.mxu0
        %v5167 = vadd.f32 %v5118, %v5166
        %5168 = vdwg.mxu0
        %5169 = vmatpush.bf16.msra.mxu0 %v3478
        %5170 = vmatpush.bf16.msra.mxu0 %v3474
        %5171 = vmatpush.bf16.msra.mxu0 %v3470
        %5172 = vmatpush.bf16.msra.mxu0 %v3466
        %5173 = vmatpush.bf16.msra.mxu0 %v3462
        %5174 = vmatpush.bf16.msra.mxu0 %v3458
        %5175 = vmatpush.bf16.msra.mxu0 %v3454
        %5176 = vmatpush.bf16.msra.mxu0 %v3450
        %5177 = vmatmul.bf16.gmra.mxu0 %v2287
        %v5178 = vpop.f32.mrf.mxu0
        %v5179 = vadd.f32 %v5130, %v5178
        %v5180 = vpop.f32.mrf.mxu0
        %v5181 = vadd.f32 %v5132, %v5180
        %5182 = vmatmul.bf16.gmra.mxu0 %v2295
        %v5183 = vpop.f32.mrf.mxu0
        %v5184 = vadd.f32 %v5135, %v5183
        %v5185 = vpop.f32.mrf.mxu0
        %v5186 = vadd.f32 %v5137, %v5185
        %5187 = vmatmul.bf16.gmra.mxu0 %v2303
        %v5188 = vpop.f32.mrf.mxu0
        %v5189 = vadd.f32 %v5140, %v5188
        %v5190 = vpop.f32.mrf.mxu0
        %v5191 = vadd.f32 %v5142, %v5190
        %5192 = vmatmul.bf16.gmra.mxu0 %v2311
        %v5193 = vpop.f32.mrf.mxu0
        %v5194 = vadd.f32 %v5145, %v5193
        %v5195 = vpop.f32.mrf.mxu0
        %v5196 = vadd.f32 %v5147, %v5195
        %5197 = vmatmul.bf16.gmra.mxu0 %v2319
        %v5198 = vpop.f32.mrf.mxu0
        %v5199 = vadd.f32 %v5150, %v5198
        %v5200 = vpop.f32.mrf.mxu0
        %v5201 = vadd.f32 %v5152, %v5200
        %5202 = vmatmul.bf16.gmra.mxu0 %v2327
        %v5203 = vpop.f32.mrf.mxu0
        %v5204 = vadd.f32 %v5155, %v5203
        %v5205 = vpop.f32.mrf.mxu0
        %v5206 = vadd.f32 %v5157, %v5205
        %5207 = vmatmul.bf16.gmra.mxu0 %v2335
        %v5208 = vpop.f32.mrf.mxu0
        %v5209 = vadd.f32 %v5160, %v5208
        %v5210 = vpop.f32.mrf.mxu0
        %v5211 = vadd.f32 %v5162, %v5210
        %5212 = vmatmul.bf16.gmra.mxu0 %v2343
        %v5213 = vpop.f32.mrf.mxu0
        %v5214 = vadd.f32 %v5165, %v5213
        %v5215 = vpop.f32.mrf.mxu0
        %v5216 = vadd.f32 %v5167, %v5215
        %5217 = vdwg.mxu0
        %5218 = vmatpush.bf16.msra.mxu0 %v3510
        %5219 = vmatpush.bf16.msra.mxu0 %v3506
        %5220 = vmatpush.bf16.msra.mxu0 %v3502
        %5221 = vmatpush.bf16.msra.mxu0 %v3498
        %5222 = vmatpush.bf16.msra.mxu0 %v3494
        %5223 = vmatpush.bf16.msra.mxu0 %v3490
        %5224 = vmatpush.bf16.msra.mxu0 %v3486
        %5225 = vmatpush.bf16.msra.mxu0 %v3482
        %5226 = vmatmul.bf16.gmra.mxu0 %v2288
        %v5227 = vpop.f32.mrf.mxu0
        %v5228 = vadd.f32 %v5179, %v5227
        %v5229 = vpop.f32.mrf.mxu0
        %v5230 = vadd.f32 %v5181, %v5229
        %5231 = vmatmul.bf16.gmra.mxu0 %v2296
        %v5232 = vpop.f32.mrf.mxu0
        %v5233 = vadd.f32 %v5184, %v5232
        %v5234 = vpop.f32.mrf.mxu0
        %v5235 = vadd.f32 %v5186, %v5234
        %5236 = vmatmul.bf16.gmra.mxu0 %v2304
        %v5237 = vpop.f32.mrf.mxu0
        %v5238 = vadd.f32 %v5189, %v5237
        %v5239 = vpop.f32.mrf.mxu0
        %v5240 = vadd.f32 %v5191, %v5239
        %5241 = vmatmul.bf16.gmra.mxu0 %v2312
        %v5242 = vpop.f32.mrf.mxu0
        %v5243 = vadd.f32 %v5194, %v5242
        %v5244 = vpop.f32.mrf.mxu0
        %v5245 = vadd.f32 %v5196, %v5244
        %5246 = vmatmul.bf16.gmra.mxu0 %v2320
        %v5247 = vpop.f32.mrf.mxu0
        %v5248 = vadd.f32 %v5199, %v5247
        %v5249 = vpop.f32.mrf.mxu0
        %v5250 = vadd.f32 %v5201, %v5249
        %5251 = vmatmul.bf16.gmra.mxu0 %v2328
        %v5252 = vpop.f32.mrf.mxu0
        %v5253 = vadd.f32 %v5204, %v5252
        %v5254 = vpop.f32.mrf.mxu0
        %v5255 = vadd.f32 %v5206, %v5254
        %5256 = vmatmul.bf16.gmra.mxu0 %v2336
        %v5257 = vpop.f32.mrf.mxu0
        %v5258 = vadd.f32 %v5209, %v5257
        %v5259 = vpop.f32.mrf.mxu0
        %v5260 = vadd.f32 %v5211, %v5259
        %5261 = vmatmul.bf16.gmra.mxu0 %v2344
        %v5262 = vpop.f32.mrf.mxu0
        %v5263 = vadd.f32 %v5214, %v5262
        %v5264 = vpop.f32.mrf.mxu0
        %v5265 = vadd.f32 %v5216, %v5264
        %5266 = vdwg.mxu0
        %5267 = vmatpush.bf16.msra.mxu0 %v3542
        %5268 = vmatpush.bf16.msra.mxu0 %v3538
        %5269 = vmatpush.bf16.msra.mxu0 %v3534
        %5270 = vmatpush.bf16.msra.mxu0 %v3530
        %5271 = vmatpush.bf16.msra.mxu0 %v3526
        %5272 = vmatpush.bf16.msra.mxu0 %v3522
        %5273 = vmatpush.bf16.msra.mxu0 %v3518
        %5274 = vmatpush.bf16.msra.mxu0 %v3514
        %5275 = vmatmul.bf16.gmra.mxu0 %v2289
        %v5276 = vpop.f32.mrf.mxu0
        %v5277 = vadd.f32 %v5228, %v5276
        %v5278 = vpop.f32.mrf.mxu0
        %v5279 = vadd.f32 %v5230, %v5278
        %5280 = vmatmul.bf16.gmra.mxu0 %v2297
        %v5281 = vpop.f32.mrf.mxu0
        %v5282 = vadd.f32 %v5233, %v5281
        %v5283 = vpop.f32.mrf.mxu0
        %v5284 = vadd.f32 %v5235, %v5283
        %5285 = vmatmul.bf16.gmra.mxu0 %v2305
        %v5286 = vpop.f32.mrf.mxu0
        %v5287 = vadd.f32 %v5238, %v5286
        %v5288 = vpop.f32.mrf.mxu0
        %v5289 = vadd.f32 %v5240, %v5288
        %5290 = vmatmul.bf16.gmra.mxu0 %v2313
        %v5291 = vpop.f32.mrf.mxu0
        %v5292 = vadd.f32 %v5243, %v5291
        %v5293 = vpop.f32.mrf.mxu0
        %v5294 = vadd.f32 %v5245, %v5293
        %5295 = vmatmul.bf16.gmra.mxu0 %v2321
        %v5296 = vpop.f32.mrf.mxu0
        %v5297 = vadd.f32 %v5248, %v5296
        %v5298 = vpop.f32.mrf.mxu0
        %v5299 = vadd.f32 %v5250, %v5298
        %5300 = vmatmul.bf16.gmra.mxu0 %v2329
        %v5301 = vpop.f32.mrf.mxu0
        %v5302 = vadd.f32 %v5253, %v5301
        %v5303 = vpop.f32.mrf.mxu0
        %v5304 = vadd.f32 %v5255, %v5303
        %5305 = vmatmul.bf16.gmra.mxu0 %v2337
        %v5306 = vpop.f32.mrf.mxu0
        %v5307 = vadd.f32 %v5258, %v5306
        %v5308 = vpop.f32.mrf.mxu0
        %v5309 = vadd.f32 %v5260, %v5308
        %5310 = vmatmul.bf16.gmra.mxu0 %v2345
        %v5311 = vpop.f32.mrf.mxu0
        %v5312 = vadd.f32 %v5263, %v5311
        %v5313 = vpop.f32.mrf.mxu0
        %v5314 = vadd.f32 %v5265, %v5313
        %5315 = vdwg.mxu0
        %5316 = vmatpush.bf16.msra.mxu0 %v3574
        %5317 = vmatpush.bf16.msra.mxu0 %v3570
        %5318 = vmatpush.bf16.msra.mxu0 %v3566
        %5319 = vmatpush.bf16.msra.mxu0 %v3562
        %5320 = vmatpush.bf16.msra.mxu0 %v3558
        %5321 = vmatpush.bf16.msra.mxu0 %v3554
        %5322 = vmatpush.bf16.msra.mxu0 %v3550
        %5323 = vmatpush.bf16.msra.mxu0 %v3546
        %5324 = vmatmul.bf16.gmra.mxu0 %v2290
        %v5325 = vpop.f32.mrf.mxu0
        %v5326 = vadd.f32 %v5277, %v5325
        %v5327 = vpop.f32.mrf.mxu0
        %v5328 = vadd.f32 %v5279, %v5327
        %5329 = vmatmul.bf16.gmra.mxu0 %v2298
        %v5330 = vpop.f32.mrf.mxu0
        %v5331 = vadd.f32 %v5282, %v5330
        %v5332 = vpop.f32.mrf.mxu0
        %v5333 = vadd.f32 %v5284, %v5332
        %5334 = vmatmul.bf16.gmra.mxu0 %v2306
        %v5335 = vpop.f32.mrf.mxu0
        %v5336 = vadd.f32 %v5287, %v5335
        %v5337 = vpop.f32.mrf.mxu0
        %v5338 = vadd.f32 %v5289, %v5337
        %5339 = vmatmul.bf16.gmra.mxu0 %v2314
        %v5340 = vpop.f32.mrf.mxu0
        %v5341 = vadd.f32 %v5292, %v5340
        %v5342 = vpop.f32.mrf.mxu0
        %v5343 = vadd.f32 %v5294, %v5342
        %5344 = vmatmul.bf16.gmra.mxu0 %v2322
        %v5345 = vpop.f32.mrf.mxu0
        %v5346 = vadd.f32 %v5297, %v5345
        %v5347 = vpop.f32.mrf.mxu0
        %v5348 = vadd.f32 %v5299, %v5347
        %5349 = vmatmul.bf16.gmra.mxu0 %v2330
        %v5350 = vpop.f32.mrf.mxu0
        %v5351 = vadd.f32 %v5302, %v5350
        %v5352 = vpop.f32.mrf.mxu0
        %v5353 = vadd.f32 %v5304, %v5352
        %5354 = vmatmul.bf16.gmra.mxu0 %v2338
        %v5355 = vpop.f32.mrf.mxu0
        %v5356 = vadd.f32 %v5307, %v5355
        %v5357 = vpop.f32.mrf.mxu0
        %v5358 = vadd.f32 %v5309, %v5357
        %5359 = vmatmul.bf16.gmra.mxu0 %v2346
        %v5360 = vpop.f32.mrf.mxu0
        %v5361 = vadd.f32 %v5312, %v5360
        %v5362 = vpop.f32.mrf.mxu0
        %v5363 = vadd.f32 %v5314, %v5362
        %5364 = vdwg.mxu0
        %5365 = vmatpush.bf16.msra.mxu0 %v3606
        %5366 = vmatpush.bf16.msra.mxu0 %v3602
        %5367 = vmatpush.bf16.msra.mxu0 %v3598
        %5368 = vmatpush.bf16.msra.mxu0 %v3594
        %5369 = vmatpush.bf16.msra.mxu0 %v3590
        %5370 = vmatpush.bf16.msra.mxu0 %v3586
        %5371 = vmatpush.bf16.msra.mxu0 %v3582
        %5372 = vmatpush.bf16.msra.mxu0 %v3578
        %5373 = vmatmul.bf16.gmra.mxu0 %v2291
        %v5374 = vpop.f32.mrf.mxu0
        %v5375 = vadd.f32 %v5326, %v5374
        %v5376 = vpop.f32.mrf.mxu0
        %v5377 = vadd.f32 %v5328, %v5376
        %5378 = vmatmul.bf16.gmra.mxu0 %v2299
        %v5379 = vpop.f32.mrf.mxu0
        %v5380 = vadd.f32 %v5331, %v5379
        %v5381 = vpop.f32.mrf.mxu0
        %v5382 = vadd.f32 %v5333, %v5381
        %5383 = vmatmul.bf16.gmra.mxu0 %v2307
        %v5384 = vpop.f32.mrf.mxu0
        %v5385 = vadd.f32 %v5336, %v5384
        %v5386 = vpop.f32.mrf.mxu0
        %v5387 = vadd.f32 %v5338, %v5386
        %5388 = vmatmul.bf16.gmra.mxu0 %v2315
        %v5389 = vpop.f32.mrf.mxu0
        %v5390 = vadd.f32 %v5341, %v5389
        %v5391 = vpop.f32.mrf.mxu0
        %v5392 = vadd.f32 %v5343, %v5391
        %5393 = vmatmul.bf16.gmra.mxu0 %v2323
        %v5394 = vpop.f32.mrf.mxu0
        %v5395 = vadd.f32 %v5346, %v5394
        %v5396 = vpop.f32.mrf.mxu0
        %v5397 = vadd.f32 %v5348, %v5396
        %5398 = vmatmul.bf16.gmra.mxu0 %v2331
        %v5399 = vpop.f32.mrf.mxu0
        %v5400 = vadd.f32 %v5351, %v5399
        %v5401 = vpop.f32.mrf.mxu0
        %v5402 = vadd.f32 %v5353, %v5401
        %5403 = vmatmul.bf16.gmra.mxu0 %v2339
        %v5404 = vpop.f32.mrf.mxu0
        %v5405 = vadd.f32 %v5356, %v5404
        %v5406 = vpop.f32.mrf.mxu0
        %v5407 = vadd.f32 %v5358, %v5406
        %5408 = vmatmul.bf16.gmra.mxu0 %v2347
        %v5409 = vpop.f32.mrf.mxu0
        %v5410 = vadd.f32 %v5361, %v5409
        %v5411 = vpop.f32.mrf.mxu0
        %v5412 = vadd.f32 %v5363, %v5411
        %5413 = vdwg.mxu0
        %5414 = vmatpush.bf16.msra.mxu0 %v3638
        %5415 = vmatpush.bf16.msra.mxu0 %v3634
        %5416 = vmatpush.bf16.msra.mxu0 %v3630
        %5417 = vmatpush.bf16.msra.mxu0 %v3626
        %5418 = vmatpush.bf16.msra.mxu0 %v3622
        %5419 = vmatpush.bf16.msra.mxu0 %v3618
        %5420 = vmatpush.bf16.msra.mxu0 %v3614
        %5421 = vmatpush.bf16.msra.mxu0 %v3610
        %5422 = vmatmul.bf16.gmra.mxu0 %v2292
        %v5423 = vpop.f32.mrf.mxu0
        %v5424 = vadd.f32 %v5375, %v5423
        %v5425 = vpop.f32.mrf.mxu0
        %v5426 = vadd.f32 %v5377, %v5425
        %5427 = vmatmul.bf16.gmra.mxu0 %v2300
        %v5428 = vpop.f32.mrf.mxu0
        %v5429 = vadd.f32 %v5380, %v5428
        %v5430 = vpop.f32.mrf.mxu0
        %v5431 = vadd.f32 %v5382, %v5430
        %5432 = vmatmul.bf16.gmra.mxu0 %v2308
        %v5433 = vpop.f32.mrf.mxu0
        %v5434 = vadd.f32 %v5385, %v5433
        %v5435 = vpop.f32.mrf.mxu0
        %v5436 = vadd.f32 %v5387, %v5435
        %5437 = vmatmul.bf16.gmra.mxu0 %v2316
        %v5438 = vpop.f32.mrf.mxu0
        %v5439 = vadd.f32 %v5390, %v5438
        %v5440 = vpop.f32.mrf.mxu0
        %v5441 = vadd.f32 %v5392, %v5440
        %5442 = vmatmul.bf16.gmra.mxu0 %v2324
        %v5443 = vpop.f32.mrf.mxu0
        %v5444 = vadd.f32 %v5395, %v5443
        %v5445 = vpop.f32.mrf.mxu0
        %v5446 = vadd.f32 %v5397, %v5445
        %5447 = vmatmul.bf16.gmra.mxu0 %v2332
        %v5448 = vpop.f32.mrf.mxu0
        %v5449 = vadd.f32 %v5400, %v5448
        %v5450 = vpop.f32.mrf.mxu0
        %v5451 = vadd.f32 %v5402, %v5450
        %5452 = vmatmul.bf16.gmra.mxu0 %v2340
        %v5453 = vpop.f32.mrf.mxu0
        %v5454 = vadd.f32 %v5405, %v5453
        %v5455 = vpop.f32.mrf.mxu0
        %v5456 = vadd.f32 %v5407, %v5455
        %5457 = vmatmul.bf16.gmra.mxu0 %v2348
        %v5458 = vpop.f32.mrf.mxu0
        %v5459 = vadd.f32 %v5410, %v5458
        %v5460 = vpop.f32.mrf.mxu0
        %v5461 = vadd.f32 %v5412, %v5460
        %5462 = vdwg.mxu0
        %v5463 = vmax.f32 %v4248, 0.0
        %v5464 = vmax.f32 %v4640, 0.0
        %v5465 = vmax.f32 %v5032, 0.0
        %v5466 = vmax.f32 %v5424, 0.0
        %v5467 = vmax.f32 %v4250, 0.0
        %v5468 = vmax.f32 %v4642, 0.0
        %v5469 = vmax.f32 %v5034, 0.0
        %v5470 = vmax.f32 %v5426, 0.0
        %v5471 = vmax.f32 %v4253, 0.0
        %v5472 = vmax.f32 %v4645, 0.0
        %v5473 = vmax.f32 %v5037, 0.0
        %v5474 = vmax.f32 %v5429, 0.0
        %v5475 = vmax.f32 %v4255, 0.0
        %v5476 = vmax.f32 %v4647, 0.0
        %v5477 = vmax.f32 %v5039, 0.0
        %v5478 = vmax.f32 %v5431, 0.0
        %v5479 = vmax.f32 %v4258, 0.0
        %v5480 = vmax.f32 %v4650, 0.0
        %v5481 = vmax.f32 %v5042, 0.0
        %v5482 = vmax.f32 %v5434, 0.0
        %v5483 = vmax.f32 %v4260, 0.0
        %v5484 = vmax.f32 %v4652, 0.0
        %v5485 = vmax.f32 %v5044, 0.0
        %v5486 = vmax.f32 %v5436, 0.0
        %v5487 = vmax.f32 %v4263, 0.0
        %v5488 = vmax.f32 %v4655, 0.0
        %v5489 = vmax.f32 %v5047, 0.0
        %v5490 = vmax.f32 %v5439, 0.0
        %v5491 = vmax.f32 %v4265, 0.0
        %v5492 = vmax.f32 %v4657, 0.0
        %v5493 = vmax.f32 %v5049, 0.0
        %v5494 = vmax.f32 %v5441, 0.0
        %v5495 = vmax.f32 %v4268, 0.0
        %v5496 = vmax.f32 %v4660, 0.0
        %v5497 = vmax.f32 %v5052, 0.0
        %v5498 = vmax.f32 %v5444, 0.0
        %v5499 = vmax.f32 %v4270, 0.0
        %v5500 = vmax.f32 %v4662, 0.0
        %v5501 = vmax.f32 %v5054, 0.0
        %v5502 = vmax.f32 %v5446, 0.0
        %v5503 = vmax.f32 %v4273, 0.0
        %v5504 = vmax.f32 %v4665, 0.0
        %v5505 = vmax.f32 %v5057, 0.0
        %v5506 = vmax.f32 %v5449, 0.0
        %v5507 = vmax.f32 %v4275, 0.0
        %v5508 = vmax.f32 %v4667, 0.0
        %v5509 = vmax.f32 %v5059, 0.0
        %v5510 = vmax.f32 %v5451, 0.0
        %v5511 = vmax.f32 %v4278, 0.0
        %v5512 = vmax.f32 %v4670, 0.0
        %v5513 = vmax.f32 %v5062, 0.0
        %v5514 = vmax.f32 %v5454, 0.0
        %v5515 = vmax.f32 %v4280, 0.0
        %v5516 = vmax.f32 %v4672, 0.0
        %v5517 = vmax.f32 %v5064, 0.0
        %v5518 = vmax.f32 %v5456, 0.0
        %v5519 = vmax.f32 %v4283, 0.0
        %v5520 = vmax.f32 %v4675, 0.0
        %v5521 = vmax.f32 %v5067, 0.0
        %v5522 = vmax.f32 %v5459, 0.0
        %v5523 = vmax.f32 %v4285, 0.0
        %v5524 = vmax.f32 %v4677, 0.0
        %v5525 = vmax.f32 %v5069, 0.0
        %v5526 = vmax.f32 %v5461, 0.0
        %v5527 = vpack.c.bf16 %v5467, %v5463
        %v5528 = vpack.c.bf16 %v5468, %v5464
        %v5529 = vpack.c.bf16 %v5469, %v5465
        %v5530 = vpack.c.bf16 %v5470, %v5466
        %v5531 = vpack.c.bf16 %v5475, %v5471
        %v5532 = vpack.c.bf16 %v5476, %v5472
        %v5533 = vpack.c.bf16 %v5477, %v5473
        %v5534 = vpack.c.bf16 %v5478, %v5474
        %v5535 = vpack.c.bf16 %v5483, %v5479
        %v5536 = vpack.c.bf16 %v5484, %v5480
        %v5537 = vpack.c.bf16 %v5485, %v5481
        %v5538 = vpack.c.bf16 %v5486, %v5482
        %v5539 = vpack.c.bf16 %v5491, %v5487
        %v5540 = vpack.c.bf16 %v5492, %v5488
        %v5541 = vpack.c.bf16 %v5493, %v5489
        %v5542 = vpack.c.bf16 %v5494, %v5490
        %v5543 = vpack.c.bf16 %v5499, %v5495
        %v5544 = vpack.c.bf16 %v5500, %v5496
        %v5545 = vpack.c.bf16 %v5501, %v5497
        %v5546 = vpack.c.bf16 %v5502, %v5498
        %v5547 = vpack.c.bf16 %v5507, %v5503
        %v5548 = vpack.c.bf16 %v5508, %v5504
        %v5549 = vpack.c.bf16 %v5509, %v5505
        %v5550 = vpack.c.bf16 %v5510, %v5506
        %v5551 = vpack.c.bf16 %v5515, %v5511
        %v5552 = vpack.c.bf16 %v5516, %v5512
        %v5553 = vpack.c.bf16 %v5517, %v5513
        %v5554 = vpack.c.bf16 %v5518, %v5514
        %v5555 = vpack.c.bf16 %v5523, %v5519
        %v5556 = vpack.c.bf16 %v5524, %v5520
        %v5557 = vpack.c.bf16 %v5525, %v5521
        %v5558 = vpack.c.bf16 %v5526, %v5522
        %v5559 = vld [vmem:[#allocation11] sm:$0xff]
        %v5560 = vld [vmem:[#allocation11 + $0x8] sm:$0xff]
        %v5561 = vld [vmem:[#allocation11 + $0x10] sm:$0xff]
        %v5562 = vld [vmem:[#allocation11 + $0x18] sm:$0xff]
        %v5563 = vld [vmem:[#allocation11 + $0x20] sm:$0xff]
        %v5564 = vld [vmem:[#allocation11 + $0x28] sm:$0xff]
        %v5565 = vld [vmem:[#allocation11 + $0x30] sm:$0xff]
        %v5566 = vld [vmem:[#allocation11 + $0x38] sm:$0xff]
        %v5567 = vld [vmem:[#allocation11 + $0x40] sm:$0xff]
        %v5568 = vld [vmem:[#allocation11 + $0x48] sm:$0xff]
        %v5569 = vld [vmem:[#allocation11 + $0x50] sm:$0xff]
        %v5570 = vld [vmem:[#allocation11 + $0x58] sm:$0xff]
        %v5571 = vld [vmem:[#allocation11 + $0x60] sm:$0xff]
        %v5572 = vld [vmem:[#allocation11 + $0x68] sm:$0xff]
        %v5573 = vld [vmem:[#allocation11 + $0x70] sm:$0xff]
        %v5574 = vld [vmem:[#allocation11 + $0x78] sm:$0xff]
        %v5575 = vld [vmem:[#allocation11 + $0x80] sm:$0xff]
        %v5576 = vld [vmem:[#allocation11 + $0x88] sm:$0xff]
        %v5577 = vld [vmem:[#allocation11 + $0x90] sm:$0xff]
        %v5578 = vld [vmem:[#allocation11 + $0x98] sm:$0xff]
        %v5579 = vld [vmem:[#allocation11 + $0xa0] sm:$0xff]
        %v5580 = vld [vmem:[#allocation11 + $0xa8] sm:$0xff]
        %v5581 = vld [vmem:[#allocation11 + $0xb0] sm:$0xff]
        %v5582 = vld [vmem:[#allocation11 + $0xb8] sm:$0xff]
        %v5583 = vld [vmem:[#allocation11 + $0xc0] sm:$0xff]
        %v5584 = vld [vmem:[#allocation11 + $0xc8] sm:$0xff]
        %v5585 = vld [vmem:[#allocation11 + $0xd0] sm:$0xff]
        %v5586 = vld [vmem:[#allocation11 + $0xd8] sm:$0xff]
        %v5587 = vld [vmem:[#allocation11 + $0xe0] sm:$0xff]
        %v5588 = vld [vmem:[#allocation11 + $0xe8] sm:$0xff]
        %v5589 = vld [vmem:[#allocation11 + $0xf0] sm:$0xff]
        %v5590 = vld [vmem:[#allocation11 + $0xf8] sm:$0xff]
        %v5591 = vld [vmem:[#allocation11 + $0x100] sm:$0xff]
        %v5592 = vld [vmem:[#allocation11 + $0x108] sm:$0xff]
        %v5593 = vld [vmem:[#allocation11 + $0x110] sm:$0xff]
        %v5594 = vld [vmem:[#allocation11 + $0x118] sm:$0xff]
        %v5595 = vld [vmem:[#allocation11 + $0x120] sm:$0xff]
        %v5596 = vld [vmem:[#allocation11 + $0x128] sm:$0xff]
        %v5597 = vld [vmem:[#allocation11 + $0x130] sm:$0xff]
        %v5598 = vld [vmem:[#allocation11 + $0x138] sm:$0xff]
        %v5599 = vld [vmem:[#allocation11 + $0x140] sm:$0xff]
        %v5600 = vld [vmem:[#allocation11 + $0x148] sm:$0xff]
        %v5601 = vld [vmem:[#allocation11 + $0x150] sm:$0xff]
        %v5602 = vld [vmem:[#allocation11 + $0x158] sm:$0xff]
        %v5603 = vld [vmem:[#allocation11 + $0x160] sm:$0xff]
        %v5604 = vld [vmem:[#allocation11 + $0x168] sm:$0xff]
        %v5605 = vld [vmem:[#allocation11 + $0x170] sm:$0xff]
        %v5606 = vld [vmem:[#allocation11 + $0x178] sm:$0xff]
        %v5607 = vld [vmem:[#allocation11 + $0x180] sm:$0xff]
        %v5608 = vld [vmem:[#allocation11 + $0x188] sm:$0xff]
        %v5609 = vld [vmem:[#allocation11 + $0x190] sm:$0xff]
        %v5610 = vld [vmem:[#allocation11 + $0x198] sm:$0xff]
        %v5611 = vld [vmem:[#allocation11 + $0x1a0] sm:$0xff]
        %v5612 = vld [vmem:[#allocation11 + $0x1a8] sm:$0xff]
        %v5613 = vld [vmem:[#allocation11 + $0x1b0] sm:$0xff]
        %v5614 = vld [vmem:[#allocation11 + $0x1b8] sm:$0xff]
        %v5615 = vld [vmem:[#allocation11 + $0x1c0] sm:$0xff]
        %v5616 = vld [vmem:[#allocation11 + $0x1c8] sm:$0xff]
        %v5617 = vld [vmem:[#allocation11 + $0x1d0] sm:$0xff]
        %v5618 = vld [vmem:[#allocation11 + $0x1d8] sm:$0xff]
        %v5619 = vld [vmem:[#allocation11 + $0x1e0] sm:$0xff]
        %v5620 = vld [vmem:[#allocation11 + $0x1e8] sm:$0xff]
        %v5621 = vld [vmem:[#allocation11 + $0x1f0] sm:$0xff]
        %v5622 = vld [vmem:[#allocation11 + $0x1f8] sm:$0xff]
        %v5623 = vld [vmem:[%s6] sm:$0x3]
        %v5625 = vperm.slane %v5623, 0
        %v5626 = vperm.slane %v5623, 1
        %v5693 = vunpack.c.l.b16 %v5559
        %v5694 = vunpack.c.h.b16 %v5559
        %v5695 = vunpack.c.l.b16 %v5560
        %v5696 = vunpack.c.h.b16 %v5560
        %v5697 = vunpack.c.l.b16 %v5561
        %v5698 = vunpack.c.h.b16 %v5561
        %v5699 = vunpack.c.l.b16 %v5562
        %v5700 = vunpack.c.h.b16 %v5562
        %v5701 = vunpack.c.l.b16 %v5563
        %v5702 = vunpack.c.h.b16 %v5563
        %v5703 = vunpack.c.l.b16 %v5564
        %v5704 = vunpack.c.h.b16 %v5564
        %v5705 = vunpack.c.l.b16 %v5565
        %v5706 = vunpack.c.h.b16 %v5565
        %v5707 = vunpack.c.l.b16 %v5566
        %v5708 = vunpack.c.h.b16 %v5566
        %v5709 = vunpack.c.l.b16 %v5567
        %v5710 = vunpack.c.h.b16 %v5567
        %v5711 = vunpack.c.l.b16 %v5568
        %v5712 = vunpack.c.h.b16 %v5568
        %v5713 = vunpack.c.l.b16 %v5569
        %v5714 = vunpack.c.h.b16 %v5569
        %v5715 = vunpack.c.l.b16 %v5570
        %v5716 = vunpack.c.h.b16 %v5570
        %v5717 = vunpack.c.l.b16 %v5571
        %v5718 = vunpack.c.h.b16 %v5571
        %v5719 = vunpack.c.l.b16 %v5572
        %v5720 = vunpack.c.h.b16 %v5572
        %v5721 = vunpack.c.l.b16 %v5573
        %v5722 = vunpack.c.h.b16 %v5573
        %v5723 = vunpack.c.l.b16 %v5574
        %v5724 = vunpack.c.h.b16 %v5574
        %v5725 = vunpack.c.l.b16 %v5575
        %v5726 = vunpack.c.h.b16 %v5575
        %v5727 = vunpack.c.l.b16 %v5576
        %v5728 = vunpack.c.h.b16 %v5576
        %v5729 = vunpack.c.l.b16 %v5577
        %v5730 = vunpack.c.h.b16 %v5577
        %v5731 = vunpack.c.l.b16 %v5578
        %v5732 = vunpack.c.h.b16 %v5578
        %v5733 = vunpack.c.l.b16 %v5579
        %v5734 = vunpack.c.h.b16 %v5579
        %v5735 = vunpack.c.l.b16 %v5580
        %v5736 = vunpack.c.h.b16 %v5580
        %v5737 = vunpack.c.l.b16 %v5581
        %v5738 = vunpack.c.h.b16 %v5581
        %v5739 = vunpack.c.l.b16 %v5582
        %v5740 = vunpack.c.h.b16 %v5582
        %v5741 = vunpack.c.l.b16 %v5583
        %v5742 = vunpack.c.h.b16 %v5583
        %v5743 = vunpack.c.l.b16 %v5584
        %v5744 = vunpack.c.h.b16 %v5584
        %v5745 = vunpack.c.l.b16 %v5585
        %v5746 = vunpack.c.h.b16 %v5585
        %v5747 = vunpack.c.l.b16 %v5586
        %v5748 = vunpack.c.h.b16 %v5586
        %v5749 = vunpack.c.l.b16 %v5587
        %v5750 = vunpack.c.h.b16 %v5587
        %v5751 = vunpack.c.l.b16 %v5588
        %v5752 = vunpack.c.h.b16 %v5588
        %v5753 = vunpack.c.l.b16 %v5589
        %v5754 = vunpack.c.h.b16 %v5589
        %v5755 = vunpack.c.l.b16 %v5590
        %v5756 = vunpack.c.h.b16 %v5590
        %v5757 = vunpack.c.l.b16 %v5591
        %v5758 = vunpack.c.h.b16 %v5591
        %v5759 = vunpack.c.l.b16 %v5592
        %v5760 = vunpack.c.h.b16 %v5592
        %v5761 = vunpack.c.l.b16 %v5593
        %v5762 = vunpack.c.h.b16 %v5593
        %v5763 = vunpack.c.l.b16 %v5594
        %v5764 = vunpack.c.h.b16 %v5594
        %v5765 = vunpack.c.l.b16 %v5595
        %v5766 = vunpack.c.h.b16 %v5595
        %v5767 = vunpack.c.l.b16 %v5596
        %v5768 = vunpack.c.h.b16 %v5596
        %v5769 = vunpack.c.l.b16 %v5597
        %v5770 = vunpack.c.h.b16 %v5597
        %v5771 = vunpack.c.l.b16 %v5598
        %v5772 = vunpack.c.h.b16 %v5598
        %v5773 = vunpack.c.l.b16 %v5599
        %v5774 = vunpack.c.h.b16 %v5599
        %v5775 = vunpack.c.l.b16 %v5600
        %v5776 = vunpack.c.h.b16 %v5600
        %v5777 = vunpack.c.l.b16 %v5601
        %v5778 = vunpack.c.h.b16 %v5601
        %v5779 = vunpack.c.l.b16 %v5602
        %v5780 = vunpack.c.h.b16 %v5602
        %v5781 = vunpack.c.l.b16 %v5603
        %v5782 = vunpack.c.h.b16 %v5603
        %v5783 = vunpack.c.l.b16 %v5604
        %v5784 = vunpack.c.h.b16 %v5604
        %v5785 = vunpack.c.l.b16 %v5605
        %v5786 = vunpack.c.h.b16 %v5605
        %v5787 = vunpack.c.l.b16 %v5606
        %v5788 = vunpack.c.h.b16 %v5606
        %v5789 = vunpack.c.l.b16 %v5607
        %v5790 = vunpack.c.h.b16 %v5607
        %v5791 = vunpack.c.l.b16 %v5608
        %v5792 = vunpack.c.h.b16 %v5608
        %v5793 = vunpack.c.l.b16 %v5609
        %v5794 = vunpack.c.h.b16 %v5609
        %v5795 = vunpack.c.l.b16 %v5610
        %v5796 = vunpack.c.h.b16 %v5610
        %v5797 = vunpack.c.l.b16 %v5611
        %v5798 = vunpack.c.h.b16 %v5611
        %v5799 = vunpack.c.l.b16 %v5612
        %v5800 = vunpack.c.h.b16 %v5612
        %v5801 = vunpack.c.l.b16 %v5613
        %v5802 = vunpack.c.h.b16 %v5613
        %v5803 = vunpack.c.l.b16 %v5614
        %v5804 = vunpack.c.h.b16 %v5614
        %v5805 = vunpack.c.l.b16 %v5615
        %v5806 = vunpack.c.h.b16 %v5615
        %v5807 = vunpack.c.l.b16 %v5616
        %v5808 = vunpack.c.h.b16 %v5616
        %v5809 = vunpack.c.l.b16 %v5617
        %v5810 = vunpack.c.h.b16 %v5617
        %v5811 = vunpack.c.l.b16 %v5618
        %v5812 = vunpack.c.h.b16 %v5618
        %v5813 = vunpack.c.l.b16 %v5619
        %v5814 = vunpack.c.h.b16 %v5619
        %v5815 = vunpack.c.l.b16 %v5620
        %v5816 = vunpack.c.h.b16 %v5620
        %v5817 = vunpack.c.l.b16 %v5621
        %v5818 = vunpack.c.h.b16 %v5621
        %v5819 = vunpack.c.l.b16 %v5622
        %v5820 = vunpack.c.h.b16 %v5622
        %v5821 = vpack.c.b16 %v5695, %v5693
        %v5822 = vpack.c.b16 %v5696, %v5694
        %v5823 = vpack.c.b16 %v5699, %v5697
        %v5824 = vpack.c.b16 %v5700, %v5698
        %v5825 = vpack.c.b16 %v5703, %v5701
        %v5826 = vpack.c.b16 %v5704, %v5702
        %v5827 = vpack.c.b16 %v5707, %v5705
        %v5828 = vpack.c.b16 %v5708, %v5706
        %v5829 = vpack.c.b16 %v5711, %v5709
        %v5830 = vpack.c.b16 %v5712, %v5710
        %v5831 = vpack.c.b16 %v5715, %v5713
        %v5832 = vpack.c.b16 %v5716, %v5714
        %v5833 = vpack.c.b16 %v5719, %v5717
        %v5834 = vpack.c.b16 %v5720, %v5718
        %v5835 = vpack.c.b16 %v5723, %v5721
        %v5836 = vpack.c.b16 %v5724, %v5722
        %v5837 = vpack.c.b16 %v5727, %v5725
        %v5838 = vpack.c.b16 %v5728, %v5726
        %v5839 = vpack.c.b16 %v5731, %v5729
        %v5840 = vpack.c.b16 %v5732, %v5730
        %v5841 = vpack.c.b16 %v5735, %v5733
        %v5842 = vpack.c.b16 %v5736, %v5734
        %v5843 = vpack.c.b16 %v5739, %v5737
        %v5844 = vpack.c.b16 %v5740, %v5738
        %v5845 = vpack.c.b16 %v5743, %v5741
        %v5846 = vpack.c.b16 %v5744, %v5742
        %v5847 = vpack.c.b16 %v5747, %v5745
        %v5848 = vpack.c.b16 %v5748, %v5746
        %v5849 = vpack.c.b16 %v5751, %v5749
        %v5850 = vpack.c.b16 %v5752, %v5750
        %v5851 = vpack.c.b16 %v5755, %v5753
        %v5852 = vpack.c.b16 %v5756, %v5754
        %v5853 = vpack.c.b16 %v5759, %v5757
        %v5854 = vpack.c.b16 %v5760, %v5758
        %v5855 = vpack.c.b16 %v5763, %v5761
        %v5856 = vpack.c.b16 %v5764, %v5762
        %v5857 = vpack.c.b16 %v5767, %v5765
        %v5858 = vpack.c.b16 %v5768, %v5766
        %v5859 = vpack.c.b16 %v5771, %v5769
        %v5860 = vpack.c.b16 %v5772, %v5770
        %v5861 = vpack.c.b16 %v5775, %v5773
        %v5862 = vpack.c.b16 %v5776, %v5774
        %v5863 = vpack.c.b16 %v5779, %v5777
        %v5864 = vpack.c.b16 %v5780, %v5778
        %v5865 = vpack.c.b16 %v5783, %v5781
        %v5866 = vpack.c.b16 %v5784, %v5782
        %v5867 = vpack.c.b16 %v5787, %v5785
        %v5868 = vpack.c.b16 %v5788, %v5786
        %v5869 = vpack.c.b16 %v5791, %v5789
        %v5870 = vpack.c.b16 %v5792, %v5790
        %v5871 = vpack.c.b16 %v5795, %v5793
        %v5872 = vpack.c.b16 %v5796, %v5794
        %v5873 = vpack.c.b16 %v5799, %v5797
        %v5874 = vpack.c.b16 %v5800, %v5798
        %v5875 = vpack.c.b16 %v5803, %v5801
        %v5876 = vpack.c.b16 %v5804, %v5802
        %v5877 = vpack.c.b16 %v5807, %v5805
        %v5878 = vpack.c.b16 %v5808, %v5806
        %v5879 = vpack.c.b16 %v5811, %v5809
        %v5880 = vpack.c.b16 %v5812, %v5810
        %v5881 = vpack.c.b16 %v5815, %v5813
        %v5882 = vpack.c.b16 %v5816, %v5814
        %v5883 = vpack.c.b16 %v5819, %v5817
        %v5884 = vpack.c.b16 %v5820, %v5818
        %5949 = vmatpush.bf16.msra.mxu0 %v5835
        %5950 = vmatpush.bf16.msra.mxu0 %v5833
        %5951 = vmatpush.bf16.msra.mxu0 %v5831
        %5952 = vmatpush.bf16.msra.mxu0 %v5829
        %5953 = vmatpush.bf16.msra.mxu0 %v5827
        %5954 = vmatpush.bf16.msra.mxu0 %v5825
        %5955 = vmatpush.bf16.msra.mxu0 %v5823
        %5956 = vmatpush.bf16.msra.mxu0 %v5821
        %5957 = vmatmul.bf16.gmra.mxu0 %v5527
        %v5958 = vpop.f32.mrf.mxu0
        %v5959 = vadd.f32 %v5625, %v5958
        %v5960 = vpop.f32.mrf.mxu0
        %v5961 = vadd.f32 %v5625, %v5960
        %5962 = vmatmul.bf16.gmra.mxu0 %v5531
        %v5963 = vpop.f32.mrf.mxu0
        %v5964 = vadd.f32 %v5625, %v5963
        %v5965 = vpop.f32.mrf.mxu0
        %v5966 = vadd.f32 %v5625, %v5965
        %5967 = vmatmul.bf16.gmra.mxu0 %v5535
        %v5968 = vpop.f32.mrf.mxu0
        %v5969 = vadd.f32 %v5625, %v5968
        %v5970 = vpop.f32.mrf.mxu0
        %v5971 = vadd.f32 %v5625, %v5970
        %5972 = vmatmul.bf16.gmra.mxu0 %v5539
        %v5973 = vpop.f32.mrf.mxu0
        %v5974 = vadd.f32 %v5625, %v5973
        %v5975 = vpop.f32.mrf.mxu0
        %v5976 = vadd.f32 %v5625, %v5975
        %5977 = vmatmul.bf16.gmra.mxu0 %v5543
        %v5978 = vpop.f32.mrf.mxu0
        %v5979 = vadd.f32 %v5625, %v5978
        %v5980 = vpop.f32.mrf.mxu0
        %v5981 = vadd.f32 %v5625, %v5980
        %5982 = vmatmul.bf16.gmra.mxu0 %v5547
        %v5983 = vpop.f32.mrf.mxu0
        %v5984 = vadd.f32 %v5625, %v5983
        %v5985 = vpop.f32.mrf.mxu0
        %v5986 = vadd.f32 %v5625, %v5985
        %5987 = vmatmul.bf16.gmra.mxu0 %v5551
        %v5988 = vpop.f32.mrf.mxu0
        %v5989 = vadd.f32 %v5625, %v5988
        %v5990 = vpop.f32.mrf.mxu0
        %v5991 = vadd.f32 %v5625, %v5990
        %5992 = vmatmul.bf16.gmra.mxu0 %v5555
        %v5993 = vpop.f32.mrf.mxu0
        %v5994 = vadd.f32 %v5625, %v5993
        %v5995 = vpop.f32.mrf.mxu0
        %v5996 = vadd.f32 %v5625, %v5995
        %5997 = vdwg.mxu0
        %5998 = vmatpush.bf16.msra.mxu0 %v5851
        %5999 = vmatpush.bf16.msra.mxu0 %v5849
        %6000 = vmatpush.bf16.msra.mxu0 %v5847
        %6001 = vmatpush.bf16.msra.mxu0 %v5845
        %6002 = vmatpush.bf16.msra.mxu0 %v5843
        %6003 = vmatpush.bf16.msra.mxu0 %v5841
        %6004 = vmatpush.bf16.msra.mxu0 %v5839
        %6005 = vmatpush.bf16.msra.mxu0 %v5837
        %6006 = vmatmul.bf16.gmra.mxu0 %v5528
        %v6007 = vpop.f32.mrf.mxu0
        %v6008 = vadd.f32 %v5959, %v6007
        %v6009 = vpop.f32.mrf.mxu0
        %v6010 = vadd.f32 %v5961, %v6009
        %6011 = vmatmul.bf16.gmra.mxu0 %v5532
        %v6012 = vpop.f32.mrf.mxu0
        %v6013 = vadd.f32 %v5964, %v6012
        %v6014 = vpop.f32.mrf.mxu0
        %v6015 = vadd.f32 %v5966, %v6014
        %6016 = vmatmul.bf16.gmra.mxu0 %v5536
        %v6017 = vpop.f32.mrf.mxu0
        %v6018 = vadd.f32 %v5969, %v6017
        %v6019 = vpop.f32.mrf.mxu0
        %v6020 = vadd.f32 %v5971, %v6019
        %6021 = vmatmul.bf16.gmra.mxu0 %v5540
        %v6022 = vpop.f32.mrf.mxu0
        %v6023 = vadd.f32 %v5974, %v6022
        %v6024 = vpop.f32.mrf.mxu0
        %v6025 = vadd.f32 %v5976, %v6024
        %6026 = vmatmul.bf16.gmra.mxu0 %v5544
        %v6027 = vpop.f32.mrf.mxu0
        %v6028 = vadd.f32 %v5979, %v6027
        %v6029 = vpop.f32.mrf.mxu0
        %v6030 = vadd.f32 %v5981, %v6029
        %6031 = vmatmul.bf16.gmra.mxu0 %v5548
        %v6032 = vpop.f32.mrf.mxu0
        %v6033 = vadd.f32 %v5984, %v6032
        %v6034 = vpop.f32.mrf.mxu0
        %v6035 = vadd.f32 %v5986, %v6034
        %6036 = vmatmul.bf16.gmra.mxu0 %v5552
        %v6037 = vpop.f32.mrf.mxu0
        %v6038 = vadd.f32 %v5989, %v6037
        %v6039 = vpop.f32.mrf.mxu0
        %v6040 = vadd.f32 %v5991, %v6039
        %6041 = vmatmul.bf16.gmra.mxu0 %v5556
        %v6042 = vpop.f32.mrf.mxu0
        %v6043 = vadd.f32 %v5994, %v6042
        %v6044 = vpop.f32.mrf.mxu0
        %v6045 = vadd.f32 %v5996, %v6044
        %6046 = vdwg.mxu0
        %6047 = vmatpush.bf16.msra.mxu0 %v5867
        %6048 = vmatpush.bf16.msra.mxu0 %v5865
        %6049 = vmatpush.bf16.msra.mxu0 %v5863
        %6050 = vmatpush.bf16.msra.mxu0 %v5861
        %6051 = vmatpush.bf16.msra.mxu0 %v5859
        %6052 = vmatpush.bf16.msra.mxu0 %v5857
        %6053 = vmatpush.bf16.msra.mxu0 %v5855
        %6054 = vmatpush.bf16.msra.mxu0 %v5853
        %6055 = vmatmul.bf16.gmra.mxu0 %v5529
        %v6056 = vpop.f32.mrf.mxu0
        %v6057 = vadd.f32 %v6008, %v6056
        %v6058 = vpop.f32.mrf.mxu0
        %v6059 = vadd.f32 %v6010, %v6058
        %6060 = vmatmul.bf16.gmra.mxu0 %v5533
        %v6061 = vpop.f32.mrf.mxu0
        %v6062 = vadd.f32 %v6013, %v6061
        %v6063 = vpop.f32.mrf.mxu0
        %v6064 = vadd.f32 %v6015, %v6063
        %6065 = vmatmul.bf16.gmra.mxu0 %v5537
        %v6066 = vpop.f32.mrf.mxu0
        %v6067 = vadd.f32 %v6018, %v6066
        %v6068 = vpop.f32.mrf.mxu0
        %v6069 = vadd.f32 %v6020, %v6068
        %6070 = vmatmul.bf16.gmra.mxu0 %v5541
        %v6071 = vpop.f32.mrf.mxu0
        %v6072 = vadd.f32 %v6023, %v6071
        %v6073 = vpop.f32.mrf.mxu0
        %v6074 = vadd.f32 %v6025, %v6073
        %6075 = vmatmul.bf16.gmra.mxu0 %v5545
        %v6076 = vpop.f32.mrf.mxu0
        %v6077 = vadd.f32 %v6028, %v6076
        %v6078 = vpop.f32.mrf.mxu0
        %v6079 = vadd.f32 %v6030, %v6078
        %6080 = vmatmul.bf16.gmra.mxu0 %v5549
        %v6081 = vpop.f32.mrf.mxu0
        %v6082 = vadd.f32 %v6033, %v6081
        %v6083 = vpop.f32.mrf.mxu0
        %v6084 = vadd.f32 %v6035, %v6083
        %6085 = vmatmul.bf16.gmra.mxu0 %v5553
        %v6086 = vpop.f32.mrf.mxu0
        %v6087 = vadd.f32 %v6038, %v6086
        %v6088 = vpop.f32.mrf.mxu0
        %v6089 = vadd.f32 %v6040, %v6088
        %6090 = vmatmul.bf16.gmra.mxu0 %v5557
        %v6091 = vpop.f32.mrf.mxu0
        %v6092 = vadd.f32 %v6043, %v6091
        %v6093 = vpop.f32.mrf.mxu0
        %v6094 = vadd.f32 %v6045, %v6093
        %6095 = vdwg.mxu0
        %6096 = vmatpush.bf16.msra.mxu0 %v5883
        %6097 = vmatpush.bf16.msra.mxu0 %v5881
        %6098 = vmatpush.bf16.msra.mxu0 %v5879
        %6099 = vmatpush.bf16.msra.mxu0 %v5877
        %6100 = vmatpush.bf16.msra.mxu0 %v5875
        %6101 = vmatpush.bf16.msra.mxu0 %v5873
        %6102 = vmatpush.bf16.msra.mxu0 %v5871
        %6103 = vmatpush.bf16.msra.mxu0 %v5869
        %6104 = vmatmul.bf16.gmra.mxu0 %v5530
        %v6105 = vpop.f32.mrf.mxu0
        %v6106 = vadd.f32 %v6057, %v6105
        %v6107 = vpop.f32.mrf.mxu0
        %v6108 = vadd.f32 %v6059, %v6107
        %6109 = vmatmul.bf16.gmra.mxu0 %v5534
        %v6110 = vpop.f32.mrf.mxu0
        %v6111 = vadd.f32 %v6062, %v6110
        %v6112 = vpop.f32.mrf.mxu0
        %v6113 = vadd.f32 %v6064, %v6112
        %6114 = vmatmul.bf16.gmra.mxu0 %v5538
        %v6115 = vpop.f32.mrf.mxu0
        %v6116 = vadd.f32 %v6067, %v6115
        %v6117 = vpop.f32.mrf.mxu0
        %v6118 = vadd.f32 %v6069, %v6117
        %6119 = vmatmul.bf16.gmra.mxu0 %v5542
        %v6120 = vpop.f32.mrf.mxu0
        %v6121 = vadd.f32 %v6072, %v6120
        %v6122 = vpop.f32.mrf.mxu0
        %v6123 = vadd.f32 %v6074, %v6122
        %6124 = vmatmul.bf16.gmra.mxu0 %v5546
        %v6125 = vpop.f32.mrf.mxu0
        %v6126 = vadd.f32 %v6077, %v6125
        %v6127 = vpop.f32.mrf.mxu0
        %v6128 = vadd.f32 %v6079, %v6127
        %6129 = vmatmul.bf16.gmra.mxu0 %v5550
        %v6130 = vpop.f32.mrf.mxu0
        %v6131 = vadd.f32 %v6082, %v6130
        %v6132 = vpop.f32.mrf.mxu0
        %v6133 = vadd.f32 %v6084, %v6132
        %6134 = vmatmul.bf16.gmra.mxu0 %v5554
        %v6135 = vpop.f32.mrf.mxu0
        %v6136 = vadd.f32 %v6087, %v6135
        %v6137 = vpop.f32.mrf.mxu0
        %v6138 = vadd.f32 %v6089, %v6137
        %6139 = vmatmul.bf16.gmra.mxu0 %v5558
        %v6140 = vpop.f32.mrf.mxu0
        %v6141 = vadd.f32 %v6092, %v6140
        %v6142 = vpop.f32.mrf.mxu0
        %v6143 = vadd.f32 %v6094, %v6142
        %6144 = vdwg.mxu0
        %6145 = vmatpush.bf16.msra.mxu0 %v5836
        %6146 = vmatpush.bf16.msra.mxu0 %v5834
        %6147 = vmatpush.bf16.msra.mxu0 %v5832
        %6148 = vmatpush.bf16.msra.mxu0 %v5830
        %6149 = vmatpush.bf16.msra.mxu0 %v5828
        %6150 = vmatpush.bf16.msra.mxu0 %v5826
        %6151 = vmatpush.bf16.msra.mxu0 %v5824
        %6152 = vmatpush.bf16.msra.mxu0 %v5822
        %6153 = vmatmul.bf16.gmra.mxu0 %v5527
        %v6154 = vpop.f32.mrf.mxu0
        %v6155 = vadd.f32 %v5626, %v6154
        %v6156 = vpop.f32.mrf.mxu0
        %v6157 = vadd.f32 %v5626, %v6156
        %6158 = vmatmul.bf16.gmra.mxu0 %v5531
        %v6159 = vpop.f32.mrf.mxu0
        %v6160 = vadd.f32 %v5626, %v6159
        %v6161 = vpop.f32.mrf.mxu0
        %v6162 = vadd.f32 %v5626, %v6161
        %6163 = vmatmul.bf16.gmra.mxu0 %v5535
        %v6164 = vpop.f32.mrf.mxu0
        %v6165 = vadd.f32 %v5626, %v6164
        %v6166 = vpop.f32.mrf.mxu0
        %v6167 = vadd.f32 %v5626, %v6166
        %6168 = vmatmul.bf16.gmra.mxu0 %v5539
        %v6169 = vpop.f32.mrf.mxu0
        %v6170 = vadd.f32 %v5626, %v6169
        %v6171 = vpop.f32.mrf.mxu0
        %v6172 = vadd.f32 %v5626, %v6171
        %6173 = vmatmul.bf16.gmra.mxu0 %v5543
        %v6174 = vpop.f32.mrf.mxu0
        %v6175 = vadd.f32 %v5626, %v6174
        %v6176 = vpop.f32.mrf.mxu0
        %v6177 = vadd.f32 %v5626, %v6176
        %6178 = vmatmul.bf16.gmra.mxu0 %v5547
        %v6179 = vpop.f32.mrf.mxu0
        %v6180 = vadd.f32 %v5626, %v6179
        %v6181 = vpop.f32.mrf.mxu0
        %v6182 = vadd.f32 %v5626, %v6181
        %6183 = vmatmul.bf16.gmra.mxu0 %v5551
        %v6184 = vpop.f32.mrf.mxu0
        %v6185 = vadd.f32 %v5626, %v6184
        %v6186 = vpop.f32.mrf.mxu0
        %v6187 = vadd.f32 %v5626, %v6186
        %6188 = vmatmul.bf16.gmra.mxu0 %v5555
        %v6189 = vpop.f32.mrf.mxu0
        %v6190 = vadd.f32 %v5626, %v6189
        %v6191 = vpop.f32.mrf.mxu0
        %v6192 = vadd.f32 %v5626, %v6191
        %6193 = vdwg.mxu0
        %6194 = vmatpush.bf16.msra.mxu0 %v5852
        %6195 = vmatpush.bf16.msra.mxu0 %v5850
        %6196 = vmatpush.bf16.msra.mxu0 %v5848
        %6197 = vmatpush.bf16.msra.mxu0 %v5846
        %6198 = vmatpush.bf16.msra.mxu0 %v5844
        %6199 = vmatpush.bf16.msra.mxu0 %v5842
        %6200 = vmatpush.bf16.msra.mxu0 %v5840
        %6201 = vmatpush.bf16.msra.mxu0 %v5838
        %6202 = vmatmul.bf16.gmra.mxu0 %v5528
        %v6203 = vpop.f32.mrf.mxu0
        %v6204 = vadd.f32 %v6155, %v6203
        %v6205 = vpop.f32.mrf.mxu0
        %v6206 = vadd.f32 %v6157, %v6205
        %6207 = vmatmul.bf16.gmra.mxu0 %v5532
        %v6208 = vpop.f32.mrf.mxu0
        %v6209 = vadd.f32 %v6160, %v6208
        %v6210 = vpop.f32.mrf.mxu0
        %v6211 = vadd.f32 %v6162, %v6210
        %6212 = vmatmul.bf16.gmra.mxu0 %v5536
        %v6213 = vpop.f32.mrf.mxu0
        %v6214 = vadd.f32 %v6165, %v6213
        %v6215 = vpop.f32.mrf.mxu0
        %v6216 = vadd.f32 %v6167, %v6215
        %6217 = vmatmul.bf16.gmra.mxu0 %v5540
        %v6218 = vpop.f32.mrf.mxu0
        %v6219 = vadd.f32 %v6170, %v6218
        %v6220 = vpop.f32.mrf.mxu0
        %v6221 = vadd.f32 %v6172, %v6220
        %6222 = vmatmul.bf16.gmra.mxu0 %v5544
        %v6223 = vpop.f32.mrf.mxu0
        %v6224 = vadd.f32 %v6175, %v6223
        %v6225 = vpop.f32.mrf.mxu0
        %v6226 = vadd.f32 %v6177, %v6225
        %6227 = vmatmul.bf16.gmra.mxu0 %v5548
        %v6228 = vpop.f32.mrf.mxu0
        %v6229 = vadd.f32 %v6180, %v6228
        %v6230 = vpop.f32.mrf.mxu0
        %v6231 = vadd.f32 %v6182, %v6230
        %6232 = vmatmul.bf16.gmra.mxu0 %v5552
        %v6233 = vpop.f32.mrf.mxu0
        %v6234 = vadd.f32 %v6185, %v6233
        %v6235 = vpop.f32.mrf.mxu0
        %v6236 = vadd.f32 %v6187, %v6235
        %6237 = vmatmul.bf16.gmra.mxu0 %v5556
        %v6238 = vpop.f32.mrf.mxu0
        %v6239 = vadd.f32 %v6190, %v6238
        %v6240 = vpop.f32.mrf.mxu0
        %v6241 = vadd.f32 %v6192, %v6240
        %6242 = vdwg.mxu0
        %6243 = vmatpush.bf16.msra.mxu0 %v5868
        %6244 = vmatpush.bf16.msra.mxu0 %v5866
        %6245 = vmatpush.bf16.msra.mxu0 %v5864
        %6246 = vmatpush.bf16.msra.mxu0 %v5862
        %6247 = vmatpush.bf16.msra.mxu0 %v5860
        %6248 = vmatpush.bf16.msra.mxu0 %v5858
        %6249 = vmatpush.bf16.msra.mxu0 %v5856
        %6250 = vmatpush.bf16.msra.mxu0 %v5854
        %6251 = vmatmul.bf16.gmra.mxu0 %v5529
        %v6252 = vpop.f32.mrf.mxu0
        %v6253 = vadd.f32 %v6204, %v6252
        %v6254 = vpop.f32.mrf.mxu0
        %v6255 = vadd.f32 %v6206, %v6254
        %6256 = vmatmul.bf16.gmra.mxu0 %v5533
        %v6257 = vpop.f32.mrf.mxu0
        %v6258 = vadd.f32 %v6209, %v6257
        %v6259 = vpop.f32.mrf.mxu0
        %v6260 = vadd.f32 %v6211, %v6259
        %6261 = vmatmul.bf16.gmra.mxu0 %v5537
        %v6262 = vpop.f32.mrf.mxu0
        %v6263 = vadd.f32 %v6214, %v6262
        %v6264 = vpop.f32.mrf.mxu0
        %v6265 = vadd.f32 %v6216, %v6264
        %6266 = vmatmul.bf16.gmra.mxu0 %v5541
        %v6267 = vpop.f32.mrf.mxu0
        %v6268 = vadd.f32 %v6219, %v6267
        %v6269 = vpop.f32.mrf.mxu0
        %v6270 = vadd.f32 %v6221, %v6269
        %6271 = vmatmul.bf16.gmra.mxu0 %v5545
        %v6272 = vpop.f32.mrf.mxu0
        %v6273 = vadd.f32 %v6224, %v6272
        %v6274 = vpop.f32.mrf.mxu0
        %v6275 = vadd.f32 %v6226, %v6274
        %6276 = vmatmul.bf16.gmra.mxu0 %v5549
        %v6277 = vpop.f32.mrf.mxu0
        %v6278 = vadd.f32 %v6229, %v6277
        %v6279 = vpop.f32.mrf.mxu0
        %v6280 = vadd.f32 %v6231, %v6279
        %6281 = vmatmul.bf16.gmra.mxu0 %v5553
        %v6282 = vpop.f32.mrf.mxu0
        %v6283 = vadd.f32 %v6234, %v6282
        %v6284 = vpop.f32.mrf.mxu0
        %v6285 = vadd.f32 %v6236, %v6284
        %6286 = vmatmul.bf16.gmra.mxu0 %v5557
        %v6287 = vpop.f32.mrf.mxu0
        %v6288 = vadd.f32 %v6239, %v6287
        %v6289 = vpop.f32.mrf.mxu0
        %v6290 = vadd.f32 %v6241, %v6289
        %6291 = vdwg.mxu0
        %6292 = vmatpush.bf16.msra.mxu0 %v5884
        %6293 = vmatpush.bf16.msra.mxu0 %v5882
        %6294 = vmatpush.bf16.msra.mxu0 %v5880
        %6295 = vmatpush.bf16.msra.mxu0 %v5878
        %6296 = vmatpush.bf16.msra.mxu0 %v5876
        %6297 = vmatpush.bf16.msra.mxu0 %v5874
        %6298 = vmatpush.bf16.msra.mxu0 %v5872
        %6299 = vmatpush.bf16.msra.mxu0 %v5870
        %6300 = vmatmul.bf16.gmra.mxu0 %v5530
        %v6301 = vpop.f32.mrf.mxu0
        %v6302 = vadd.f32 %v6253, %v6301
        %v6303 = vpop.f32.mrf.mxu0
        %v6304 = vadd.f32 %v6255, %v6303
        %6305 = vmatmul.bf16.gmra.mxu0 %v5534
        %v6306 = vpop.f32.mrf.mxu0
        %v6307 = vadd.f32 %v6258, %v6306
        %v6308 = vpop.f32.mrf.mxu0
        %v6309 = vadd.f32 %v6260, %v6308
        %6310 = vmatmul.bf16.gmra.mxu0 %v5538
        %v6311 = vpop.f32.mrf.mxu0
        %v6312 = vadd.f32 %v6263, %v6311
        %v6313 = vpop.f32.mrf.mxu0
        %v6314 = vadd.f32 %v6265, %v6313
        %6315 = vmatmul.bf16.gmra.mxu0 %v5542
        %v6316 = vpop.f32.mrf.mxu0
        %v6317 = vadd.f32 %v6268, %v6316
        %v6318 = vpop.f32.mrf.mxu0
        %v6319 = vadd.f32 %v6270, %v6318
        %6320 = vmatmul.bf16.gmra.mxu0 %v5546
        %v6321 = vpop.f32.mrf.mxu0
        %v6322 = vadd.f32 %v6273, %v6321
        %v6323 = vpop.f32.mrf.mxu0
        %v6324 = vadd.f32 %v6275, %v6323
        %6325 = vmatmul.bf16.gmra.mxu0 %v5550
        %v6326 = vpop.f32.mrf.mxu0
        %v6327 = vadd.f32 %v6278, %v6326
        %v6328 = vpop.f32.mrf.mxu0
        %v6329 = vadd.f32 %v6280, %v6328
        %6330 = vmatmul.bf16.gmra.mxu0 %v5554
        %v6331 = vpop.f32.mrf.mxu0
        %v6332 = vadd.f32 %v6283, %v6331
        %v6333 = vpop.f32.mrf.mxu0
        %v6334 = vadd.f32 %v6285, %v6333
        %6335 = vmatmul.bf16.gmra.mxu0 %v5558
        %v6336 = vpop.f32.mrf.mxu0
        %v6337 = vadd.f32 %v6288, %v6336
        %v6338 = vpop.f32.mrf.mxu0
        %v6339 = vadd.f32 %v6290, %v6338
        %6340 = vdwg.mxu0
        %v6341 = vmax.f32 %v6106, 0.0
        %v6342 = vmax.f32 %v6302, 0.0
        %v6343 = vmax.f32 %v6108, 0.0
        %v6344 = vmax.f32 %v6304, 0.0
        %v6345 = vmax.f32 %v6111, 0.0
        %v6346 = vmax.f32 %v6307, 0.0
        %v6347 = vmax.f32 %v6113, 0.0
        %v6348 = vmax.f32 %v6309, 0.0
        %v6349 = vmax.f32 %v6116, 0.0
        %v6350 = vmax.f32 %v6312, 0.0
        %v6351 = vmax.f32 %v6118, 0.0
        %v6352 = vmax.f32 %v6314, 0.0
        %v6353 = vmax.f32 %v6121, 0.0
        %v6354 = vmax.f32 %v6317, 0.0
        %v6355 = vmax.f32 %v6123, 0.0
        %v6356 = vmax.f32 %v6319, 0.0
        %v6357 = vmax.f32 %v6126, 0.0
        %v6358 = vmax.f32 %v6322, 0.0
        %v6359 = vmax.f32 %v6128, 0.0
        %v6360 = vmax.f32 %v6324, 0.0
        %v6361 = vmax.f32 %v6131, 0.0
        %v6362 = vmax.f32 %v6327, 0.0
        %v6363 = vmax.f32 %v6133, 0.0
        %v6364 = vmax.f32 %v6329, 0.0
        %v6365 = vmax.f32 %v6136, 0.0
        %v6366 = vmax.f32 %v6332, 0.0
        %v6367 = vmax.f32 %v6138, 0.0
        %v6368 = vmax.f32 %v6334, 0.0
        %v6369 = vmax.f32 %v6141, 0.0
        %v6370 = vmax.f32 %v6337, 0.0
        %v6371 = vmax.f32 %v6143, 0.0
        %v6372 = vmax.f32 %v6339, 0.0
        %v6373 = vpack.c.bf16 %v6343, %v6341
        %v6374 = vpack.c.bf16 %v6344, %v6342
        %v6375 = vpack.c.bf16 %v6347, %v6345
        %v6376 = vpack.c.bf16 %v6348, %v6346
        %v6377 = vpack.c.bf16 %v6351, %v6349
        %v6378 = vpack.c.bf16 %v6352, %v6350
        %v6379 = vpack.c.bf16 %v6355, %v6353
        %v6380 = vpack.c.bf16 %v6356, %v6354
        %v6381 = vpack.c.bf16 %v6359, %v6357
        %v6382 = vpack.c.bf16 %v6360, %v6358
        %v6383 = vpack.c.bf16 %v6363, %v6361
        %v6384 = vpack.c.bf16 %v6364, %v6362
        %v6385 = vpack.c.bf16 %v6367, %v6365
        %v6386 = vpack.c.bf16 %v6368, %v6366
        %v6387 = vpack.c.bf16 %v6371, %v6369
        %v6388 = vpack.c.bf16 %v6372, %v6370
        %v6389 = vld [vmem:[#allocation12] sm:$0xf]
        %v6390 = vld [vmem:[#allocation12 + $0x4] sm:$0xf]
        %v6391 = vld [vmem:[#allocation12 + $0x8] sm:$0xf]
        %v6392 = vld [vmem:[#allocation12 + $0xc] sm:$0xf]
        %v6393 = vld [vmem:[#allocation12 + $0x10] sm:$0xf]
        %v6394 = vld [vmem:[#allocation12 + $0x14] sm:$0xf]
        %v6395 = vld [vmem:[#allocation12 + $0x18] sm:$0xf]
        %v6396 = vld [vmem:[#allocation12 + $0x1c] sm:$0xf]
        %v6397 = vld [vmem:[#allocation12 + $0x20] sm:$0xf]
        %v6398 = vld [vmem:[#allocation12 + $0x24] sm:$0xf]
        %v6399 = vld [vmem:[#allocation12 + $0x28] sm:$0xf]
        %v6400 = vld [vmem:[#allocation12 + $0x2c] sm:$0xf]
        %v6401 = vld [vmem:[#allocation12 + $0x30] sm:$0xf]
        %v6402 = vld [vmem:[#allocation12 + $0x34] sm:$0xf]
        %v6403 = vld [vmem:[#allocation12 + $0x38] sm:$0xf]
        %v6404 = vld [vmem:[#allocation12 + $0x3c] sm:$0xf]
        %v6405 = vld [vmem:[#allocation12 + $0x40] sm:$0xf]
        %v6406 = vld [vmem:[#allocation12 + $0x44] sm:$0xf]
        %v6407 = vld [vmem:[#allocation12 + $0x48] sm:$0xf]
        %v6408 = vld [vmem:[#allocation12 + $0x4c] sm:$0xf]
        %v6409 = vld [vmem:[#allocation12 + $0x50] sm:$0xf]
        %v6410 = vld [vmem:[#allocation12 + $0x54] sm:$0xf]
        %v6411 = vld [vmem:[#allocation12 + $0x58] sm:$0xf]
        %v6412 = vld [vmem:[#allocation12 + $0x5c] sm:$0xf]
        %v6413 = vld [vmem:[#allocation12 + $0x60] sm:$0xf]
        %v6414 = vld [vmem:[#allocation12 + $0x64] sm:$0xf]
        %v6415 = vld [vmem:[#allocation12 + $0x68] sm:$0xf]
        %v6416 = vld [vmem:[#allocation12 + $0x6c] sm:$0xf]
        %v6417 = vld [vmem:[#allocation12 + $0x70] sm:$0xf]
        %v6418 = vld [vmem:[#allocation12 + $0x74] sm:$0xf]
        %v6419 = vld [vmem:[#allocation12 + $0x78] sm:$0xf]
        %v6420 = vld [vmem:[#allocation12 + $0x7c] sm:$0xf]
        %v6421 = vld [vmem:[%s8] sm:$0x1]
        %v6423 = vperm.slane %v6421, 0
        %v6457 = vunpack.c.l.b16 %v6389
        %v6458 = vunpack.c.l.b16 %v6390
        %v6459 = vunpack.c.l.b16 %v6391
        %v6460 = vunpack.c.l.b16 %v6392
        %v6461 = vunpack.c.l.b16 %v6393
        %v6462 = vunpack.c.l.b16 %v6394
        %v6463 = vunpack.c.l.b16 %v6395
        %v6464 = vunpack.c.l.b16 %v6396
        %v6465 = vunpack.c.l.b16 %v6397
        %v6466 = vunpack.c.l.b16 %v6398
        %v6467 = vunpack.c.l.b16 %v6399
        %v6468 = vunpack.c.l.b16 %v6400
        %v6469 = vunpack.c.l.b16 %v6401
        %v6470 = vunpack.c.l.b16 %v6402
        %v6471 = vunpack.c.l.b16 %v6403
        %v6472 = vunpack.c.l.b16 %v6404
        %v6473 = vunpack.c.l.b16 %v6405
        %v6474 = vunpack.c.l.b16 %v6406
        %v6475 = vunpack.c.l.b16 %v6407
        %v6476 = vunpack.c.l.b16 %v6408
        %v6477 = vunpack.c.l.b16 %v6409
        %v6478 = vunpack.c.l.b16 %v6410
        %v6479 = vunpack.c.l.b16 %v6411
        %v6480 = vunpack.c.l.b16 %v6412
        %v6481 = vunpack.c.l.b16 %v6413
        %v6482 = vunpack.c.l.b16 %v6414
        %v6483 = vunpack.c.l.b16 %v6415
        %v6484 = vunpack.c.l.b16 %v6416
        %v6485 = vunpack.c.l.b16 %v6417
        %v6486 = vunpack.c.l.b16 %v6418
        %v6487 = vunpack.c.l.b16 %v6419
        %v6488 = vunpack.c.l.b16 %v6420
        %v6489 = vpack.c.b16 %v6458, %v6457
        %v6490 = vpack.c.b16 %v6460, %v6459
        %v6491 = vpack.c.b16 %v6462, %v6461
        %v6492 = vpack.c.b16 %v6464, %v6463
        %v6493 = vpack.c.b16 %v6466, %v6465
        %v6494 = vpack.c.b16 %v6468, %v6467
        %v6495 = vpack.c.b16 %v6470, %v6469
        %v6496 = vpack.c.b16 %v6472, %v6471
        %v6497 = vpack.c.b16 %v6474, %v6473
        %v6498 = vpack.c.b16 %v6476, %v6475
        %v6499 = vpack.c.b16 %v6478, %v6477
        %v6500 = vpack.c.b16 %v6480, %v6479
        %v6501 = vpack.c.b16 %v6482, %v6481
        %v6502 = vpack.c.b16 %v6484, %v6483
        %v6503 = vpack.c.b16 %v6486, %v6485
        %v6504 = vpack.c.b16 %v6488, %v6487
        %6521 = vmatpush.bf16.msra.mxu0 %v6496
        %6522 = vmatpush.bf16.msra.mxu0 %v6495
        %6523 = vmatpush.bf16.msra.mxu0 %v6494
        %6524 = vmatpush.bf16.msra.mxu0 %v6493
        %6525 = vmatpush.bf16.msra.mxu0 %v6492
        %6526 = vmatpush.bf16.msra.mxu0 %v6491
        %6527 = vmatpush.bf16.msra.mxu0 %v6490
        %6528 = vmatpush.bf16.msra.mxu0 %v6489
        %6529 = vmatmul.bf16.gmra.mxu0 %v6373
        %v6530 = vpop.f32.mrf.mxu0
        %v6531 = vadd.f32 %v6423, %v6530
        %v6532 = vpop.f32.mrf.mxu0
        %v6533 = vadd.f32 %v6423, %v6532
        %6534 = vmatmul.bf16.gmra.mxu0 %v6375
        %v6535 = vpop.f32.mrf.mxu0
        %v6536 = vadd.f32 %v6423, %v6535
        %v6537 = vpop.f32.mrf.mxu0
        %v6538 = vadd.f32 %v6423, %v6537
        %6539 = vmatmul.bf16.gmra.mxu0 %v6377
        %v6540 = vpop.f32.mrf.mxu0
        %v6541 = vadd.f32 %v6423, %v6540
        %v6542 = vpop.f32.mrf.mxu0
        %v6543 = vadd.f32 %v6423, %v6542
        %6544 = vmatmul.bf16.gmra.mxu0 %v6379
        %v6545 = vpop.f32.mrf.mxu0
        %v6546 = vadd.f32 %v6423, %v6545
        %v6547 = vpop.f32.mrf.mxu0
        %v6548 = vadd.f32 %v6423, %v6547
        %6549 = vmatmul.bf16.gmra.mxu0 %v6381
        %v6550 = vpop.f32.mrf.mxu0
        %v6551 = vadd.f32 %v6423, %v6550
        %v6552 = vpop.f32.mrf.mxu0
        %v6553 = vadd.f32 %v6423, %v6552
        %6554 = vmatmul.bf16.gmra.mxu0 %v6383
        %v6555 = vpop.f32.mrf.mxu0
        %v6556 = vadd.f32 %v6423, %v6555
        %v6557 = vpop.f32.mrf.mxu0
        %v6558 = vadd.f32 %v6423, %v6557
        %6559 = vmatmul.bf16.gmra.mxu0 %v6385
        %v6560 = vpop.f32.mrf.mxu0
        %v6561 = vadd.f32 %v6423, %v6560
        %v6562 = vpop.f32.mrf.mxu0
        %v6563 = vadd.f32 %v6423, %v6562
        %6564 = vmatmul.bf16.gmra.mxu0 %v6387
        %v6565 = vpop.f32.mrf.mxu0
        %v6566 = vadd.f32 %v6423, %v6565
        %v6567 = vpop.f32.mrf.mxu0
        %v6568 = vadd.f32 %v6423, %v6567
        %6569 = vdwg.mxu0
        %6570 = vmatpush.bf16.msra.mxu0 %v6504
        %6571 = vmatpush.bf16.msra.mxu0 %v6503
        %6572 = vmatpush.bf16.msra.mxu0 %v6502
        %6573 = vmatpush.bf16.msra.mxu0 %v6501
        %6574 = vmatpush.bf16.msra.mxu0 %v6500
        %6575 = vmatpush.bf16.msra.mxu0 %v6499
        %6576 = vmatpush.bf16.msra.mxu0 %v6498
        %6577 = vmatpush.bf16.msra.mxu0 %v6497
        %6578 = vmatmul.bf16.gmra.mxu0 %v6374
        %v6579 = vpop.f32.mrf.mxu0
        %v6580 = vadd.f32 %v6531, %v6579
        %v6581 = vpop.f32.mrf.mxu0
        %v6582 = vadd.f32 %v6533, %v6581
        %6583 = vmatmul.bf16.gmra.mxu0 %v6376
        %v6584 = vpop.f32.mrf.mxu0
        %v6585 = vadd.f32 %v6536, %v6584
        %v6586 = vpop.f32.mrf.mxu0
        %v6587 = vadd.f32 %v6538, %v6586
        %6588 = vmatmul.bf16.gmra.mxu0 %v6378
        %v6589 = vpop.f32.mrf.mxu0
        %v6590 = vadd.f32 %v6541, %v6589
        %v6591 = vpop.f32.mrf.mxu0
        %v6592 = vadd.f32 %v6543, %v6591
        %6593 = vmatmul.bf16.gmra.mxu0 %v6380
        %v6594 = vpop.f32.mrf.mxu0
        %v6595 = vadd.f32 %v6546, %v6594
        %v6596 = vpop.f32.mrf.mxu0
        %v6597 = vadd.f32 %v6548, %v6596
        %6598 = vmatmul.bf16.gmra.mxu0 %v6382
        %v6599 = vpop.f32.mrf.mxu0
        %v6600 = vadd.f32 %v6551, %v6599
        %v6601 = vpop.f32.mrf.mxu0
        %v6602 = vadd.f32 %v6553, %v6601
        %6603 = vmatmul.bf16.gmra.mxu0 %v6384
        %v6604 = vpop.f32.mrf.mxu0
        %v6605 = vadd.f32 %v6556, %v6604
        %v6606 = vpop.f32.mrf.mxu0
        %v6607 = vadd.f32 %v6558, %v6606
        %6608 = vmatmul.bf16.gmra.mxu0 %v6386
        %v6609 = vpop.f32.mrf.mxu0
        %v6610 = vadd.f32 %v6561, %v6609
        %v6611 = vpop.f32.mrf.mxu0
        %v6612 = vadd.f32 %v6563, %v6611
        %6613 = vmatmul.bf16.gmra.mxu0 %v6388
        %v6614 = vpop.f32.mrf.mxu0
        %v6615 = vadd.f32 %v6566, %v6614
        %v6616 = vpop.f32.mrf.mxu0
        %v6617 = vadd.f32 %v6568, %v6616
        %6618 = vdwg.mxu0
        %v6619 = vmax.f32 %v6580, 0.0
        %v6620 = vmax.f32 %v6582, 0.0
        %v6621 = vmax.f32 %v6585, 0.0
        %v6622 = vmax.f32 %v6587, 0.0
        %v6623 = vmax.f32 %v6590, 0.0
        %v6624 = vmax.f32 %v6592, 0.0
        %v6625 = vmax.f32 %v6595, 0.0
        %v6626 = vmax.f32 %v6597, 0.0
        %v6627 = vmax.f32 %v6600, 0.0
        %v6628 = vmax.f32 %v6602, 0.0
        %v6629 = vmax.f32 %v6605, 0.0
        %v6630 = vmax.f32 %v6607, 0.0
        %v6631 = vmax.f32 %v6610, 0.0
        %v6632 = vmax.f32 %v6612, 0.0
        %v6633 = vmax.f32 %v6615, 0.0
        %v6634 = vmax.f32 %v6617, 0.0
        %v6635 = vpack.c.bf16 %v6620, %v6619
        %v6636 = vpack.c.bf16 %v6622, %v6621
        %v6637 = vpack.c.bf16 %v6624, %v6623
        %v6638 = vpack.c.bf16 %v6626, %v6625
        %v6639 = vpack.c.bf16 %v6628, %v6627
        %v6640 = vpack.c.bf16 %v6630, %v6629
        %v6641 = vpack.c.bf16 %v6632, %v6631
        %v6642 = vpack.c.bf16 %v6634, %v6633
        %v6643 = vld [vmem:[%s9] sm:$0x1]
        %v6644 = vld [vmem:[#allocation2] sm:$0x1]
        %6646 = vset.pattern.permute.xlu0 0
        %6647 = vperm.xlu0 %6646, %v6644
        %v6648 = vpop.permute.xlu0 %6647
        %v6650 = vperm.slane %v6648, 0
        %6651 = vmatpush.bf16.xpose.msra.mxu0 %v6642
        %6652 = vmatpush.bf16.xpose.msra.mxu0 %v6641
        %6653 = vmatpush.bf16.xpose.msra.mxu0 %v6640
        %6654 = vmatpush.bf16.xpose.msra.mxu0 %v6639
        %6655 = vmatpush.bf16.xpose.msra.mxu0 %v6638
        %6656 = vmatpush.bf16.xpose.msra.mxu0 %v6637
        %6657 = vmatpush.bf16.xpose.msra.mxu0 %v6636
        %6658 = vmatpush.bf16.xpose.msra.mxu0 %v6635
        %6659 = vmatmul.bf16.gmra.mxu0 %v6643
        %v6660 = vpop.f32.mrf.mxu0
        %v6661 = vadd.f32 %v6650, %v6660
        %v6662 = vpop.f32.mrf.mxu0
        %6663 = vdwg.mxu0
        %v6664 = vxor.u32 %v6661, 2147483648
        %v6665 = vmul.f32 %v6664, 1.442695
        %v6666 = vpow.pop %v6665
        %v6667 = vadd.f32 %v6666, 1.0
        %v6668 = vrcp.pop %v6667
        %v6669 = vmul.f32 %v6667, %v6668
        %v6670 = vsub.f32 1.0, %v6669
        %v6671 = vmul.f32 %v6668, %v6670
        %v6672 = vadd.f32 %v6668, %v6671
        %vm6673 = vweird.f32 %v6667
        %vm6674 = vweird.f32 %v6668
        %vm6675 = vmor %vm6673, %vm6674
        %v6676 = vsel %vm6675, %v6668, %v6672
        %v6677 = vand.u32 2147483647, %v6667
        %vm6678 = vcmp.eq.f32.partialorder %v6677, 8.507059e+37
        %v6679 = vand.u32 %v6667, 2147483648
        %v6680 = vor.u32 1.1754944e-38, %v6679
        %v6681 = vsel %vm6678, %v6680, %v6676
        %v6682 = vmul.f32 1.0, %v6681
        %6683 = vst [vmem:[%s489] sm:$0x1] %v6682
        %s6684 = sand.u32 %s277, 1
        %s6685 = scalar_lea.sflag [#allocation5], %s6684
        %s6686 = sand.u32 %s277, 1
        %s6687 = scalar_lea.vmem [#allocation14], %s6686
        // Predicated region
        $region89: #{tpu_custom_call.1} parent=63 // pred_check
          %p6688 = pneg %p287
        $region90: #{tpu_custom_call.1} parent=63 // pred_check_branch
          %6690 = sbr.rel (%p6688) target = $region92
        $region91: #{tpu_custom_call.1} parent=63 // pred_region
          %6692 = vsyncadd %s6685, 0
          %s6693 = scalar_lea.hbm %s11, %s33
          %s6695 = sshll.u32 %s6687, 4
          %s6696 = int_to_ptr.vmem [resolvable:$true] %s6695
          %s6697 = sshll.u32 %s6693, 4
          %s6698 = int_to_ptr.hbm [resolvable:$true] %s6697
          %6700 = dma.vmem_to_hbm [thread:$0]  %s6696, 16, %s6698, %s6685
        $region92: #{tpu_custom_call.1} parent=63 // pred_fallthru
          _
      $region64: #{tpu_custom_call.1} parent=5 // pred_fallthru
        _
      %p6701 = scmp.le.s32.totalorder 2, %s28
      // Predicated region
      $region93: #{tpu_custom_call.1} parent=5 // pred_check
        %p6702 = pneg %p6701
      $region94: #{tpu_custom_call.1} parent=5 // pred_check_branch
        %6704 = sbr.rel (%p6702) target = $region96
      $region95: #{tpu_custom_call.1} parent=5 // pred_region
        %s6705 = ssub.s32 %s28, 2
        // Predicated region
        $region97: #{tpu_custom_call.1} parent=95 // pred_check
          %p6706 = pneg %p293
        $region98: #{tpu_custom_call.1} parent=95 // pred_check_branch
          %6708 = sbr.rel (%p6706) target = $region100
        $region99: #{tpu_custom_call.1} parent=95 // pred_region
          %s6709 = sand.u32 %s278, 1
          %s6710 = scalar_lea.sflag [#allocation5], %s6709
          %s6711 = sand.u32 %s278, 1
          %s6712 = scalar_lea.vmem [#allocation14], %s6711
          %6714 = dma.done %s6710, 16
        $region100: #{tpu_custom_call.1} parent=95 // pred_fallthru
          _
      $region96: #{tpu_custom_call.1} parent=5 // pred_fallthru
        _
    $region6: #{tpu_custom_call.1} parent=1 // loop_footer
      %s32 = sadd.s32 1, %s28
    $region7: #{tpu_custom_call.1} parent=1 // loop_footer_branch
      %27 = sbr.rel target = $region3
    $region8: #{tpu_custom_call.1} parent=1 // loop_exit
      _
    %6715 = vsyncpa [#allocation4], 1
    %s6716 = scalar_lea.sflag [#allocation4], 1
    %6717 = vsyncpa %s6716, 1
    %6718 = vsyncpa [#allocation7], 1
    %6719 = vsyncpa [#allocation10], 1
    %6720 = vsyncpa [#allocation13], 1
    %6721 = vsyncpa [#allocation5], 1
    %s6722 = scalar_lea.sflag [#allocation5], 1
    %6723 = vsyncpa %s6722, 1

</llo_original>
